<compile_context>
chip_gen: v7x
topology: tpu7x:2x2x1
jax: 0.10.0
libtpu: 0.0.40
codegen_flags: <defaults>
</compile_context>

<pallas_src>
import functools
from dataclasses import dataclass

import numpy as np
import jax
import jax.numpy as jnp
from jax.experimental import pallas as pl
from jax.experimental.pallas import tpu as pltpu


# --------------------------------------------------------------------------
# Config (mirrors the fields used by Discriminator.__init__)
# --------------------------------------------------------------------------
@dataclass
class DiscConfig:
    image_channels: int = 4
    latent_in_channels: int = 8
    disc_kernel_size: int = 4
    disc_stride: int = 2
    disc_padding: int = 1
    disc_last_layer_stride: int = 1
    n_layers: int = 2
    kaiming_init_gain: float = 2.0


NUM_GROUPS = 4          # assumed group count for the (undefined) GroupNorm
GN_EPS = 1e-5
LRELU_SLOPE = 0.1       # matches nn.LeakyReLU(0.1)
LANE = 128
VMEM_LIMIT = 32 * 1024 * 1024


def _round_up(x, m):
    return (x + m - 1) // m * m


# --------------------------------------------------------------------------
# Fused whole-network kernel: one sample per grid step.
# --------------------------------------------------------------------------
def _make_fused_kernel(n_layers, eps, slope):
    def kernel(*refs):
        # refs = [x, T0, b0, (T, b, A, gamma, beta) * n_layers, Tf, bf, out]
        x_ref = refs[0]
        o_ref = refs[-1]
        w = refs[1:-1]

        # in_conv (no norm / activation after it in the torch module)
        h = jnp.dot(x_ref[...], w[0][...],
                    preferred_element_type=jnp.float32) + w[1][...]

        pos = 2
        for _ in range(n_layers):
            t_ref, b_ref, a_ref, g_ref, be_ref = w[pos:pos + 5]
            pos += 5
            # conv: bf16 MXU operands, f32 accumulate, f32 bias
            h = jnp.dot(h.astype(jnp.bfloat16), t_ref[...],
                        preferred_element_type=jnp.float32) + b_ref[...]
            # GroupNorm (two-pass / centered variance for stability), all f32.
            # a_ref broadcasts the per-(sample, group) mean back to every
            # element in one lane-dense matmul.
            mean = jnp.dot(h, a_ref[...], preferred_element_type=jnp.float32)
            cen = h - mean
            var = jnp.dot(cen * cen, a_ref[...],
                          preferred_element_type=jnp.float32)
            y = cen * jax.lax.rsqrt(var + eps) * g_ref[...] + be_ref[...]
            # LeakyReLU(0.1)
            h = jnp.where(y >= 0.0, y, slope * y)

        # final 1-channel conv; output lanes were padded to 128 at pack time,
        # so this store is a single full-width unmasked vst.
        o_ref[...] = (jnp.dot(h.astype(jnp.bfloat16), w[pos][...],
                              preferred_element_type=jnp.float32)
                      + w[pos + 1][...])
    return kernel


def fused_forward_call(x_flat, operands, n_layers):
    """x_flat: (N, 1, P0) bf16; operands: flat list of 2-D packed arrays."""
    N, _, p0 = x_flat.shape
    qf_pad = operands[-1].shape[-1]            # final width, multiple of 128

    in_specs = [pl.BlockSpec((pl.Squeezed(), 1, p0), lambda n: (n, 0, 0))]
    for arr in operands:
        # Full-array blocks, constant index_map -> fetched once, VMEM-resident.
        in_specs.append(pl.BlockSpec(arr.shape, lambda n: (0, 0)))

    kernel = _make_fused_kernel(n_layers, GN_EPS, LRELU_SLOPE)
    return pl.pallas_call(
        kernel,
        out_shape=jax.ShapeDtypeStruct((N, 1, qf_pad), jnp.float32),
        grid=(N,),
        in_specs=in_specs,
        out_specs=pl.BlockSpec((pl.Squeezed(), 1, qf_pad),
                               lambda n: (n, 0, 0)),
        compiler_params=pltpu.CompilerParams(
            dimension_semantics=("parallel",),
            vmem_limit_bytes=VMEM_LIMIT),
    )(x_flat, *operands)


# --------------------------------------------------------------------------
# Pack-time (host) construction of the unrolled conv / GroupNorm operands.
# --------------------------------------------------------------------------
def _conv_out_hw(h, w, k, s, p):
    return (h + 2 * p - k) // s + 1, (w + 2 * p - k) // s + 1


def _layer_plan(cfg, H, W):
    """Static per-conv shape plan mirroring Discriminator.__init__."""
    k, p = cfg.disc_kernel_size, cfg.disc_padding
    plan = []
    cin, hin, win = cfg.image_channels, H, W
    # in_conv
    cout = cfg.latent_in_channels
    ho, wo = _conv_out_hw(hin, win, k, cfg.disc_stride, p)
    plan.append(dict(cin=cin, cout=cout, stride=cfg.disc_stride,
                     hin=hin, win=win, ho=ho, wo=wo))
    cin, hin, win = cout, ho, wo
    # n_layers x [conv -> GroupNorm -> LeakyReLU]
    for i in range(cfg.n_layers):
        s = 1 if i == cfg.n_layers - 1 else cfg.disc_stride
        cout = 2 * cin
        ho, wo = _conv_out_hw(hin, win, k, s, p)
        plan.append(dict(cin=cin, cout=cout, stride=s,
                         hin=hin, win=win, ho=ho, wo=wo))
        cin, hin, win = cout, ho, wo
    # final 1-channel conv
    s = cfg.disc_last_layer_stride
    ho, wo = _conv_out_hw(hin, win, k, s, p)
    plan.append(dict(cin=cin, cout=1, stride=s,
                     hin=hin, win=win, ho=ho, wo=wo))
    return plan


def _toeplitz_index(cin, cout, k, hin, win, ho, wo, stride, pad):
    """(Hin*Win*Cin, Ho*Wo*Cout) index table into the flattened conv weight.

    Entries equal to cout*cin*k*k point at an appended zero (zero padding /
    positions not covered by the receptive field).
    """
    P = hin * win * cin
    Q = ho * wo * cout
    zero_idx = cout * cin * k * k
    idx = np.full((P, Q), zero_idx, dtype=np.int32)
    co = np.arange(cout)
    for oh in range(ho):
        for ow in range(wo):
            q0 = (oh * wo + ow) * cout
            for kh in range(k):
                ih = oh * stride + kh - pad
                if ih < 0 or ih >= hin:
                    continue
                for kw in range(k):
                    iw = ow * stride + kw - pad
                    if iw < 0 or iw >= win:
                        continue
                    base = (ih * win + iw) * cin
                    for ci in range(cin):
                        # torch weight flat index for (co, ci, kh, kw)
                        idx[base + ci, q0:q0 + cout] = \
                            ((co * cin + ci) * k + kh) * k + kw
    return idx


def _pack_conv(w, b, lp, k, pad, pad_cols_to=None):
    """Conv weight (Cout,Cin,k,k) -> bf16 Toeplitz (P,Q) + f32 bias row."""
    idx = _toeplitz_index(lp["cin"], lp["cout"], k, lp["hin"], lp["win"],
                          lp["ho"], lp["wo"], lp["stride"], pad)
    w_ext = jnp.concatenate([w.reshape(-1), jnp.zeros((1,), w.dtype)])
    t_mat = w_ext[jnp.asarray(idx)]                                  # (P, Q)
    b_row = jnp.tile(b.reshape(-1), lp["ho"] * lp["wo"])[None, :]    # (1, Q)
    if pad_cols_to is not None:
        q = t_mat.shape[1]
        t_mat = jnp.pad(t_mat, ((0, 0), (0, pad_cols_to - q)))
        b_row = jnp.pad(b_row, ((0, 0), (0, pad_cols_to - q)))
    return t_mat.astype(jnp.bfloat16), b_row.astype(jnp.float32)


def _pack_groupnorm(gamma, beta, cout, hw, num_groups):
    """Group-averaging matrix (Q,Q) f32 + per-element gamma/beta rows (1,Q)."""
    cg = cout // num_groups
    grp = (np.arange(hw * cout) % cout) // cg
    a_mat = (grp[:, None] == grp[None, :]).astype(np.float32) / float(hw * cg)
    g_row = jnp.tile(gamma.reshape(-1), hw)[None, :].astype(jnp.float32)
    b_row = jnp.tile(beta.reshape(-1), hw)[None, :].astype(jnp.float32)
    return jnp.asarray(a_mat), g_row, b_row


def pack_discriminator(params, cfg, H, W):
    """Build the flat operand list consumed by the fused kernel (call once)."""
    plan = _layer_plan(cfg, H, W)
    k, p = cfg.disc_kernel_size, cfg.disc_padding
    ops = []
    # in_conv
    w, b = params["in_conv"]
    ops.extend(_pack_conv(w, b, plan[0], k, p))
    # hidden layers: conv + GroupNorm(+affine) + LeakyReLU
    for i in range(cfg.n_layers):
        lp = plan[1 + i]
        w, b = params[f"conv_{i}"]
        ops.extend(_pack_conv(w, b, lp, k, p))
        gamma, beta = params[f"gn_{i}"]
        ops.extend(_pack_groupnorm(gamma, beta, lp["cout"],
                                   lp["ho"] * lp["wo"], NUM_GROUPS))
    # final conv: pad output columns to a multiple of 128 (lane-dense store)
    lp = plan[-1]
    qf = lp["ho"] * lp["wo"] * lp["cout"]
    w, b = params["final"]
    ops.extend(_pack_conv(w, b, lp, k, p,
                          pad_cols_to=_round_up(max(qf, LANE), LANE)))
    return ops, plan


# --------------------------------------------------------------------------
# Forward pass (mirrors nn.Sequential in Discriminator.forward)
# --------------------------------------------------------------------------
def discriminator_forward(operands, x_nchw, cfg, plan):
    N, C, H, W = x_nchw.shape
    lp_in, lp_out = plan[0], plan[-1]
    assert (C, H, W) == (lp_in["cin"], lp_in["hin"], lp_in["win"])

    # NCHW -> one flat NHWC row per sample (bf16 MXU operand)
    x_flat = jnp.transpose(x_nchw, (0, 2, 3, 1)).reshape(N, 1, H * W * C)
    x_flat = x_flat.astype(jnp.bfloat16)

    out = fused_forward_call(x_flat, operands, cfg.n_layers)  # (N,1,Qpad) f32

    qf = lp_out["ho"] * lp_out["wo"] * lp_out["cout"]
    out = out[:, 0, :qf].reshape(N, lp_out["ho"], lp_out["wo"], lp_out["cout"])
    return jnp.transpose(out, (0, 3, 1, 2))                   # NHWC -> NCHW


# --------------------------------------------------------------------------
# Init: kaiming-normal weights (per _init_weights) + frozen spectral norm
# --------------------------------------------------------------------------
def spectral_normalize(w, key, n_iters=5, eps=1e-12):
    wm = w.reshape(w.shape[0], -1)
    u = jax.random.normal(key, (wm.shape[0],), dtype=jnp.float32)
    u = u / (jnp.linalg.norm(u) + eps)
    v = wm.T @ u
    for _ in range(n_iters):
        v = wm.T @ u
        v = v / (jnp.linalg.norm(v) + eps)
        u = wm @ v
        u = u / (jnp.linalg.norm(u) + eps)
    sigma = jnp.dot(u, wm @ v)
    return w / sigma


def init_conv(key, cin, cout, k, gain):
    kw_key, kb_key, ku_key = jax.random.split(key, 3)
    fan_in = cin * k * k
    std = (gain / fan_in) ** 0.5
    w = std * jax.random.normal(kw_key, (cout, cin, k, k), dtype=jnp.float32)
    bound = 1.0 / (fan_in ** 0.5)
    b = jax.random.uniform(kb_key, (cout,), minval=-bound, maxval=bound,
                           dtype=jnp.float32)
    w = spectral_normalize(w, ku_key)
    return w, b


def init_params(key, cfg):
    params = {}
    keys = jax.random.split(key, cfg.n_layers + 2)
    params["in_conv"] = init_conv(keys[0], cfg.image_channels,
                                  cfg.latent_in_channels,
                                  cfg.disc_kernel_size, cfg.kaiming_init_gain)
    cin = cfg.latent_in_channels
    for i in range(cfg.n_layers):
        cout = 2 * cin
        params[f"conv_{i}"] = init_conv(keys[i + 1], cin, cout,
                                        cfg.disc_kernel_size,
                                        cfg.kaiming_init_gain)
        params[f"gn_{i}"] = (jnp.ones((cout,), jnp.float32),
                             jnp.zeros((cout,), jnp.float32))
        cin = cout
    params["final"] = init_conv(keys[-1], cin, 1, cfg.disc_kernel_size,
                                cfg.kaiming_init_gain)
    return params


# --------------------------------------------------------------------------
if __name__ == "__main__":
    cfg = DiscConfig()
    key = jax.random.PRNGKey(0)
    k_x, k_p = jax.random.split(key)

    H = W = 16
    x = jax.random.normal(k_x, (2, cfg.image_channels, H, W),
                          dtype=jnp.float32)
    params = init_params(k_p, cfg)

    # Pack once (host-side index tables + tiny device gathers), jit only the
    # thin fused forward.
    operands, plan = pack_discriminator(params, cfg, H, W)
    fwd = jax.jit(functools.partial(discriminator_forward, cfg=cfg, plan=plan))
    out = jax.block_until_ready(fwd(operands, x))

    # expected: 16 -> 8 (in_conv, s=2) -> 4 (layer0, s=2) -> 3 (layer1, s=1)
    #           -> 2 (final, s=1), 1 output channel
    assert out.shape == (2, 1, 2, 2), out.shape
    assert out.dtype == jnp.float32
    assert bool(jnp.all(jnp.isfinite(out)))
    print("KERNEL_OK")
</pallas_src>

<mosaic_0001>
module attributes {stable_mosaic.version = 11 : i64} {
  func.func @kernel(%arg0: i32, %arg1: memref<1x1x1024xbf16, #tpu.memory_space<vmem>>, %arg2: memref<1024x512xbf16, #tpu.memory_space<vmem>>, %arg3: memref<1x512xf32, #tpu.memory_space<vmem>>, %arg4: memref<512x256xbf16, #tpu.memory_space<vmem>>, %arg5: memref<1x256xf32, #tpu.memory_space<vmem>>, %arg6: memref<256x256xf32, #tpu.memory_space<vmem>>, %arg7: memref<1x256xf32, #tpu.memory_space<vmem>>, %arg8: memref<1x256xf32, #tpu.memory_space<vmem>>, %arg9: memref<256x288xbf16, #tpu.memory_space<vmem>>, %arg10: memref<1x288xf32, #tpu.memory_space<vmem>>, %arg11: memref<288x288xf32, #tpu.memory_space<vmem>>, %arg12: memref<1x288xf32, #tpu.memory_space<vmem>>, %arg13: memref<1x288xf32, #tpu.memory_space<vmem>>, %arg14: memref<288x128xbf16, #tpu.memory_space<vmem>>, %arg15: memref<1x128xf32, #tpu.memory_space<vmem>>, %arg16: memref<1x1x128xf32, #tpu.memory_space<vmem>>) attributes {dimension_semantics = [#tpu.dimension_semantics<parallel>], iteration_bounds = array<i64: 2>, scalar_prefetch = 0 : i64, scratch_operands = 0 : i64, tpu.core_type = #tpu.core_type<tc>, window_params = [{transform_indices = @transform_0, window_bounds = array<i64: 1, 1, 1024>}, {pipeline_mode = #tpu.pipeline_mode<synchronous>, transform_indices = @transform_1, window_bounds = array<i64: 1024, 512>}, {pipeline_mode = #tpu.pipeline_mode<synchronous>, transform_indices = @transform_2, window_bounds = array<i64: 1, 512>}, {pipeline_mode = #tpu.pipeline_mode<synchronous>, transform_indices = @transform_3, window_bounds = array<i64: 512, 256>}, {pipeline_mode = #tpu.pipeline_mode<synchronous>, transform_indices = @transform_4, window_bounds = array<i64: 1, 256>}, {pipeline_mode = #tpu.pipeline_mode<synchronous>, transform_indices = @transform_5, window_bounds = array<i64: 256, 256>}, {pipeline_mode = #tpu.pipeline_mode<synchronous>, transform_indices = @transform_6, window_bounds = array<i64: 1, 256>}, {pipeline_mode = #tpu.pipeline_mode<synchronous>, transform_indices = @transform_7, window_bounds = array<i64: 1, 256>}, {pipeline_mode = #tpu.pipeline_mode<synchronous>, transform_indices = @transform_8, window_bounds = array<i64: 256, 288>}, {pipeline_mode = #tpu.pipeline_mode<synchronous>, transform_indices = @transform_9, window_bounds = array<i64: 1, 288>}, {pipeline_mode = #tpu.pipeline_mode<synchronous>, transform_indices = @transform_10, window_bounds = array<i64: 288, 288>}, {pipeline_mode = #tpu.pipeline_mode<synchronous>, transform_indices = @transform_11, window_bounds = array<i64: 1, 288>}, {pipeline_mode = #tpu.pipeline_mode<synchronous>, transform_indices = @transform_12, window_bounds = array<i64: 1, 288>}, {pipeline_mode = #tpu.pipeline_mode<synchronous>, transform_indices = @transform_13, window_bounds = array<i64: 288, 128>}, {pipeline_mode = #tpu.pipeline_mode<synchronous>, transform_indices = @transform_14, window_bounds = array<i64: 1, 128>}, {transform_indices = @transform_15, window_bounds = array<i64: 1, 1, 128>}]} {
    %c0 = arith.constant 0 : index
    %c0_0 = arith.constant 0 : index
    %c0_1 = arith.constant 0 : index
    %0 = vector.load %arg1[%c0, %c0_0, %c0_1] : memref<1x1x1024xbf16, #tpu.memory_space<vmem>>, vector<1x1x1024xbf16>
    %1 = vector.shape_cast %0 : vector<1x1x1024xbf16> to vector<1x1024xbf16>
    %c0_2 = arith.constant 0 : index
    %c0_3 = arith.constant 0 : index
    %2 = vector.load %arg2[%c0_2, %c0_3] : memref<1024x512xbf16, #tpu.memory_space<vmem>>, vector<1024x512xbf16>
    %cst = arith.constant dense<0.000000e+00> : vector<1x512xf32>
    %3 = tpu.matmul %1, %2, %cst {dimension_numbers = #tpu.dot_dimension_numbers<[1], [0], [0], [1], [0, 0, 1, 1], [], []>} : vector<1x1024xbf16>, vector<1024x512xbf16>, vector<1x512xf32> -> vector<1x512xf32>
    %c0_4 = arith.constant 0 : index
    %c0_5 = arith.constant 0 : index
    %4 = vector.load %arg3[%c0_4, %c0_5] : memref<1x512xf32, #tpu.memory_space<vmem>>, vector<1x512xf32>
    %5 = arith.addf %3, %4 : vector<1x512xf32>
    %6 = arith.truncf %5 : vector<1x512xf32> to vector<1x512xbf16>
    %c0_6 = arith.constant 0 : index
    %c0_7 = arith.constant 0 : index
    %7 = vector.load %arg4[%c0_6, %c0_7] : memref<512x256xbf16, #tpu.memory_space<vmem>>, vector<512x256xbf16>
    %cst_8 = arith.constant dense<0.000000e+00> : vector<1x256xf32>
    %8 = tpu.matmul %6, %7, %cst_8 {dimension_numbers = #tpu.dot_dimension_numbers<[1], [0], [0], [1], [0, 0, 1, 1], [], []>} : vector<1x512xbf16>, vector<512x256xbf16>, vector<1x256xf32> -> vector<1x256xf32>
    %c0_9 = arith.constant 0 : index
    %c0_10 = arith.constant 0 : index
    %9 = vector.load %arg5[%c0_9, %c0_10] : memref<1x256xf32, #tpu.memory_space<vmem>>, vector<1x256xf32>
    %10 = arith.addf %8, %9 : vector<1x256xf32>
    %c0_11 = arith.constant 0 : index
    %c0_12 = arith.constant 0 : index
    %11 = vector.load %arg6[%c0_11, %c0_12] : memref<256x256xf32, #tpu.memory_space<vmem>>, vector<256x256xf32>
    %cst_13 = arith.constant dense<0.000000e+00> : vector<1x256xf32>
    %12 = tpu.matmul %10, %11, %cst_13 {dimension_numbers = #tpu.dot_dimension_numbers<[1], [0], [0], [1], [0, 0, 1, 1], [], []>} : vector<1x256xf32>, vector<256x256xf32>, vector<1x256xf32> -> vector<1x256xf32>
    %13 = arith.subf %10, %12 : vector<1x256xf32>
    %14 = arith.mulf %13, %13 : vector<1x256xf32>
    %c0_14 = arith.constant 0 : index
    %c0_15 = arith.constant 0 : index
    %15 = vector.load %arg6[%c0_14, %c0_15] : memref<256x256xf32, #tpu.memory_space<vmem>>, vector<256x256xf32>
    %cst_16 = arith.constant dense<0.000000e+00> : vector<1x256xf32>
    %16 = tpu.matmul %14, %15, %cst_16 {dimension_numbers = #tpu.dot_dimension_numbers<[1], [0], [0], [1], [0, 0, 1, 1], [], []>} : vector<1x256xf32>, vector<256x256xf32>, vector<1x256xf32> -> vector<1x256xf32>
    %cst_17 = arith.constant 9.99999974E-6 : f32
    %17 = vector.broadcast %cst_17 : f32 to vector<1x256xf32>
    %18 = arith.addf %16, %17 : vector<1x256xf32>
    %19 = math.rsqrt %18 : vector<1x256xf32>
    %20 = arith.mulf %13, %19 : vector<1x256xf32>
    %c0_18 = arith.constant 0 : index
    %c0_19 = arith.constant 0 : index
    %21 = vector.load %arg7[%c0_18, %c0_19] : memref<1x256xf32, #tpu.memory_space<vmem>>, vector<1x256xf32>
    %22 = arith.mulf %20, %21 : vector<1x256xf32>
    %c0_20 = arith.constant 0 : index
    %c0_21 = arith.constant 0 : index
    %23 = vector.load %arg8[%c0_20, %c0_21] : memref<1x256xf32, #tpu.memory_space<vmem>>, vector<1x256xf32>
    %24 = arith.addf %22, %23 : vector<1x256xf32>
    %cst_22 = arith.constant 0.000000e+00 : f32
    %25 = vector.broadcast %cst_22 : f32 to vector<1x256xf32>
    %26 = arith.cmpf oge, %24, %25 : vector<1x256xf32>
    %cst_23 = arith.constant 1.000000e-01 : f32
    %27 = vector.broadcast %cst_23 : f32 to vector<1x256xf32>
    %28 = arith.mulf %27, %24 : vector<1x256xf32>
    %29 = arith.select %26, %24, %28 : vector<1x256xi1>, vector<1x256xf32>
    %30 = arith.truncf %29 : vector<1x256xf32> to vector<1x256xbf16>
    %c0_24 = arith.constant 0 : index
    %c0_25 = arith.constant 0 : index
    %31 = vector.load %arg9[%c0_24, %c0_25] : memref<256x288xbf16, #tpu.memory_space<vmem>>, vector<256x288xbf16>
    %cst_26 = arith.constant dense<0.000000e+00> : vector<1x288xf32>
    %32 = tpu.matmul %30, %31, %cst_26 {dimension_numbers = #tpu.dot_dimension_numbers<[1], [0], [0], [1], [0, 0, 1, 1], [], []>} : vector<1x256xbf16>, vector<256x288xbf16>, vector<1x288xf32> -> vector<1x288xf32>
    %c0_27 = arith.constant 0 : index
    %c0_28 = arith.constant 0 : index
    %33 = vector.load %arg10[%c0_27, %c0_28] : memref<1x288xf32, #tpu.memory_space<vmem>>, vector<1x288xf32>
    %34 = arith.addf %32, %33 : vector<1x288xf32>
    %c0_29 = arith.constant 0 : index
    %c0_30 = arith.constant 0 : index
    %35 = vector.load %arg11[%c0_29, %c0_30] : memref<288x288xf32, #tpu.memory_space<vmem>>, vector<288x288xf32>
    %cst_31 = arith.constant dense<0.000000e+00> : vector<1x288xf32>
    %36 = tpu.matmul %34, %35, %cst_31 {dimension_numbers = #tpu.dot_dimension_numbers<[1], [0], [0], [1], [0, 0, 1, 1], [], []>} : vector<1x288xf32>, vector<288x288xf32>, vector<1x288xf32> -> vector<1x288xf32>
    %37 = arith.subf %34, %36 : vector<1x288xf32>
    %38 = arith.mulf %37, %37 : vector<1x288xf32>
    %c0_32 = arith.constant 0 : index
    %c0_33 = arith.constant 0 : index
    %39 = vector.load %arg11[%c0_32, %c0_33] : memref<288x288xf32, #tpu.memory_space<vmem>>, vector<288x288xf32>
    %cst_34 = arith.constant dense<0.000000e+00> : vector<1x288xf32>
    %40 = tpu.matmul %38, %39, %cst_34 {dimension_numbers = #tpu.dot_dimension_numbers<[1], [0], [0], [1], [0, 0, 1, 1], [], []>} : vector<1x288xf32>, vector<288x288xf32>, vector<1x288xf32> -> vector<1x288xf32>
    %cst_35 = arith.constant 9.99999974E-6 : f32
    %41 = vector.broadcast %cst_35 : f32 to vector<1x288xf32>
    %42 = arith.addf %40, %41 : vector<1x288xf32>
    %43 = math.rsqrt %42 : vector<1x288xf32>
    %44 = arith.mulf %37, %43 : vector<1x288xf32>
    %c0_36 = arith.constant 0 : index
    %c0_37 = arith.constant 0 : index
    %45 = vector.load %arg12[%c0_36, %c0_37] : memref<1x288xf32, #tpu.memory_space<vmem>>, vector<1x288xf32>
    %46 = arith.mulf %44, %45 : vector<1x288xf32>
    %c0_38 = arith.constant 0 : index
    %c0_39 = arith.constant 0 : index
    %47 = vector.load %arg13[%c0_38, %c0_39] : memref<1x288xf32, #tpu.memory_space<vmem>>, vector<1x288xf32>
    %48 = arith.addf %46, %47 : vector<1x288xf32>
    %cst_40 = arith.constant 0.000000e+00 : f32
    %49 = vector.broadcast %cst_40 : f32 to vector<1x288xf32>
    %50 = arith.cmpf oge, %48, %49 : vector<1x288xf32>
    %cst_41 = arith.constant 1.000000e-01 : f32
    %51 = vector.broadcast %cst_41 : f32 to vector<1x288xf32>
    %52 = arith.mulf %51, %48 : vector<1x288xf32>
    %53 = arith.select %50, %48, %52 : vector<1x288xi1>, vector<1x288xf32>
    %54 = arith.truncf %53 : vector<1x288xf32> to vector<1x288xbf16>
    %c0_42 = arith.constant 0 : index
    %c0_43 = arith.constant 0 : index
    %55 = vector.load %arg14[%c0_42, %c0_43] : memref<288x128xbf16, #tpu.memory_space<vmem>>, vector<288x128xbf16>
    %cst_44 = arith.constant dense<0.000000e+00> : vector<1x128xf32>
    %56 = tpu.matmul %54, %55, %cst_44 {dimension_numbers = #tpu.dot_dimension_numbers<[1], [0], [0], [1], [0, 0, 1, 1], [], []>} : vector<1x288xbf16>, vector<288x128xbf16>, vector<1x128xf32> -> vector<1x128xf32>
    %c0_45 = arith.constant 0 : index
    %c0_46 = arith.constant 0 : index
    %57 = vector.load %arg15[%c0_45, %c0_46] : memref<1x128xf32, #tpu.memory_space<vmem>>, vector<1x128xf32>
    %58 = arith.addf %56, %57 : vector<1x128xf32>
    %c0_47 = arith.constant 0 : index
    %c0_48 = arith.constant 0 : index
    %c0_49 = arith.constant 0 : index
    %59 = vector.load %arg16[%c0_47, %c0_48, %c0_49] : memref<1x1x128xf32, #tpu.memory_space<vmem>>, vector<1x1x128xf32>
    %60 = vector.shape_cast %59 : vector<1x1x128xf32> to vector<1x128xf32>
    %61 = vector.shape_cast %58 : vector<1x128xf32> to vector<1x1x128xf32>
    tpu.vector_store %arg16[%c0_47, %c0_48, %c0_49], %61 {strides = array<i32>} : memref<1x1x128xf32, #tpu.memory_space<vmem>>, vector<1x1x128xf32>,
    return
  }
  func.func @transform_0(%arg0: i32) -> (i32, i32, i32) {
    %c0_i32 = arith.constant 0 : i32
    %c0_i32_0 = arith.constant 0 : i32
    %c0_i32_1 = arith.constant 0 : i32
    return %arg0, %c0_i32, %c0_i32_0 : i32, i32, i32
  }
  func.func @transform_1(%arg0: i32) -> (i32, i32) {
    %c0_i32 = arith.constant 0 : i32
    %c0_i32_0 = arith.constant 0 : i32
    %c0_i32_1 = arith.constant 0 : i32
    return %c0_i32, %c0_i32_0 : i32, i32
  }
  func.func @transform_2(%arg0: i32) -> (i32, i32) {
    %c0_i32 = arith.constant 0 : i32
    %c0_i32_0 = arith.constant 0 : i32
    %c0_i32_1 = arith.constant 0 : i32
    return %c0_i32, %c0_i32_0 : i32, i32
  }
  func.func @transform_3(%arg0: i32) -> (i32, i32) {
    %c0_i32 = arith.constant 0 : i32
    %c0_i32_0 = arith.constant 0 : i32
    %c0_i32_1 = arith.constant 0 : i32
    return %c0_i32, %c0_i32_0 : i32, i32
  }
  func.func @transform_4(%arg0: i32) -> (i32, i32) {
    %c0_i32 = arith.constant 0 : i32
    %c0_i32_0 = arith.constant 0 : i32
    %c0_i32_1 = arith.constant 0 : i32
    return %c0_i32, %c0_i32_0 : i32, i32
  }
  func.func @transform_5(%arg0: i32) -> (i32, i32) {
    %c0_i32 = arith.constant 0 : i32
    %c0_i32_0 = arith.constant 0 : i32
    %c0_i32_1 = arith.constant 0 : i32
    return %c0_i32, %c0_i32_0 : i32, i32
  }
  func.func @transform_6(%arg0: i32) -> (i32, i32) {
    %c0_i32 = arith.constant 0 : i32
    %c0_i32_0 = arith.constant 0 : i32
    %c0_i32_1 = arith.constant 0 : i32
    return %c0_i32, %c0_i32_0 : i32, i32
  }
  func.func @transform_7(%arg0: i32) -> (i32, i32) {
    %c0_i32 = arith.constant 0 : i32
    %c0_i32_0 = arith.constant 0 : i32
    %c0_i32_1 = arith.constant 0 : i32
    return %c0_i32, %c0_i32_0 : i32, i32
  }
  func.func @transform_8(%arg0: i32) -> (i32, i32) {
    %c0_i32 = arith.constant 0 : i32
    %c0_i32_0 = arith.constant 0 : i32
    %c0_i32_1 = arith.constant 0 : i32
    return %c0_i32, %c0_i32_0 : i32, i32
  }
  func.func @transform_9(%arg0: i32) -> (i32, i32) {
    %c0_i32 = arith.constant 0 : i32
    %c0_i32_0 = arith.constant 0 : i32
    %c0_i32_1 = arith.constant 0 : i32
    return %c0_i32, %c0_i32_0 : i32, i32
  }
  func.func @transform_10(%arg0: i32) -> (i32, i32) {
    %c0_i32 = arith.constant 0 : i32
    %c0_i32_0 = arith.constant 0 : i32
    %c0_i32_1 = arith.constant 0 : i32
    return %c0_i32, %c0_i32_0 : i32, i32
  }
  func.func @transform_11(%arg0: i32) -> (i32, i32) {
    %c0_i32 = arith.constant 0 : i32
    %c0_i32_0 = arith.constant 0 : i32
    %c0_i32_1 = arith.constant 0 : i32
    return %c0_i32, %c0_i32_0 : i32, i32
  }
  func.func @transform_12(%arg0: i32) -> (i32, i32) {
    %c0_i32 = arith.constant 0 : i32
    %c0_i32_0 = arith.constant 0 : i32
    %c0_i32_1 = arith.constant 0 : i32
    return %c0_i32, %c0_i32_0 : i32, i32
  }
  func.func @transform_13(%arg0: i32) -> (i32, i32) {
    %c0_i32 = arith.constant 0 : i32
    %c0_i32_0 = arith.constant 0 : i32
    %c0_i32_1 = arith.constant 0 : i32
    return %c0_i32, %c0_i32_0 : i32, i32
  }
  func.func @transform_14(%arg0: i32) -> (i32, i32) {
    %c0_i32 = arith.constant 0 : i32
    %c0_i32_0 = arith.constant 0 : i32
    %c0_i32_1 = arith.constant 0 : i32
    return %c0_i32, %c0_i32_0 : i32, i32
  }
  func.func @transform_15(%arg0: i32) -> (i32, i32, i32) {
    %c0_i32 = arith.constant 0 : i32
    %c0_i32_0 = arith.constant 0 : i32
    %c0_i32_1 = arith.constant 0 : i32
    return %arg0, %c0_i32, %c0_i32_0 : i32, i32, i32
  }
}

</mosaic_0001>

<llo_original>
// kernel: squeeze.1
$region0: #{squeeze.1}
  %s0 = inlined_call_operand.vmem [shape: f32[2,4], index: 0, kind: input, shape index: {}]
  %s1 = inlined_call_operand.hbm [shape: f32[2,1,2,2], index: 1, kind: output, shape index: {}]
  $region1: #{squeeze.1} parent=0
    #allocation0 [shape = 'u8[2048]{0}', space=vmem, size = 0x800, scoped, tag = 'operand span for operand 1']
    #allocation1 [shape = 's32[1]{0}', space=sflag, size = 0x4, scoped, tag = 'scoped memory for squeeze.1']
    #allocation2 [shape = 'u8[8192]{0}', space=vmem, size = 0x2000, scoped, tag = 'scoped mem for output reshape']
    #allocation3 [shape = 'u8[4096]{0}', space=vmem, size = 0x1000, scoped, tag = 'scoped mem for input reshape']
    %2 = vsyncpa [#allocation1], 0
    %s4 = sshllo.u32 0, 2
    %v5 = vld [vmem:[%s0] sm:%s4]
    %6 = vst [vmem:[#allocation3] sm:%s4] %v5
    %v7 = vld [vmem:[#allocation3] sm:$0x3]
    %vm8 = vcmask 15360
    %9 = vst.msk [vmem:[#allocation2] ss:$8 sm:$0x3] %vm8, %v7
    %v10 = vld [vmem:[#allocation3] sm:$0x3]
    %11 = vrot.lane.b32.xlu0 %v10, 126
    %v12 = vpop.permute.xlu0 %11
    %vm13 = vcmask 15360
    %s14 = scalar_lea.vmem [#allocation2], 1
    %15 = vst.msk [vmem:[%s14] ss:$8 sm:$0x3] %vm13, %v12
    %s17 = sshllo.u32 0, 2
    %v19 = vld [vmem:[#allocation2] sm:%s17]
    %s20 = sshllo.u32 0, 2
    %21 = vst [vmem:[#allocation0] sm:%s20] %v19
    %s22 = scalar_lea.vmem [#allocation2], 8
    %v23 = vld [vmem:[%s22] sm:%s17]
    %s24 = sshllo.u32 0, 2
    %s25 = scalar_lea.vmem [#allocation0], 2
    %26 = vst [vmem:[%s25] sm:%s24] %v23
    %s28 = ssub.s32 64, 64
    %29 = vsyncadd [#allocation1], %s28
    %s31 = sshll.u32 [#allocation0], 4
    %s32 = int_to_ptr.vmem [resolvable:$true] %s31
    %34 = dma.vmem_to_hbm [thread:$0]  %s32, 64, %s1, [#allocation1]
    %35 = dma.done [#allocation1], 64
    %36 = vsyncpa [#allocation1], 1

// kernel: discriminator_forward.1
$region0: #{discriminator_forward.1}
  #allocation0 [shape = 'u32[]', space=smem, size = 0x4, offset = 0x4, fixed_abs, tag = 'smem constant byte address 0x4 - core index']
  #allocation1 [shape = 'u32[144,128]{1,0:T(1,128)}', space=vmem, size = 0x12000, scoped, tag = 'internal scratch']
  %s0 = inlined_call_operand.vmem [shape: bf16[2,1,1024], index: 0, kind: input, shape index: {}]
  %s1 = inlined_call_operand.hbm [shape: bf16[1024,512], index: 1, kind: input, shape index: {}]
  %s2 = inlined_call_operand.vmem [shape: f32[1,512], index: 2, kind: input, shape index: {}]
  %s3 = inlined_call_operand.vmem [shape: bf16[512,256], index: 3, kind: input, shape index: {}]
  %s4 = inlined_call_operand.vmem [shape: f32[1,256], index: 4, kind: input, shape index: {}]
  %s5 = inlined_call_operand.hbm [shape: f32[256,256], index: 5, kind: input, shape index: {}]
  %s6 = inlined_call_operand.vmem [shape: f32[1,256], index: 6, kind: input, shape index: {}]
  %s7 = inlined_call_operand.vmem [shape: f32[1,256], index: 7, kind: input, shape index: {}]
  %s8 = inlined_call_operand.vmem [shape: bf16[256,288], index: 8, kind: input, shape index: {}]
  %s9 = inlined_call_operand.vmem [shape: f32[1,288], index: 9, kind: input, shape index: {}]
  %s10 = inlined_call_operand.vmem [shape: f32[288,288], index: 10, kind: input, shape index: {}]
  %s11 = inlined_call_operand.vmem [shape: f32[1,288], index: 11, kind: input, shape index: {}]
  %s12 = inlined_call_operand.vmem [shape: f32[1,288], index: 12, kind: input, shape index: {}]
  %s13 = inlined_call_operand.hbm [shape: bf16[288,128], index: 13, kind: input, shape index: {}]
  %s14 = inlined_call_operand.vmem [shape: f32[1,128], index: 14, kind: input, shape index: {}]
  %s15 = inlined_call_operand.vmem [shape: f32[2,1,128], index: 15, kind: output, shape index: {}]
  %s16 = sld [smem:[#allocation0]]
  $region105: #{discriminator_forward.1} parent=0
    _
  %s18 = ssub.s32 1, %s16
  %s19 = scalar_select 0, %s18, %s16
  $region1: #{discriminator_forward.1} parent=0
    #allocation2 [shape = 'u8[1048576]{0}', space=vmem, size = 0x100000, scoped, tag = 'input window, operand 1, single buffered']
    #allocation3 [shape = 's32[2]{0}', space=sflag, size = 0x8, scoped, tag = 'scoped memory for discriminator_forward.1']
    #allocation4 [shape = 'u8[262144]{0}', space=vmem, size = 0x40000, scoped, tag = 'input window, operand 5, single buffered']
    #allocation5 [shape = 's32[1]{0}', space=sflag, size = 0x4, scoped, tag = 'scoped memory for discriminator_forward.1']
    #allocation6 [shape = 'u8[73728]{0}', space=vmem, size = 0x12000, scoped, tag = 'input window, operand 13, single buffered']
    %20 = vsyncpa [#allocation3], 0
    %21 = vsyncpa [#allocation5], 0
    loop: start=0, step=1, limit=4
    $region2: #{discriminator_forward.1} parent=1 // loop_pre_header
      _
    $region3: #{discriminator_forward.1} parent=1 // loop_header
      %s23 = sphi 0, %s27
      %p24 = scmp.ge.s32.totalorder %s23, 4
      %s33 = sphi 0, %s35
      %s36 = sphi 0, %s33
      %s37 = sphi 0, %s36
      %s53 = sphi 0, %s37
      %s57 = sphi 0, %s57
      %s59 = sphi 0, %s57
      %s60 = sphi 0, %s59
      %s74 = sphi 0, %s60
      %s78 = sphi 0, %s78
      %s80 = sphi 0, %s78
      %s81 = sphi 0, %s80
      %s95 = sphi 0, %s81
      %s99 = sphi 0, %s99
      %s101 = sphi 0, %s99
      %s102 = sphi 0, %s101
      %s116 = sphi 0, %s102
      %s120 = sphi 0, %s120
      %s122 = sphi 0, %s120
      %s123 = sphi 0, %s122
      %s137 = sphi 0, %s123
      %s141 = sphi 0, %s141
      %s143 = sphi 0, %s141
      %s144 = sphi 0, %s143
      %s158 = sphi 0, %s144
      %s162 = sphi 0, %s162
      %s164 = sphi 0, %s162
      %s165 = sphi 0, %s164
      %s179 = sphi 0, %s165
      %s183 = sphi 0, %s183
      %s185 = sphi 0, %s183
      %s186 = sphi 0, %s185
      %s200 = sphi 0, %s186
      %s204 = sphi 0, %s204
      %s206 = sphi 0, %s204
      %s207 = sphi 0, %s206
      %s221 = sphi 0, %s207
      %s225 = sphi 0, %s225
      %s227 = sphi 0, %s225
      %s228 = sphi 0, %s227
      %s242 = sphi 0, %s228
      %s246 = sphi 0, %s246
      %s248 = sphi 0, %s246
      %s249 = sphi 0, %s248
      %s263 = sphi 0, %s249
      %s267 = sphi 0, %s267
      %s269 = sphi 0, %s267
      %s270 = sphi 0, %s269
      %s284 = sphi 0, %s270
      %s288 = sphi 0, %s288
      %s290 = sphi 0, %s288
      %s291 = sphi 0, %s290
      %s305 = sphi 0, %s291
      %s309 = sphi 0, %s309
      %s311 = sphi 0, %s309
      %s312 = sphi 0, %s311
      %s326 = sphi 0, %s312
      %s330 = sphi 0, %s330
      %s332 = sphi 0, %s330
      %s333 = sphi 0, %s332
      %s347 = sphi 0, %s333
      %s353 = sphi 0, %s355
      %s356 = sphi 0, %s353
      %s357 = sphi 0, %s356
      %s373 = sphi 0, %s357
    $region4: #{discriminator_forward.1} parent=1 // loop_header_branch
      %26 = sbr.rel (%p24) target = $region8
    $region5: #{discriminator_forward.1} parent=1 // loop_body
      %s28 = ssub.s32 %s23, 1
      %s29 = ssub.s32 %s23, 2
      %s30 = sadd.s32 %s23, 1
      %s31 = ssub.s32 %s23, %s30
      %p32 = scmp.eq.s32.totalorder %s31, 0
      %s34 = sadd.s32 %s33, 1
      %s35 = scalar_select %p32, %s33, %s34
      %p38 = pneg %p32
      %p39 = scmp.eq.s32.totalorder %s23, 1
      %p40 = por %p38, %p39
      %p41 = scmp.ne.s32.totalorder %s33, %s36
      %p42 = scmp.eq.s32.totalorder %s23, 0
      %p43 = por %p41, %p42
      %p44 = scmp.ne.s32.totalorder %s33, %s36
      %p45 = scmp.eq.s32.totalorder %s28, 1
      %p46 = por %p44, %p45
      %p47 = scmp.ne.s32.totalorder %s36, %s37
      %p48 = scmp.eq.s32.totalorder %s28, 0
      %p49 = por %p47, %p48
      %p50 = scmp.ne.s32.totalorder %s36, %s37
      %p51 = scmp.eq.s32.totalorder %s29, 1
      %p52 = por %p50, %p51
      %p54 = scmp.ne.s32.totalorder %s37, %s53
      %p55 = scmp.eq.s32.totalorder %s29, 0
      %p56 = por %p54, %p55
      %s58 = sadd.s32 %s57, 1
      %p61 = scmp.eq.s32.totalorder %s23, 1
      %p62 = scmp.ne.s32.totalorder %s57, %s59
      %p63 = scmp.eq.s32.totalorder %s23, 0
      %p64 = por %p62, %p63
      %p65 = scmp.ne.s32.totalorder %s57, %s59
      %p66 = scmp.eq.s32.totalorder %s28, 1
      %p67 = por %p65, %p66
      %p68 = scmp.ne.s32.totalorder %s59, %s60
      %p69 = scmp.eq.s32.totalorder %s28, 0
      %p70 = por %p68, %p69
      %p71 = scmp.ne.s32.totalorder %s59, %s60
      %p72 = scmp.eq.s32.totalorder %s29, 1
      %p73 = por %p71, %p72
      %p75 = scmp.ne.s32.totalorder %s60, %s74
      %p76 = scmp.eq.s32.totalorder %s29, 0
      %p77 = por %p75, %p76
      %s79 = sadd.s32 %s78, 1
      %p82 = scmp.eq.s32.totalorder %s23, 1
      %p83 = scmp.ne.s32.totalorder %s78, %s80
      %p84 = scmp.eq.s32.totalorder %s23, 0
      %p85 = por %p83, %p84
      %p86 = scmp.ne.s32.totalorder %s78, %s80
      %p87 = scmp.eq.s32.totalorder %s28, 1
      %p88 = por %p86, %p87
      %p89 = scmp.ne.s32.totalorder %s80, %s81
      %p90 = scmp.eq.s32.totalorder %s28, 0
      %p91 = por %p89, %p90
      %p92 = scmp.ne.s32.totalorder %s80, %s81
      %p93 = scmp.eq.s32.totalorder %s29, 1
      %p94 = por %p92, %p93
      %p96 = scmp.ne.s32.totalorder %s81, %s95
      %p97 = scmp.eq.s32.totalorder %s29, 0
      %p98 = por %p96, %p97
      %s100 = sadd.s32 %s99, 1
      %p103 = scmp.eq.s32.totalorder %s23, 1
      %p104 = scmp.ne.s32.totalorder %s99, %s101
      %p105 = scmp.eq.s32.totalorder %s23, 0
      %p106 = por %p104, %p105
      %p107 = scmp.ne.s32.totalorder %s99, %s101
      %p108 = scmp.eq.s32.totalorder %s28, 1
      %p109 = por %p107, %p108
      %p110 = scmp.ne.s32.totalorder %s101, %s102
      %p111 = scmp.eq.s32.totalorder %s28, 0
      %p112 = por %p110, %p111
      %p113 = scmp.ne.s32.totalorder %s101, %s102
      %p114 = scmp.eq.s32.totalorder %s29, 1
      %p115 = por %p113, %p114
      %p117 = scmp.ne.s32.totalorder %s102, %s116
      %p118 = scmp.eq.s32.totalorder %s29, 0
      %p119 = por %p117, %p118
      %s121 = sadd.s32 %s120, 1
      %p124 = scmp.eq.s32.totalorder %s23, 1
      %p125 = scmp.ne.s32.totalorder %s120, %s122
      %p126 = scmp.eq.s32.totalorder %s23, 0
      %p127 = por %p125, %p126
      %p128 = scmp.ne.s32.totalorder %s120, %s122
      %p129 = scmp.eq.s32.totalorder %s28, 1
      %p130 = por %p128, %p129
      %p131 = scmp.ne.s32.totalorder %s122, %s123
      %p132 = scmp.eq.s32.totalorder %s28, 0
      %p133 = por %p131, %p132
      %p134 = scmp.ne.s32.totalorder %s122, %s123
      %p135 = scmp.eq.s32.totalorder %s29, 1
      %p136 = por %p134, %p135
      %p138 = scmp.ne.s32.totalorder %s123, %s137
      %p139 = scmp.eq.s32.totalorder %s29, 0
      %p140 = por %p138, %p139
      %s142 = sadd.s32 %s141, 1
      %p145 = scmp.eq.s32.totalorder %s23, 1
      %p146 = scmp.ne.s32.totalorder %s141, %s143
      %p147 = scmp.eq.s32.totalorder %s23, 0
      %p148 = por %p146, %p147
      %p149 = scmp.ne.s32.totalorder %s141, %s143
      %p150 = scmp.eq.s32.totalorder %s28, 1
      %p151 = por %p149, %p150
      %p152 = scmp.ne.s32.totalorder %s143, %s144
      %p153 = scmp.eq.s32.totalorder %s28, 0
      %p154 = por %p152, %p153
      %p155 = scmp.ne.s32.totalorder %s143, %s144
      %p156 = scmp.eq.s32.totalorder %s29, 1
      %p157 = por %p155, %p156
      %p159 = scmp.ne.s32.totalorder %s144, %s158
      %p160 = scmp.eq.s32.totalorder %s29, 0
      %p161 = por %p159, %p160
      %s163 = sadd.s32 %s162, 1
      %p166 = scmp.eq.s32.totalorder %s23, 1
      %p167 = scmp.ne.s32.totalorder %s162, %s164
      %p168 = scmp.eq.s32.totalorder %s23, 0
      %p169 = por %p167, %p168
      %p170 = scmp.ne.s32.totalorder %s162, %s164
      %p171 = scmp.eq.s32.totalorder %s28, 1
      %p172 = por %p170, %p171
      %p173 = scmp.ne.s32.totalorder %s164, %s165
      %p174 = scmp.eq.s32.totalorder %s28, 0
      %p175 = por %p173, %p174
      %p176 = scmp.ne.s32.totalorder %s164, %s165
      %p177 = scmp.eq.s32.totalorder %s29, 1
      %p178 = por %p176, %p177
      %p180 = scmp.ne.s32.totalorder %s165, %s179
      %p181 = scmp.eq.s32.totalorder %s29, 0
      %p182 = por %p180, %p181
      %s184 = sadd.s32 %s183, 1
      %p187 = scmp.eq.s32.totalorder %s23, 1
      %p188 = scmp.ne.s32.totalorder %s183, %s185
      %p189 = scmp.eq.s32.totalorder %s23, 0
      %p190 = por %p188, %p189
      %p191 = scmp.ne.s32.totalorder %s183, %s185
      %p192 = scmp.eq.s32.totalorder %s28, 1
      %p193 = por %p191, %p192
      %p194 = scmp.ne.s32.totalorder %s185, %s186
      %p195 = scmp.eq.s32.totalorder %s28, 0
      %p196 = por %p194, %p195
      %p197 = scmp.ne.s32.totalorder %s185, %s186
      %p198 = scmp.eq.s32.totalorder %s29, 1
      %p199 = por %p197, %p198
      %p201 = scmp.ne.s32.totalorder %s186, %s200
      %p202 = scmp.eq.s32.totalorder %s29, 0
      %p203 = por %p201, %p202
      %s205 = sadd.s32 %s204, 1
      %p208 = scmp.eq.s32.totalorder %s23, 1
      %p209 = scmp.ne.s32.totalorder %s204, %s206
      %p210 = scmp.eq.s32.totalorder %s23, 0
      %p211 = por %p209, %p210
      %p212 = scmp.ne.s32.totalorder %s204, %s206
      %p213 = scmp.eq.s32.totalorder %s28, 1
      %p214 = por %p212, %p213
      %p215 = scmp.ne.s32.totalorder %s206, %s207
      %p216 = scmp.eq.s32.totalorder %s28, 0
      %p217 = por %p215, %p216
      %p218 = scmp.ne.s32.totalorder %s206, %s207
      %p219 = scmp.eq.s32.totalorder %s29, 1
      %p220 = por %p218, %p219
      %p222 = scmp.ne.s32.totalorder %s207, %s221
      %p223 = scmp.eq.s32.totalorder %s29, 0
      %p224 = por %p222, %p223
      %s226 = sadd.s32 %s225, 1
      %p229 = scmp.eq.s32.totalorder %s23, 1
      %p230 = scmp.ne.s32.totalorder %s225, %s227
      %p231 = scmp.eq.s32.totalorder %s23, 0
      %p232 = por %p230, %p231
      %p233 = scmp.ne.s32.totalorder %s225, %s227
      %p234 = scmp.eq.s32.totalorder %s28, 1
      %p235 = por %p233, %p234
      %p236 = scmp.ne.s32.totalorder %s227, %s228
      %p237 = scmp.eq.s32.totalorder %s28, 0
      %p238 = por %p236, %p237
      %p239 = scmp.ne.s32.totalorder %s227, %s228
      %p240 = scmp.eq.s32.totalorder %s29, 1
      %p241 = por %p239, %p240
      %p243 = scmp.ne.s32.totalorder %s228, %s242
      %p244 = scmp.eq.s32.totalorder %s29, 0
      %p245 = por %p243, %p244
      %s247 = sadd.s32 %s246, 1
      %p250 = scmp.eq.s32.totalorder %s23, 1
      %p251 = scmp.ne.s32.totalorder %s246, %s248
      %p252 = scmp.eq.s32.totalorder %s23, 0
      %p253 = por %p251, %p252
      %p254 = scmp.ne.s32.totalorder %s246, %s248
      %p255 = scmp.eq.s32.totalorder %s28, 1
      %p256 = por %p254, %p255
      %p257 = scmp.ne.s32.totalorder %s248, %s249
      %p258 = scmp.eq.s32.totalorder %s28, 0
      %p259 = por %p257, %p258
      %p260 = scmp.ne.s32.totalorder %s248, %s249
      %p261 = scmp.eq.s32.totalorder %s29, 1
      %p262 = por %p260, %p261
      %p264 = scmp.ne.s32.totalorder %s249, %s263
      %p265 = scmp.eq.s32.totalorder %s29, 0
      %p266 = por %p264, %p265
      %s268 = sadd.s32 %s267, 1
      %p271 = scmp.eq.s32.totalorder %s23, 1
      %p272 = scmp.ne.s32.totalorder %s267, %s269
      %p273 = scmp.eq.s32.totalorder %s23, 0
      %p274 = por %p272, %p273
      %p275 = scmp.ne.s32.totalorder %s267, %s269
      %p276 = scmp.eq.s32.totalorder %s28, 1
      %p277 = por %p275, %p276
      %p278 = scmp.ne.s32.totalorder %s269, %s270
      %p279 = scmp.eq.s32.totalorder %s28, 0
      %p280 = por %p278, %p279
      %p281 = scmp.ne.s32.totalorder %s269, %s270
      %p282 = scmp.eq.s32.totalorder %s29, 1
      %p283 = por %p281, %p282
      %p285 = scmp.ne.s32.totalorder %s270, %s284
      %p286 = scmp.eq.s32.totalorder %s29, 0
      %p287 = por %p285, %p286
      %s289 = sadd.s32 %s288, 1
      %p292 = scmp.eq.s32.totalorder %s23, 1
      %p293 = scmp.ne.s32.totalorder %s288, %s290
      %p294 = scmp.eq.s32.totalorder %s23, 0
      %p295 = por %p293, %p294
      %p296 = scmp.ne.s32.totalorder %s288, %s290
      %p297 = scmp.eq.s32.totalorder %s28, 1
      %p298 = por %p296, %p297
      %p299 = scmp.ne.s32.totalorder %s290, %s291
      %p300 = scmp.eq.s32.totalorder %s28, 0
      %p301 = por %p299, %p300
      %p302 = scmp.ne.s32.totalorder %s290, %s291
      %p303 = scmp.eq.s32.totalorder %s29, 1
      %p304 = por %p302, %p303
      %p306 = scmp.ne.s32.totalorder %s291, %s305
      %p307 = scmp.eq.s32.totalorder %s29, 0
      %p308 = por %p306, %p307
      %s310 = sadd.s32 %s309, 1
      %p313 = scmp.eq.s32.totalorder %s23, 1
      %p314 = scmp.ne.s32.totalorder %s309, %s311
      %p315 = scmp.eq.s32.totalorder %s23, 0
      %p316 = por %p314, %p315
      %p317 = scmp.ne.s32.totalorder %s309, %s311
      %p318 = scmp.eq.s32.totalorder %s28, 1
      %p319 = por %p317, %p318
      %p320 = scmp.ne.s32.totalorder %s311, %s312
      %p321 = scmp.eq.s32.totalorder %s28, 0
      %p322 = por %p320, %p321
      %p323 = scmp.ne.s32.totalorder %s311, %s312
      %p324 = scmp.eq.s32.totalorder %s29, 1
      %p325 = por %p323, %p324
      %p327 = scmp.ne.s32.totalorder %s312, %s326
      %p328 = scmp.eq.s32.totalorder %s29, 0
      %p329 = por %p327, %p328
      %s331 = sadd.s32 %s330, 1
      %p334 = scmp.eq.s32.totalorder %s23, 1
      %p335 = scmp.ne.s32.totalorder %s330, %s332
      %p336 = scmp.eq.s32.totalorder %s23, 0
      %p337 = por %p335, %p336
      %p338 = scmp.ne.s32.totalorder %s330, %s332
      %p339 = scmp.eq.s32.totalorder %s28, 1
      %p340 = por %p338, %p339
      %p341 = scmp.ne.s32.totalorder %s332, %s333
      %p342 = scmp.eq.s32.totalorder %s28, 0
      %p343 = por %p341, %p342
      %p344 = scmp.ne.s32.totalorder %s332, %s333
      %p345 = scmp.eq.s32.totalorder %s29, 1
      %p346 = por %p344, %p345
      %p348 = scmp.ne.s32.totalorder %s333, %s347
      %p349 = scmp.eq.s32.totalorder %s29, 0
      %p350 = por %p348, %p349
      %s351 = ssub.s32 %s23, %s30
      %p352 = scmp.eq.s32.totalorder %s351, 0
      %s354 = sadd.s32 %s353, 1
      %s355 = scalar_select %p352, %s353, %s354
      %p358 = pneg %p352
      %p359 = scmp.eq.s32.totalorder %s23, 1
      %p360 = por %p358, %p359
      %p361 = scmp.ne.s32.totalorder %s353, %s356
      %p362 = scmp.eq.s32.totalorder %s23, 0
      %p363 = por %p361, %p362
      %p364 = scmp.ne.s32.totalorder %s353, %s356
      %p365 = scmp.eq.s32.totalorder %s28, 1
      %p366 = por %p364, %p365
      %p367 = scmp.ne.s32.totalorder %s356, %s357
      %p368 = scmp.eq.s32.totalorder %s28, 0
      %p369 = por %p367, %p368
      %p370 = scmp.ne.s32.totalorder %s356, %s357
      %p371 = scmp.eq.s32.totalorder %s29, 1
      %p372 = por %p370, %p371
      %p374 = scmp.ne.s32.totalorder %s357, %s373
      %p375 = scmp.eq.s32.totalorder %s29, 0
      %p376 = por %p374, %p375
      %p377 = scmp.le.s32.totalorder 1, %s23
      %p378 = scmp.lt.s32.totalorder %s23, 3
      %p379 = pnand %p377, %p378
      %p380 = pneg %p379
      // Predicated region
      $region9: #{discriminator_forward.1} parent=5 // pred_check
        _
      $region10: #{discriminator_forward.1} parent=5 // pred_check_branch
        %382 = sbr.rel (%p379) target = $region12
      $region11: #{discriminator_forward.1} parent=5 // pred_region
        %s383 = ssub.s32 %s23, 1
        // Predicated region
        $region13: #{discriminator_forward.1} parent=11 // pred_check
          %p384 = pneg %p70
        $region14: #{discriminator_forward.1} parent=11 // pred_check_branch
          %386 = sbr.rel (%p384) target = $region16
        $region15: #{discriminator_forward.1} parent=11 // pred_region
          %s388 = ssub.s32 32768, 32768
          %389 = vsyncadd [#allocation3], %s388
          %s390 = sshll.u32 [#allocation2], 4
          %s391 = int_to_ptr.vmem [resolvable:$true] %s390
          %396 = dma.hbm_to_vmem [thread:$0]  %s1, 32768, %s391, [#allocation3], 256, 256, 16
        $region16: #{discriminator_forward.1} parent=11 // pred_fallthru
          _
        // Predicated region
        $region17: #{discriminator_forward.1} parent=11 // pred_check
          %p397 = pneg %p91
        $region18: #{discriminator_forward.1} parent=11 // pred_check_branch
          %399 = sbr.rel (%p397) target = $region20
        $region19: #{discriminator_forward.1} parent=11 // pred_region
          _
        $region20: #{discriminator_forward.1} parent=11 // pred_fallthru
          _
        // Predicated region
        $region21: #{discriminator_forward.1} parent=11 // pred_check
          %p400 = pneg %p112
        $region22: #{discriminator_forward.1} parent=11 // pred_check_branch
          %402 = sbr.rel (%p400) target = $region24
        $region23: #{discriminator_forward.1} parent=11 // pred_region
          _
        $region24: #{discriminator_forward.1} parent=11 // pred_fallthru
          _
        // Predicated region
        $region25: #{discriminator_forward.1} parent=11 // pred_check
          %p403 = pneg %p133
        $region26: #{discriminator_forward.1} parent=11 // pred_check_branch
          %405 = sbr.rel (%p403) target = $region28
        $region27: #{discriminator_forward.1} parent=11 // pred_region
          _
        $region28: #{discriminator_forward.1} parent=11 // pred_fallthru
          _
        // Predicated region
        $region29: #{discriminator_forward.1} parent=11 // pred_check
          %p406 = pneg %p154
        $region30: #{discriminator_forward.1} parent=11 // pred_check_branch
          %408 = sbr.rel (%p406) target = $region32
        $region31: #{discriminator_forward.1} parent=11 // pred_region
          %s410 = ssub.s32 8192, 8192
          %411 = vsyncadd [#allocation5], %s410
          %s412 = sshll.u32 [#allocation4], 4
          %s413 = int_to_ptr.vmem [resolvable:$true] %s412
          %418 = dma.hbm_to_vmem [thread:$0]  %s5, 8192, %s413, [#allocation5], 256, 256, 16
        $region32: #{discriminator_forward.1} parent=11 // pred_fallthru
          _
        // Predicated region
        $region33: #{discriminator_forward.1} parent=11 // pred_check
          %p419 = pneg %p175
        $region34: #{discriminator_forward.1} parent=11 // pred_check_branch
          %421 = sbr.rel (%p419) target = $region36
        $region35: #{discriminator_forward.1} parent=11 // pred_region
          _
        $region36: #{discriminator_forward.1} parent=11 // pred_fallthru
          _
        // Predicated region
        $region37: #{discriminator_forward.1} parent=11 // pred_check
          %p422 = pneg %p196
        $region38: #{discriminator_forward.1} parent=11 // pred_check_branch
          %424 = sbr.rel (%p422) target = $region40
        $region39: #{discriminator_forward.1} parent=11 // pred_region
          _
        $region40: #{discriminator_forward.1} parent=11 // pred_fallthru
          _
        // Predicated region
        $region41: #{discriminator_forward.1} parent=11 // pred_check
          %p425 = pneg %p217
        $region42: #{discriminator_forward.1} parent=11 // pred_check_branch
          %427 = sbr.rel (%p425) target = $region44
        $region43: #{discriminator_forward.1} parent=11 // pred_region
          _
        $region44: #{discriminator_forward.1} parent=11 // pred_fallthru
          _
        // Predicated region
        $region45: #{discriminator_forward.1} parent=11 // pred_check
          %p428 = pneg %p238
        $region46: #{discriminator_forward.1} parent=11 // pred_check_branch
          %430 = sbr.rel (%p428) target = $region48
        $region47: #{discriminator_forward.1} parent=11 // pred_region
          _
        $region48: #{discriminator_forward.1} parent=11 // pred_fallthru
          _
        // Predicated region
        $region49: #{discriminator_forward.1} parent=11 // pred_check
          %p431 = pneg %p259
        $region50: #{discriminator_forward.1} parent=11 // pred_check_branch
          %433 = sbr.rel (%p431) target = $region52
        $region51: #{discriminator_forward.1} parent=11 // pred_region
          _
        $region52: #{discriminator_forward.1} parent=11 // pred_fallthru
          _
        // Predicated region
        $region53: #{discriminator_forward.1} parent=11 // pred_check
          %p434 = pneg %p280
        $region54: #{discriminator_forward.1} parent=11 // pred_check_branch
          %436 = sbr.rel (%p434) target = $region56
        $region55: #{discriminator_forward.1} parent=11 // pred_region
          _
        $region56: #{discriminator_forward.1} parent=11 // pred_fallthru
          _
        // Predicated region
        $region57: #{discriminator_forward.1} parent=11 // pred_check
          %p437 = pneg %p301
        $region58: #{discriminator_forward.1} parent=11 // pred_check_branch
          %439 = sbr.rel (%p437) target = $region60
        $region59: #{discriminator_forward.1} parent=11 // pred_region
          _
        $region60: #{discriminator_forward.1} parent=11 // pred_fallthru
          _
        // Predicated region
        $region61: #{discriminator_forward.1} parent=11 // pred_check
          %p440 = pneg %p322
        $region62: #{discriminator_forward.1} parent=11 // pred_check_branch
          %442 = sbr.rel (%p440) target = $region64
        $region63: #{discriminator_forward.1} parent=11 // pred_region
          %s444 = ssub.s32 2304, 2304
          %445 = vsyncadd [#allocation5], %s444
          %s446 = sshll.u32 [#allocation6], 4
          %s447 = int_to_ptr.vmem [resolvable:$true] %s446
          %452 = dma.hbm_to_vmem [thread:$0]  %s13, 2304, %s447, [#allocation5], 64, 64, 4
        $region64: #{discriminator_forward.1} parent=11 // pred_fallthru
          _
        // Predicated region
        $region65: #{discriminator_forward.1} parent=11 // pred_check
          %p453 = pneg %p343
        $region66: #{discriminator_forward.1} parent=11 // pred_check_branch
          %455 = sbr.rel (%p453) target = $region68
        $region67: #{discriminator_forward.1} parent=11 // pred_region
          _
        $region68: #{discriminator_forward.1} parent=11 // pred_fallthru
          _
      $region12: #{discriminator_forward.1} parent=5 // pred_fallthru
        _
      %p456 = scmp.lt.s32.totalorder %s23, 2
      // Predicated region
      $region69: #{discriminator_forward.1} parent=5 // pred_check
        %p457 = pneg %p456
      $region70: #{discriminator_forward.1} parent=5 // pred_check_branch
        %459 = sbr.rel (%p457) target = $region72
      $region71: #{discriminator_forward.1} parent=5 // pred_region
        // Predicated region
        $region73: #{discriminator_forward.1} parent=71 // pred_check
          %p460 = pneg %p43
        $region74: #{discriminator_forward.1} parent=71 // pred_check_branch
          %462 = sbr.rel (%p460) target = $region76
        $region75: #{discriminator_forward.1} parent=71 // pred_region
          %p463 = scmp.lt.s32.totalorder %s23, 1
          %s464 = scalar_select %p463, %s23, 1
          %s465 = smul.addr %s464, 8
          %s466 = scalar_lea.vmem %s0, %s465
        $region76: #{discriminator_forward.1} parent=71 // pred_fallthru
          _
      $region72: #{discriminator_forward.1} parent=5 // pred_fallthru
        _
      %p467 = scmp.le.s32.totalorder 1, %s23
      %p468 = scmp.lt.s32.totalorder %s23, 3
      %p469 = pnand %p467, %p468
      %p470 = pneg %p469
      // Predicated region
      $region77: #{discriminator_forward.1} parent=5 // pred_check
        _
      $region78: #{discriminator_forward.1} parent=5 // pred_check_branch
        %472 = sbr.rel (%p469) target = $region80
      $region79: #{discriminator_forward.1} parent=5 // pred_region
        %s473 = ssub.s32 %s23, 1
        // Predicated region
        $region81: #{discriminator_forward.1} parent=79 // pred_check
          %p474 = pneg %p70
        $region82: #{discriminator_forward.1} parent=79 // pred_check_branch
          %476 = sbr.rel (%p474) target = $region84
        $region83: #{discriminator_forward.1} parent=79 // pred_region
          %477 = dma.done [#allocation3], 32768
        $region84: #{discriminator_forward.1} parent=79 // pred_fallthru
          _
        // Predicated region
        $region85: #{discriminator_forward.1} parent=79 // pred_check
          %p478 = pneg %p154
        $region86: #{discriminator_forward.1} parent=79 // pred_check_branch
          %480 = sbr.rel (%p478) target = $region88
        $region87: #{discriminator_forward.1} parent=79 // pred_region
          %481 = dma.done [#allocation5], 8192
        $region88: #{discriminator_forward.1} parent=79 // pred_fallthru
          _
        // Predicated region
        $region89: #{discriminator_forward.1} parent=79 // pred_check
          %p482 = pneg %p322
        $region90: #{discriminator_forward.1} parent=79 // pred_check_branch
          %484 = sbr.rel (%p482) target = $region92
        $region91: #{discriminator_forward.1} parent=79 // pred_region
          %485 = dma.done [#allocation5], 2304
        $region92: #{discriminator_forward.1} parent=79 // pred_fallthru
          _
        %p486 = scmp.lt.s32.totalorder %s28, 1
        %s487 = scalar_select %p486, %s28, 1
        %s488 = smul.addr %s487, 8
        %s489 = scalar_lea.vmem %s0, %s488
        %p490 = pneg %p49
        %p491 = pneg %p46
        %p492 = pneg %p70
        %p493 = pneg %p67
        %p494 = pneg %p91
        %p495 = pneg %p88
        %p496 = pneg %p112
        %p497 = pneg %p109
        %p498 = pneg %p133
        %p499 = pneg %p130
        %p500 = pneg %p154
        %p501 = pneg %p151
        %p502 = pneg %p175
        %p503 = pneg %p172
        %p504 = pneg %p196
        %p505 = pneg %p193
        %p506 = pneg %p217
        %p507 = pneg %p214
        %p508 = pneg %p238
        %p509 = pneg %p235
        %p510 = pneg %p259
        %p511 = pneg %p256
        %p512 = pneg %p280
        %p513 = pneg %p277
        %p514 = pneg %p301
        %p515 = pneg %p298
        %p516 = pneg %p322
        %p517 = pneg %p319
        %p518 = pneg %p343
        %p519 = pneg %p340
        %p520 = pneg %p369
        %p521 = pneg %p366
        %p522 = scmp.lt.s32.totalorder %s28, 1
        %s523 = scalar_select %p522, %s28, 1
        %s524 = scalar_lea.vmem %s15, %s523
        %p525 = scmp.lt.s32.totalorder %s28, 1
        %s526 = scalar_select %p525, %s28, 1
        %s527 = smul.addr %s526, 8
        %s528 = scalar_lea.vmem %s0, %s527
        %p529 = scmp.lt.s32.totalorder %s28, 1
        %s530 = scalar_select %p529, %s28, 1
        %s531 = scalar_lea.vmem %s15, %s530
        %v533 = vld [vmem:[%s528] sm:$0xff]
        %v534 = vld [vmem:[#allocation2] sm:$0xff]
        %v535 = vld [vmem:[#allocation2 + $0x8] sm:$0xff]
        %v536 = vld [vmem:[#allocation2 + $0x10] sm:$0xff]
        %v537 = vld [vmem:[#allocation2 + $0x18] sm:$0xff]
        %v538 = vld [vmem:[#allocation2 + $0x20] sm:$0xff]
        %v539 = vld [vmem:[#allocation2 + $0x28] sm:$0xff]
        %v540 = vld [vmem:[#allocation2 + $0x30] sm:$0xff]
        %v541 = vld [vmem:[#allocation2 + $0x38] sm:$0xff]
        %v542 = vld [vmem:[#allocation2 + $0x40] sm:$0xff]
        %v543 = vld [vmem:[#allocation2 + $0x48] sm:$0xff]
        %v544 = vld [vmem:[#allocation2 + $0x50] sm:$0xff]
        %v545 = vld [vmem:[#allocation2 + $0x58] sm:$0xff]
        %v546 = vld [vmem:[#allocation2 + $0x60] sm:$0xff]
        %v547 = vld [vmem:[#allocation2 + $0x68] sm:$0xff]
        %v548 = vld [vmem:[#allocation2 + $0x70] sm:$0xff]
        %v549 = vld [vmem:[#allocation2 + $0x78] sm:$0xff]
        %v550 = vld [vmem:[#allocation2 + $0x80] sm:$0xff]
        %v551 = vld [vmem:[#allocation2 + $0x88] sm:$0xff]
        %v552 = vld [vmem:[#allocation2 + $0x90] sm:$0xff]
        %v553 = vld [vmem:[#allocation2 + $0x98] sm:$0xff]
        %v554 = vld [vmem:[#allocation2 + $0xa0] sm:$0xff]
        %v555 = vld [vmem:[#allocation2 + $0xa8] sm:$0xff]
        %v556 = vld [vmem:[#allocation2 + $0xb0] sm:$0xff]
        %v557 = vld [vmem:[#allocation2 + $0xb8] sm:$0xff]
        %v558 = vld [vmem:[#allocation2 + $0xc0] sm:$0xff]
        %v559 = vld [vmem:[#allocation2 + $0xc8] sm:$0xff]
        %v560 = vld [vmem:[#allocation2 + $0xd0] sm:$0xff]
        %v561 = vld [vmem:[#allocation2 + $0xd8] sm:$0xff]
        %v562 = vld [vmem:[#allocation2 + $0xe0] sm:$0xff]
        %v563 = vld [vmem:[#allocation2 + $0xe8] sm:$0xff]
        %v564 = vld [vmem:[#allocation2 + $0xf0] sm:$0xff]
        %v565 = vld [vmem:[#allocation2 + $0xf8] sm:$0xff]
        %v566 = vld [vmem:[#allocation2 + $0x100] sm:$0xff]
        %v567 = vld [vmem:[#allocation2 + $0x108] sm:$0xff]
        %v568 = vld [vmem:[#allocation2 + $0x110] sm:$0xff]
        %v569 = vld [vmem:[#allocation2 + $0x118] sm:$0xff]
        %v570 = vld [vmem:[#allocation2 + $0x120] sm:$0xff]
        %v571 = vld [vmem:[#allocation2 + $0x128] sm:$0xff]
        %v572 = vld [vmem:[#allocation2 + $0x130] sm:$0xff]
        %v573 = vld [vmem:[#allocation2 + $0x138] sm:$0xff]
        %v574 = vld [vmem:[#allocation2 + $0x140] sm:$0xff]
        %v575 = vld [vmem:[#allocation2 + $0x148] sm:$0xff]
        %v576 = vld [vmem:[#allocation2 + $0x150] sm:$0xff]
        %v577 = vld [vmem:[#allocation2 + $0x158] sm:$0xff]
        %v578 = vld [vmem:[#allocation2 + $0x160] sm:$0xff]
        %v579 = vld [vmem:[#allocation2 + $0x168] sm:$0xff]
        %v580 = vld [vmem:[#allocation2 + $0x170] sm:$0xff]
        %v581 = vld [vmem:[#allocation2 + $0x178] sm:$0xff]
        %v582 = vld [vmem:[#allocation2 + $0x180] sm:$0xff]
        %v583 = vld [vmem:[#allocation2 + $0x188] sm:$0xff]
        %v584 = vld [vmem:[#allocation2 + $0x190] sm:$0xff]
        %v585 = vld [vmem:[#allocation2 + $0x198] sm:$0xff]
        %v586 = vld [vmem:[#allocation2 + $0x1a0] sm:$0xff]
        %v587 = vld [vmem:[#allocation2 + $0x1a8] sm:$0xff]
        %v588 = vld [vmem:[#allocation2 + $0x1b0] sm:$0xff]
        %v589 = vld [vmem:[#allocation2 + $0x1b8] sm:$0xff]
        %v590 = vld [vmem:[#allocation2 + $0x1c0] sm:$0xff]
        %v591 = vld [vmem:[#allocation2 + $0x1c8] sm:$0xff]
        %v592 = vld [vmem:[#allocation2 + $0x1d0] sm:$0xff]
        %v593 = vld [vmem:[#allocation2 + $0x1d8] sm:$0xff]
        %v594 = vld [vmem:[#allocation2 + $0x1e0] sm:$0xff]
        %v595 = vld [vmem:[#allocation2 + $0x1e8] sm:$0xff]
        %v596 = vld [vmem:[#allocation2 + $0x1f0] sm:$0xff]
        %v597 = vld [vmem:[#allocation2 + $0x1f8] sm:$0xff]
        %v598 = vld [vmem:[#allocation2 + $0x200] sm:$0xff]
        %v599 = vld [vmem:[#allocation2 + $0x208] sm:$0xff]
        %v600 = vld [vmem:[#allocation2 + $0x210] sm:$0xff]
        %v601 = vld [vmem:[#allocation2 + $0x218] sm:$0xff]
        %v602 = vld [vmem:[#allocation2 + $0x220] sm:$0xff]
        %v603 = vld [vmem:[#allocation2 + $0x228] sm:$0xff]
        %v604 = vld [vmem:[#allocation2 + $0x230] sm:$0xff]
        %v605 = vld [vmem:[#allocation2 + $0x238] sm:$0xff]
        %v606 = vld [vmem:[#allocation2 + $0x240] sm:$0xff]
        %v607 = vld [vmem:[#allocation2 + $0x248] sm:$0xff]
        %v608 = vld [vmem:[#allocation2 + $0x250] sm:$0xff]
        %v609 = vld [vmem:[#allocation2 + $0x258] sm:$0xff]
        %v610 = vld [vmem:[#allocation2 + $0x260] sm:$0xff]
        %v611 = vld [vmem:[#allocation2 + $0x268] sm:$0xff]
        %v612 = vld [vmem:[#allocation2 + $0x270] sm:$0xff]
        %v613 = vld [vmem:[#allocation2 + $0x278] sm:$0xff]
        %v614 = vld [vmem:[#allocation2 + $0x280] sm:$0xff]
        %v615 = vld [vmem:[#allocation2 + $0x288] sm:$0xff]
        %v616 = vld [vmem:[#allocation2 + $0x290] sm:$0xff]
        %v617 = vld [vmem:[#allocation2 + $0x298] sm:$0xff]
        %v618 = vld [vmem:[#allocation2 + $0x2a0] sm:$0xff]
        %v619 = vld [vmem:[#allocation2 + $0x2a8] sm:$0xff]
        %v620 = vld [vmem:[#allocation2 + $0x2b0] sm:$0xff]
        %v621 = vld [vmem:[#allocation2 + $0x2b8] sm:$0xff]
        %v622 = vld [vmem:[#allocation2 + $0x2c0] sm:$0xff]
        %v623 = vld [vmem:[#allocation2 + $0x2c8] sm:$0xff]
        %v624 = vld [vmem:[#allocation2 + $0x2d0] sm:$0xff]
        %v625 = vld [vmem:[#allocation2 + $0x2d8] sm:$0xff]
        %v626 = vld [vmem:[#allocation2 + $0x2e0] sm:$0xff]
        %v627 = vld [vmem:[#allocation2 + $0x2e8] sm:$0xff]
        %v628 = vld [vmem:[#allocation2 + $0x2f0] sm:$0xff]
        %v629 = vld [vmem:[#allocation2 + $0x2f8] sm:$0xff]
        %v630 = vld [vmem:[#allocation2 + $0x300] sm:$0xff]
        %v631 = vld [vmem:[#allocation2 + $0x308] sm:$0xff]
        %v632 = vld [vmem:[#allocation2 + $0x310] sm:$0xff]
        %v633 = vld [vmem:[#allocation2 + $0x318] sm:$0xff]
        %v634 = vld [vmem:[#allocation2 + $0x320] sm:$0xff]
        %v635 = vld [vmem:[#allocation2 + $0x328] sm:$0xff]
        %v636 = vld [vmem:[#allocation2 + $0x330] sm:$0xff]
        %v637 = vld [vmem:[#allocation2 + $0x338] sm:$0xff]
        %v638 = vld [vmem:[#allocation2 + $0x340] sm:$0xff]
        %v639 = vld [vmem:[#allocation2 + $0x348] sm:$0xff]
        %v640 = vld [vmem:[#allocation2 + $0x350] sm:$0xff]
        %v641 = vld [vmem:[#allocation2 + $0x358] sm:$0xff]
        %v642 = vld [vmem:[#allocation2 + $0x360] sm:$0xff]
        %v643 = vld [vmem:[#allocation2 + $0x368] sm:$0xff]
        %v644 = vld [vmem:[#allocation2 + $0x370] sm:$0xff]
        %v645 = vld [vmem:[#allocation2 + $0x378] sm:$0xff]
        %v646 = vld [vmem:[#allocation2 + $0x380] sm:$0xff]
        %v647 = vld [vmem:[#allocation2 + $0x388] sm:$0xff]
        %v648 = vld [vmem:[#allocation2 + $0x390] sm:$0xff]
        %v649 = vld [vmem:[#allocation2 + $0x398] sm:$0xff]
        %v650 = vld [vmem:[#allocation2 + $0x3a0] sm:$0xff]
        %v651 = vld [vmem:[#allocation2 + $0x3a8] sm:$0xff]
        %v652 = vld [vmem:[#allocation2 + $0x3b0] sm:$0xff]
        %v653 = vld [vmem:[#allocation2 + $0x3b8] sm:$0xff]
        %v654 = vld [vmem:[#allocation2 + $0x3c0] sm:$0xff]
        %v655 = vld [vmem:[#allocation2 + $0x3c8] sm:$0xff]
        %v656 = vld [vmem:[#allocation2 + $0x3d0] sm:$0xff]
        %v657 = vld [vmem:[#allocation2 + $0x3d8] sm:$0xff]
        %v658 = vld [vmem:[#allocation2 + $0x3e0] sm:$0xff]
        %v659 = vld [vmem:[#allocation2 + $0x3e8] sm:$0xff]
        %v660 = vld [vmem:[#allocation2 + $0x3f0] sm:$0xff]
        %v661 = vld [vmem:[#allocation2 + $0x3f8] sm:$0xff]
        %v662 = vld [vmem:[#allocation2 + $0x400] sm:$0xff]
        %v663 = vld [vmem:[#allocation2 + $0x408] sm:$0xff]
        %v664 = vld [vmem:[#allocation2 + $0x410] sm:$0xff]
        %v665 = vld [vmem:[#allocation2 + $0x418] sm:$0xff]
        %v666 = vld [vmem:[#allocation2 + $0x420] sm:$0xff]
        %v667 = vld [vmem:[#allocation2 + $0x428] sm:$0xff]
        %v668 = vld [vmem:[#allocation2 + $0x430] sm:$0xff]
        %v669 = vld [vmem:[#allocation2 + $0x438] sm:$0xff]
        %v670 = vld [vmem:[#allocation2 + $0x440] sm:$0xff]
        %v671 = vld [vmem:[#allocation2 + $0x448] sm:$0xff]
        %v672 = vld [vmem:[#allocation2 + $0x450] sm:$0xff]
        %v673 = vld [vmem:[#allocation2 + $0x458] sm:$0xff]
        %v674 = vld [vmem:[#allocation2 + $0x460] sm:$0xff]
        %v675 = vld [vmem:[#allocation2 + $0x468] sm:$0xff]
        %v676 = vld [vmem:[#allocation2 + $0x470] sm:$0xff]
        %v677 = vld [vmem:[#allocation2 + $0x478] sm:$0xff]
        %v678 = vld [vmem:[#allocation2 + $0x480] sm:$0xff]
        %v679 = vld [vmem:[#allocation2 + $0x488] sm:$0xff]
        %v680 = vld [vmem:[#allocation2 + $0x490] sm:$0xff]
        %v681 = vld [vmem:[#allocation2 + $0x498] sm:$0xff]
        %v682 = vld [vmem:[#allocation2 + $0x4a0] sm:$0xff]
        %v683 = vld [vmem:[#allocation2 + $0x4a8] sm:$0xff]
        %v684 = vld [vmem:[#allocation2 + $0x4b0] sm:$0xff]
        %v685 = vld [vmem:[#allocation2 + $0x4b8] sm:$0xff]
        %v686 = vld [vmem:[#allocation2 + $0x4c0] sm:$0xff]
        %v687 = vld [vmem:[#allocation2 + $0x4c8] sm:$0xff]
        %v688 = vld [vmem:[#allocation2 + $0x4d0] sm:$0xff]
        %v689 = vld [vmem:[#allocation2 + $0x4d8] sm:$0xff]
        %v690 = vld [vmem:[#allocation2 + $0x4e0] sm:$0xff]
        %v691 = vld [vmem:[#allocation2 + $0x4e8] sm:$0xff]
        %v692 = vld [vmem:[#allocation2 + $0x4f0] sm:$0xff]
        %v693 = vld [vmem:[#allocation2 + $0x4f8] sm:$0xff]
        %v694 = vld [vmem:[#allocation2 + $0x500] sm:$0xff]
        %v695 = vld [vmem:[#allocation2 + $0x508] sm:$0xff]
        %v696 = vld [vmem:[#allocation2 + $0x510] sm:$0xff]
        %v697 = vld [vmem:[#allocation2 + $0x518] sm:$0xff]
        %v698 = vld [vmem:[#allocation2 + $0x520] sm:$0xff]
        %v699 = vld [vmem:[#allocation2 + $0x528] sm:$0xff]
        %v700 = vld [vmem:[#allocation2 + $0x530] sm:$0xff]
        %v701 = vld [vmem:[#allocation2 + $0x538] sm:$0xff]
        %v702 = vld [vmem:[#allocation2 + $0x540] sm:$0xff]
        %v703 = vld [vmem:[#allocation2 + $0x548] sm:$0xff]
        %v704 = vld [vmem:[#allocation2 + $0x550] sm:$0xff]
        %v705 = vld [vmem:[#allocation2 + $0x558] sm:$0xff]
        %v706 = vld [vmem:[#allocation2 + $0x560] sm:$0xff]
        %v707 = vld [vmem:[#allocation2 + $0x568] sm:$0xff]
        %v708 = vld [vmem:[#allocation2 + $0x570] sm:$0xff]
        %v709 = vld [vmem:[#allocation2 + $0x578] sm:$0xff]
        %v710 = vld [vmem:[#allocation2 + $0x580] sm:$0xff]
        %v711 = vld [vmem:[#allocation2 + $0x588] sm:$0xff]
        %v712 = vld [vmem:[#allocation2 + $0x590] sm:$0xff]
        %v713 = vld [vmem:[#allocation2 + $0x598] sm:$0xff]
        %v714 = vld [vmem:[#allocation2 + $0x5a0] sm:$0xff]
        %v715 = vld [vmem:[#allocation2 + $0x5a8] sm:$0xff]
        %v716 = vld [vmem:[#allocation2 + $0x5b0] sm:$0xff]
        %v717 = vld [vmem:[#allocation2 + $0x5b8] sm:$0xff]
        %v718 = vld [vmem:[#allocation2 + $0x5c0] sm:$0xff]
        %v719 = vld [vmem:[#allocation2 + $0x5c8] sm:$0xff]
        %v720 = vld [vmem:[#allocation2 + $0x5d0] sm:$0xff]
        %v721 = vld [vmem:[#allocation2 + $0x5d8] sm:$0xff]
        %v722 = vld [vmem:[#allocation2 + $0x5e0] sm:$0xff]
        %v723 = vld [vmem:[#allocation2 + $0x5e8] sm:$0xff]
        %v724 = vld [vmem:[#allocation2 + $0x5f0] sm:$0xff]
        %v725 = vld [vmem:[#allocation2 + $0x5f8] sm:$0xff]
        %v726 = vld [vmem:[#allocation2 + $0x600] sm:$0xff]
        %v727 = vld [vmem:[#allocation2 + $0x608] sm:$0xff]
        %v728 = vld [vmem:[#allocation2 + $0x610] sm:$0xff]
        %v729 = vld [vmem:[#allocation2 + $0x618] sm:$0xff]
        %v730 = vld [vmem:[#allocation2 + $0x620] sm:$0xff]
        %v731 = vld [vmem:[#allocation2 + $0x628] sm:$0xff]
        %v732 = vld [vmem:[#allocation2 + $0x630] sm:$0xff]
        %v733 = vld [vmem:[#allocation2 + $0x638] sm:$0xff]
        %v734 = vld [vmem:[#allocation2 + $0x640] sm:$0xff]
        %v735 = vld [vmem:[#allocation2 + $0x648] sm:$0xff]
        %v736 = vld [vmem:[#allocation2 + $0x650] sm:$0xff]
        %v737 = vld [vmem:[#allocation2 + $0x658] sm:$0xff]
        %v738 = vld [vmem:[#allocation2 + $0x660] sm:$0xff]
        %v739 = vld [vmem:[#allocation2 + $0x668] sm:$0xff]
        %v740 = vld [vmem:[#allocation2 + $0x670] sm:$0xff]
        %v741 = vld [vmem:[#allocation2 + $0x678] sm:$0xff]
        %v742 = vld [vmem:[#allocation2 + $0x680] sm:$0xff]
        %v743 = vld [vmem:[#allocation2 + $0x688] sm:$0xff]
        %v744 = vld [vmem:[#allocation2 + $0x690] sm:$0xff]
        %v745 = vld [vmem:[#allocation2 + $0x698] sm:$0xff]
        %v746 = vld [vmem:[#allocation2 + $0x6a0] sm:$0xff]
        %v747 = vld [vmem:[#allocation2 + $0x6a8] sm:$0xff]
        %v748 = vld [vmem:[#allocation2 + $0x6b0] sm:$0xff]
        %v749 = vld [vmem:[#allocation2 + $0x6b8] sm:$0xff]
        %v750 = vld [vmem:[#allocation2 + $0x6c0] sm:$0xff]
        %v751 = vld [vmem:[#allocation2 + $0x6c8] sm:$0xff]
        %v752 = vld [vmem:[#allocation2 + $0x6d0] sm:$0xff]
        %v753 = vld [vmem:[#allocation2 + $0x6d8] sm:$0xff]
        %v754 = vld [vmem:[#allocation2 + $0x6e0] sm:$0xff]
        %v755 = vld [vmem:[#allocation2 + $0x6e8] sm:$0xff]
        %v756 = vld [vmem:[#allocation2 + $0x6f0] sm:$0xff]
        %v757 = vld [vmem:[#allocation2 + $0x6f8] sm:$0xff]
        %v758 = vld [vmem:[#allocation2 + $0x700] sm:$0xff]
        %v759 = vld [vmem:[#allocation2 + $0x708] sm:$0xff]
        %v760 = vld [vmem:[#allocation2 + $0x710] sm:$0xff]
        %v761 = vld [vmem:[#allocation2 + $0x718] sm:$0xff]
        %v762 = vld [vmem:[#allocation2 + $0x720] sm:$0xff]
        %v763 = vld [vmem:[#allocation2 + $0x728] sm:$0xff]
        %v764 = vld [vmem:[#allocation2 + $0x730] sm:$0xff]
        %v765 = vld [vmem:[#allocation2 + $0x738] sm:$0xff]
        %v766 = vld [vmem:[#allocation2 + $0x740] sm:$0xff]
        %v767 = vld [vmem:[#allocation2 + $0x748] sm:$0xff]
        %v768 = vld [vmem:[#allocation2 + $0x750] sm:$0xff]
        %v769 = vld [vmem:[#allocation2 + $0x758] sm:$0xff]
        %v770 = vld [vmem:[#allocation2 + $0x760] sm:$0xff]
        %v771 = vld [vmem:[#allocation2 + $0x768] sm:$0xff]
        %v772 = vld [vmem:[#allocation2 + $0x770] sm:$0xff]
        %v773 = vld [vmem:[#allocation2 + $0x778] sm:$0xff]
        %v774 = vld [vmem:[#allocation2 + $0x780] sm:$0xff]
        %v775 = vld [vmem:[#allocation2 + $0x788] sm:$0xff]
        %v776 = vld [vmem:[#allocation2 + $0x790] sm:$0xff]
        %v777 = vld [vmem:[#allocation2 + $0x798] sm:$0xff]
        %v778 = vld [vmem:[#allocation2 + $0x7a0] sm:$0xff]
        %v779 = vld [vmem:[#allocation2 + $0x7a8] sm:$0xff]
        %v780 = vld [vmem:[#allocation2 + $0x7b0] sm:$0xff]
        %v781 = vld [vmem:[#allocation2 + $0x7b8] sm:$0xff]
        %v782 = vld [vmem:[#allocation2 + $0x7c0] sm:$0xff]
        %v783 = vld [vmem:[#allocation2 + $0x7c8] sm:$0xff]
        %v784 = vld [vmem:[#allocation2 + $0x7d0] sm:$0xff]
        %v785 = vld [vmem:[#allocation2 + $0x7d8] sm:$0xff]
        %v786 = vld [vmem:[#allocation2 + $0x7e0] sm:$0xff]
        %v787 = vld [vmem:[#allocation2 + $0x7e8] sm:$0xff]
        %v788 = vld [vmem:[#allocation2 + $0x7f0] sm:$0xff]
        %v789 = vld [vmem:[#allocation2 + $0x7f8] sm:$0xff]
        %v790 = vld [vmem:[%s2] sm:$0xf]
        %v792 = vcombine.high %v533, %v533
        %v794 = vunpack.c.l.s4 1966171168
        %v795 = vunpack.c.0.s8 %v794
        %v796 = vlaneseq
        %v797 = vshrl.u32 %v796, 7
        %v798 = vsub.s32 %v795, %v797
        %v799 = vrot.slane %v533, %v798
        %v801 = vunpack.c.l.s4 1966171168
        %v802 = vunpack.c.0.s8 %v801
        %v803 = vlaneseq
        %v804 = vshrl.u32 %v803, 7
        %v805 = vsub.s32 %v802, %v804
        %v806 = vrot.slane %v792, %v805
        %v807 = vcombine.high %v799, %v799
        %v808 = vcombine.high %v806, %v806
        %v810 = vunpack.c.l.s4 1966171168
        %v811 = vunpack.c.0.s8 %v810
        %v812 = vlaneseq
        %v813 = vshrl.u32 %v812, 7
        %v814 = vsub.s32 %v811, %v813
        %v815 = vrot.slane %v799, %v814
        %v817 = vunpack.c.l.s4 1966171168
        %v818 = vunpack.c.0.s8 %v817
        %v819 = vlaneseq
        %v820 = vshrl.u32 %v819, 7
        %v821 = vsub.s32 %v818, %v820
        %v822 = vrot.slane %v806, %v821
        %v824 = vunpack.c.l.s4 1966171168
        %v825 = vunpack.c.0.s8 %v824
        %v826 = vlaneseq
        %v827 = vshrl.u32 %v826, 7
        %v828 = vsub.s32 %v825, %v827
        %v829 = vrot.slane %v807, %v828
        %v831 = vunpack.c.l.s4 1966171168
        %v832 = vunpack.c.0.s8 %v831
        %v833 = vlaneseq
        %v834 = vshrl.u32 %v833, 7
        %v835 = vsub.s32 %v832, %v834
        %v836 = vrot.slane %v808, %v835
        %v837 = vcombine.high %v815, %v815
        %v838 = vcombine.high %v822, %v822
        %v839 = vcombine.high %v829, %v829
        %v840 = vcombine.high %v836, %v836
        %v1105 = vunpack.c.l.b16 %v534
        %v1106 = vunpack.c.h.b16 %v534
        %v1107 = vunpack.c.l.b16 %v535
        %v1108 = vunpack.c.h.b16 %v535
        %v1109 = vunpack.c.l.b16 %v536
        %v1110 = vunpack.c.h.b16 %v536
        %v1111 = vunpack.c.l.b16 %v537
        %v1112 = vunpack.c.h.b16 %v537
        %v1113 = vunpack.c.l.b16 %v538
        %v1114 = vunpack.c.h.b16 %v538
        %v1115 = vunpack.c.l.b16 %v539
        %v1116 = vunpack.c.h.b16 %v539
        %v1117 = vunpack.c.l.b16 %v540
        %v1118 = vunpack.c.h.b16 %v540
        %v1119 = vunpack.c.l.b16 %v541
        %v1120 = vunpack.c.h.b16 %v541
        %v1121 = vunpack.c.l.b16 %v542
        %v1122 = vunpack.c.h.b16 %v542
        %v1123 = vunpack.c.l.b16 %v543
        %v1124 = vunpack.c.h.b16 %v543
        %v1125 = vunpack.c.l.b16 %v544
        %v1126 = vunpack.c.h.b16 %v544
        %v1127 = vunpack.c.l.b16 %v545
        %v1128 = vunpack.c.h.b16 %v545
        %v1129 = vunpack.c.l.b16 %v546
        %v1130 = vunpack.c.h.b16 %v546
        %v1131 = vunpack.c.l.b16 %v547
        %v1132 = vunpack.c.h.b16 %v547
        %v1133 = vunpack.c.l.b16 %v548
        %v1134 = vunpack.c.h.b16 %v548
        %v1135 = vunpack.c.l.b16 %v549
        %v1136 = vunpack.c.h.b16 %v549
        %v1137 = vunpack.c.l.b16 %v550
        %v1138 = vunpack.c.h.b16 %v550
        %v1139 = vunpack.c.l.b16 %v551
        %v1140 = vunpack.c.h.b16 %v551
        %v1141 = vunpack.c.l.b16 %v552
        %v1142 = vunpack.c.h.b16 %v552
        %v1143 = vunpack.c.l.b16 %v553
        %v1144 = vunpack.c.h.b16 %v553
        %v1145 = vunpack.c.l.b16 %v554
        %v1146 = vunpack.c.h.b16 %v554
        %v1147 = vunpack.c.l.b16 %v555
        %v1148 = vunpack.c.h.b16 %v555
        %v1149 = vunpack.c.l.b16 %v556
        %v1150 = vunpack.c.h.b16 %v556
        %v1151 = vunpack.c.l.b16 %v557
        %v1152 = vunpack.c.h.b16 %v557
        %v1153 = vunpack.c.l.b16 %v558
        %v1154 = vunpack.c.h.b16 %v558
        %v1155 = vunpack.c.l.b16 %v559
        %v1156 = vunpack.c.h.b16 %v559
        %v1157 = vunpack.c.l.b16 %v560
        %v1158 = vunpack.c.h.b16 %v560
        %v1159 = vunpack.c.l.b16 %v561
        %v1160 = vunpack.c.h.b16 %v561
        %v1161 = vunpack.c.l.b16 %v562
        %v1162 = vunpack.c.h.b16 %v562
        %v1163 = vunpack.c.l.b16 %v563
        %v1164 = vunpack.c.h.b16 %v563
        %v1165 = vunpack.c.l.b16 %v564
        %v1166 = vunpack.c.h.b16 %v564
        %v1167 = vunpack.c.l.b16 %v565
        %v1168 = vunpack.c.h.b16 %v565
        %v1169 = vunpack.c.l.b16 %v566
        %v1170 = vunpack.c.h.b16 %v566
        %v1171 = vunpack.c.l.b16 %v567
        %v1172 = vunpack.c.h.b16 %v567
        %v1173 = vunpack.c.l.b16 %v568
        %v1174 = vunpack.c.h.b16 %v568
        %v1175 = vunpack.c.l.b16 %v569
        %v1176 = vunpack.c.h.b16 %v569
        %v1177 = vunpack.c.l.b16 %v570
        %v1178 = vunpack.c.h.b16 %v570
        %v1179 = vunpack.c.l.b16 %v571
        %v1180 = vunpack.c.h.b16 %v571
        %v1181 = vunpack.c.l.b16 %v572
        %v1182 = vunpack.c.h.b16 %v572
        %v1183 = vunpack.c.l.b16 %v573
        %v1184 = vunpack.c.h.b16 %v573
        %v1185 = vunpack.c.l.b16 %v574
        %v1186 = vunpack.c.h.b16 %v574
        %v1187 = vunpack.c.l.b16 %v575
        %v1188 = vunpack.c.h.b16 %v575
        %v1189 = vunpack.c.l.b16 %v576
        %v1190 = vunpack.c.h.b16 %v576
        %v1191 = vunpack.c.l.b16 %v577
        %v1192 = vunpack.c.h.b16 %v577
        %v1193 = vunpack.c.l.b16 %v578
        %v1194 = vunpack.c.h.b16 %v578
        %v1195 = vunpack.c.l.b16 %v579
        %v1196 = vunpack.c.h.b16 %v579
        %v1197 = vunpack.c.l.b16 %v580
        %v1198 = vunpack.c.h.b16 %v580
        %v1199 = vunpack.c.l.b16 %v581
        %v1200 = vunpack.c.h.b16 %v581
        %v1201 = vunpack.c.l.b16 %v582
        %v1202 = vunpack.c.h.b16 %v582
        %v1203 = vunpack.c.l.b16 %v583
        %v1204 = vunpack.c.h.b16 %v583
        %v1205 = vunpack.c.l.b16 %v584
        %v1206 = vunpack.c.h.b16 %v584
        %v1207 = vunpack.c.l.b16 %v585
        %v1208 = vunpack.c.h.b16 %v585
        %v1209 = vunpack.c.l.b16 %v586
        %v1210 = vunpack.c.h.b16 %v586
        %v1211 = vunpack.c.l.b16 %v587
        %v1212 = vunpack.c.h.b16 %v587
        %v1213 = vunpack.c.l.b16 %v588
        %v1214 = vunpack.c.h.b16 %v588
        %v1215 = vunpack.c.l.b16 %v589
        %v1216 = vunpack.c.h.b16 %v589
        %v1217 = vunpack.c.l.b16 %v590
        %v1218 = vunpack.c.h.b16 %v590
        %v1219 = vunpack.c.l.b16 %v591
        %v1220 = vunpack.c.h.b16 %v591
        %v1221 = vunpack.c.l.b16 %v592
        %v1222 = vunpack.c.h.b16 %v592
        %v1223 = vunpack.c.l.b16 %v593
        %v1224 = vunpack.c.h.b16 %v593
        %v1225 = vunpack.c.l.b16 %v594
        %v1226 = vunpack.c.h.b16 %v594
        %v1227 = vunpack.c.l.b16 %v595
        %v1228 = vunpack.c.h.b16 %v595
        %v1229 = vunpack.c.l.b16 %v596
        %v1230 = vunpack.c.h.b16 %v596
        %v1231 = vunpack.c.l.b16 %v597
        %v1232 = vunpack.c.h.b16 %v597
        %v1233 = vunpack.c.l.b16 %v598
        %v1234 = vunpack.c.h.b16 %v598
        %v1235 = vunpack.c.l.b16 %v599
        %v1236 = vunpack.c.h.b16 %v599
        %v1237 = vunpack.c.l.b16 %v600
        %v1238 = vunpack.c.h.b16 %v600
        %v1239 = vunpack.c.l.b16 %v601
        %v1240 = vunpack.c.h.b16 %v601
        %v1241 = vunpack.c.l.b16 %v602
        %v1242 = vunpack.c.h.b16 %v602
        %v1243 = vunpack.c.l.b16 %v603
        %v1244 = vunpack.c.h.b16 %v603
        %v1245 = vunpack.c.l.b16 %v604
        %v1246 = vunpack.c.h.b16 %v604
        %v1247 = vunpack.c.l.b16 %v605
        %v1248 = vunpack.c.h.b16 %v605
        %v1249 = vunpack.c.l.b16 %v606
        %v1250 = vunpack.c.h.b16 %v606
        %v1251 = vunpack.c.l.b16 %v607
        %v1252 = vunpack.c.h.b16 %v607
        %v1253 = vunpack.c.l.b16 %v608
        %v1254 = vunpack.c.h.b16 %v608
        %v1255 = vunpack.c.l.b16 %v609
        %v1256 = vunpack.c.h.b16 %v609
        %v1257 = vunpack.c.l.b16 %v610
        %v1258 = vunpack.c.h.b16 %v610
        %v1259 = vunpack.c.l.b16 %v611
        %v1260 = vunpack.c.h.b16 %v611
        %v1261 = vunpack.c.l.b16 %v612
        %v1262 = vunpack.c.h.b16 %v612
        %v1263 = vunpack.c.l.b16 %v613
        %v1264 = vunpack.c.h.b16 %v613
        %v1265 = vunpack.c.l.b16 %v614
        %v1266 = vunpack.c.h.b16 %v614
        %v1267 = vunpack.c.l.b16 %v615
        %v1268 = vunpack.c.h.b16 %v615
        %v1269 = vunpack.c.l.b16 %v616
        %v1270 = vunpack.c.h.b16 %v616
        %v1271 = vunpack.c.l.b16 %v617
        %v1272 = vunpack.c.h.b16 %v617
        %v1273 = vunpack.c.l.b16 %v618
        %v1274 = vunpack.c.h.b16 %v618
        %v1275 = vunpack.c.l.b16 %v619
        %v1276 = vunpack.c.h.b16 %v619
        %v1277 = vunpack.c.l.b16 %v620
        %v1278 = vunpack.c.h.b16 %v620
        %v1279 = vunpack.c.l.b16 %v621
        %v1280 = vunpack.c.h.b16 %v621
        %v1281 = vunpack.c.l.b16 %v622
        %v1282 = vunpack.c.h.b16 %v622
        %v1283 = vunpack.c.l.b16 %v623
        %v1284 = vunpack.c.h.b16 %v623
        %v1285 = vunpack.c.l.b16 %v624
        %v1286 = vunpack.c.h.b16 %v624
        %v1287 = vunpack.c.l.b16 %v625
        %v1288 = vunpack.c.h.b16 %v625
        %v1289 = vunpack.c.l.b16 %v626
        %v1290 = vunpack.c.h.b16 %v626
        %v1291 = vunpack.c.l.b16 %v627
        %v1292 = vunpack.c.h.b16 %v627
        %v1293 = vunpack.c.l.b16 %v628
        %v1294 = vunpack.c.h.b16 %v628
        %v1295 = vunpack.c.l.b16 %v629
        %v1296 = vunpack.c.h.b16 %v629
        %v1297 = vunpack.c.l.b16 %v630
        %v1298 = vunpack.c.h.b16 %v630
        %v1299 = vunpack.c.l.b16 %v631
        %v1300 = vunpack.c.h.b16 %v631
        %v1301 = vunpack.c.l.b16 %v632
        %v1302 = vunpack.c.h.b16 %v632
        %v1303 = vunpack.c.l.b16 %v633
        %v1304 = vunpack.c.h.b16 %v633
        %v1305 = vunpack.c.l.b16 %v634
        %v1306 = vunpack.c.h.b16 %v634
        %v1307 = vunpack.c.l.b16 %v635
        %v1308 = vunpack.c.h.b16 %v635
        %v1309 = vunpack.c.l.b16 %v636
        %v1310 = vunpack.c.h.b16 %v636
        %v1311 = vunpack.c.l.b16 %v637
        %v1312 = vunpack.c.h.b16 %v637
        %v1313 = vunpack.c.l.b16 %v638
        %v1314 = vunpack.c.h.b16 %v638
        %v1315 = vunpack.c.l.b16 %v639
        %v1316 = vunpack.c.h.b16 %v639
        %v1317 = vunpack.c.l.b16 %v640
        %v1318 = vunpack.c.h.b16 %v640
        %v1319 = vunpack.c.l.b16 %v641
        %v1320 = vunpack.c.h.b16 %v641
        %v1321 = vunpack.c.l.b16 %v642
        %v1322 = vunpack.c.h.b16 %v642
        %v1323 = vunpack.c.l.b16 %v643
        %v1324 = vunpack.c.h.b16 %v643
        %v1325 = vunpack.c.l.b16 %v644
        %v1326 = vunpack.c.h.b16 %v644
        %v1327 = vunpack.c.l.b16 %v645
        %v1328 = vunpack.c.h.b16 %v645
        %v1329 = vunpack.c.l.b16 %v646
        %v1330 = vunpack.c.h.b16 %v646
        %v1331 = vunpack.c.l.b16 %v647
        %v1332 = vunpack.c.h.b16 %v647
        %v1333 = vunpack.c.l.b16 %v648
        %v1334 = vunpack.c.h.b16 %v648
        %v1335 = vunpack.c.l.b16 %v649
        %v1336 = vunpack.c.h.b16 %v649
        %v1337 = vunpack.c.l.b16 %v650
        %v1338 = vunpack.c.h.b16 %v650
        %v1339 = vunpack.c.l.b16 %v651
        %v1340 = vunpack.c.h.b16 %v651
        %v1341 = vunpack.c.l.b16 %v652
        %v1342 = vunpack.c.h.b16 %v652
        %v1343 = vunpack.c.l.b16 %v653
        %v1344 = vunpack.c.h.b16 %v653
        %v1345 = vunpack.c.l.b16 %v654
        %v1346 = vunpack.c.h.b16 %v654
        %v1347 = vunpack.c.l.b16 %v655
        %v1348 = vunpack.c.h.b16 %v655
        %v1349 = vunpack.c.l.b16 %v656
        %v1350 = vunpack.c.h.b16 %v656
        %v1351 = vunpack.c.l.b16 %v657
        %v1352 = vunpack.c.h.b16 %v657
        %v1353 = vunpack.c.l.b16 %v658
        %v1354 = vunpack.c.h.b16 %v658
        %v1355 = vunpack.c.l.b16 %v659
        %v1356 = vunpack.c.h.b16 %v659
        %v1357 = vunpack.c.l.b16 %v660
        %v1358 = vunpack.c.h.b16 %v660
        %v1359 = vunpack.c.l.b16 %v661
        %v1360 = vunpack.c.h.b16 %v661
        %v1361 = vunpack.c.l.b16 %v662
        %v1362 = vunpack.c.h.b16 %v662
        %v1363 = vunpack.c.l.b16 %v663
        %v1364 = vunpack.c.h.b16 %v663
        %v1365 = vunpack.c.l.b16 %v664
        %v1366 = vunpack.c.h.b16 %v664
        %v1367 = vunpack.c.l.b16 %v665
        %v1368 = vunpack.c.h.b16 %v665
        %v1369 = vunpack.c.l.b16 %v666
        %v1370 = vunpack.c.h.b16 %v666
        %v1371 = vunpack.c.l.b16 %v667
        %v1372 = vunpack.c.h.b16 %v667
        %v1373 = vunpack.c.l.b16 %v668
        %v1374 = vunpack.c.h.b16 %v668
        %v1375 = vunpack.c.l.b16 %v669
        %v1376 = vunpack.c.h.b16 %v669
        %v1377 = vunpack.c.l.b16 %v670
        %v1378 = vunpack.c.h.b16 %v670
        %v1379 = vunpack.c.l.b16 %v671
        %v1380 = vunpack.c.h.b16 %v671
        %v1381 = vunpack.c.l.b16 %v672
        %v1382 = vunpack.c.h.b16 %v672
        %v1383 = vunpack.c.l.b16 %v673
        %v1384 = vunpack.c.h.b16 %v673
        %v1385 = vunpack.c.l.b16 %v674
        %v1386 = vunpack.c.h.b16 %v674
        %v1387 = vunpack.c.l.b16 %v675
        %v1388 = vunpack.c.h.b16 %v675
        %v1389 = vunpack.c.l.b16 %v676
        %v1390 = vunpack.c.h.b16 %v676
        %v1391 = vunpack.c.l.b16 %v677
        %v1392 = vunpack.c.h.b16 %v677
        %v1393 = vunpack.c.l.b16 %v678
        %v1394 = vunpack.c.h.b16 %v678
        %v1395 = vunpack.c.l.b16 %v679
        %v1396 = vunpack.c.h.b16 %v679
        %v1397 = vunpack.c.l.b16 %v680
        %v1398 = vunpack.c.h.b16 %v680
        %v1399 = vunpack.c.l.b16 %v681
        %v1400 = vunpack.c.h.b16 %v681
        %v1401 = vunpack.c.l.b16 %v682
        %v1402 = vunpack.c.h.b16 %v682
        %v1403 = vunpack.c.l.b16 %v683
        %v1404 = vunpack.c.h.b16 %v683
        %v1405 = vunpack.c.l.b16 %v684
        %v1406 = vunpack.c.h.b16 %v684
        %v1407 = vunpack.c.l.b16 %v685
        %v1408 = vunpack.c.h.b16 %v685
        %v1409 = vunpack.c.l.b16 %v686
        %v1410 = vunpack.c.h.b16 %v686
        %v1411 = vunpack.c.l.b16 %v687
        %v1412 = vunpack.c.h.b16 %v687
        %v1413 = vunpack.c.l.b16 %v688
        %v1414 = vunpack.c.h.b16 %v688
        %v1415 = vunpack.c.l.b16 %v689
        %v1416 = vunpack.c.h.b16 %v689
        %v1417 = vunpack.c.l.b16 %v690
        %v1418 = vunpack.c.h.b16 %v690
        %v1419 = vunpack.c.l.b16 %v691
        %v1420 = vunpack.c.h.b16 %v691
        %v1421 = vunpack.c.l.b16 %v692
        %v1422 = vunpack.c.h.b16 %v692
        %v1423 = vunpack.c.l.b16 %v693
        %v1424 = vunpack.c.h.b16 %v693
        %v1425 = vunpack.c.l.b16 %v694
        %v1426 = vunpack.c.h.b16 %v694
        %v1427 = vunpack.c.l.b16 %v695
        %v1428 = vunpack.c.h.b16 %v695
        %v1429 = vunpack.c.l.b16 %v696
        %v1430 = vunpack.c.h.b16 %v696
        %v1431 = vunpack.c.l.b16 %v697
        %v1432 = vunpack.c.h.b16 %v697
        %v1433 = vunpack.c.l.b16 %v698
        %v1434 = vunpack.c.h.b16 %v698
        %v1435 = vunpack.c.l.b16 %v699
        %v1436 = vunpack.c.h.b16 %v699
        %v1437 = vunpack.c.l.b16 %v700
        %v1438 = vunpack.c.h.b16 %v700
        %v1439 = vunpack.c.l.b16 %v701
        %v1440 = vunpack.c.h.b16 %v701
        %v1441 = vunpack.c.l.b16 %v702
        %v1442 = vunpack.c.h.b16 %v702
        %v1443 = vunpack.c.l.b16 %v703
        %v1444 = vunpack.c.h.b16 %v703
        %v1445 = vunpack.c.l.b16 %v704
        %v1446 = vunpack.c.h.b16 %v704
        %v1447 = vunpack.c.l.b16 %v705
        %v1448 = vunpack.c.h.b16 %v705
        %v1449 = vunpack.c.l.b16 %v706
        %v1450 = vunpack.c.h.b16 %v706
        %v1451 = vunpack.c.l.b16 %v707
        %v1452 = vunpack.c.h.b16 %v707
        %v1453 = vunpack.c.l.b16 %v708
        %v1454 = vunpack.c.h.b16 %v708
        %v1455 = vunpack.c.l.b16 %v709
        %v1456 = vunpack.c.h.b16 %v709
        %v1457 = vunpack.c.l.b16 %v710
        %v1458 = vunpack.c.h.b16 %v710
        %v1459 = vunpack.c.l.b16 %v711
        %v1460 = vunpack.c.h.b16 %v711
        %v1461 = vunpack.c.l.b16 %v712
        %v1462 = vunpack.c.h.b16 %v712
        %v1463 = vunpack.c.l.b16 %v713
        %v1464 = vunpack.c.h.b16 %v713
        %v1465 = vunpack.c.l.b16 %v714
        %v1466 = vunpack.c.h.b16 %v714
        %v1467 = vunpack.c.l.b16 %v715
        %v1468 = vunpack.c.h.b16 %v715
        %v1469 = vunpack.c.l.b16 %v716
        %v1470 = vunpack.c.h.b16 %v716
        %v1471 = vunpack.c.l.b16 %v717
        %v1472 = vunpack.c.h.b16 %v717
        %v1473 = vunpack.c.l.b16 %v718
        %v1474 = vunpack.c.h.b16 %v718
        %v1475 = vunpack.c.l.b16 %v719
        %v1476 = vunpack.c.h.b16 %v719
        %v1477 = vunpack.c.l.b16 %v720
        %v1478 = vunpack.c.h.b16 %v720
        %v1479 = vunpack.c.l.b16 %v721
        %v1480 = vunpack.c.h.b16 %v721
        %v1481 = vunpack.c.l.b16 %v722
        %v1482 = vunpack.c.h.b16 %v722
        %v1483 = vunpack.c.l.b16 %v723
        %v1484 = vunpack.c.h.b16 %v723
        %v1485 = vunpack.c.l.b16 %v724
        %v1486 = vunpack.c.h.b16 %v724
        %v1487 = vunpack.c.l.b16 %v725
        %v1488 = vunpack.c.h.b16 %v725
        %v1489 = vunpack.c.l.b16 %v726
        %v1490 = vunpack.c.h.b16 %v726
        %v1491 = vunpack.c.l.b16 %v727
        %v1492 = vunpack.c.h.b16 %v727
        %v1493 = vunpack.c.l.b16 %v728
        %v1494 = vunpack.c.h.b16 %v728
        %v1495 = vunpack.c.l.b16 %v729
        %v1496 = vunpack.c.h.b16 %v729
        %v1497 = vunpack.c.l.b16 %v730
        %v1498 = vunpack.c.h.b16 %v730
        %v1499 = vunpack.c.l.b16 %v731
        %v1500 = vunpack.c.h.b16 %v731
        %v1501 = vunpack.c.l.b16 %v732
        %v1502 = vunpack.c.h.b16 %v732
        %v1503 = vunpack.c.l.b16 %v733
        %v1504 = vunpack.c.h.b16 %v733
        %v1505 = vunpack.c.l.b16 %v734
        %v1506 = vunpack.c.h.b16 %v734
        %v1507 = vunpack.c.l.b16 %v735
        %v1508 = vunpack.c.h.b16 %v735
        %v1509 = vunpack.c.l.b16 %v736
        %v1510 = vunpack.c.h.b16 %v736
        %v1511 = vunpack.c.l.b16 %v737
        %v1512 = vunpack.c.h.b16 %v737
        %v1513 = vunpack.c.l.b16 %v738
        %v1514 = vunpack.c.h.b16 %v738
        %v1515 = vunpack.c.l.b16 %v739
        %v1516 = vunpack.c.h.b16 %v739
        %v1517 = vunpack.c.l.b16 %v740
        %v1518 = vunpack.c.h.b16 %v740
        %v1519 = vunpack.c.l.b16 %v741
        %v1520 = vunpack.c.h.b16 %v741
        %v1521 = vunpack.c.l.b16 %v742
        %v1522 = vunpack.c.h.b16 %v742
        %v1523 = vunpack.c.l.b16 %v743
        %v1524 = vunpack.c.h.b16 %v743
        %v1525 = vunpack.c.l.b16 %v744
        %v1526 = vunpack.c.h.b16 %v744
        %v1527 = vunpack.c.l.b16 %v745
        %v1528 = vunpack.c.h.b16 %v745
        %v1529 = vunpack.c.l.b16 %v746
        %v1530 = vunpack.c.h.b16 %v746
        %v1531 = vunpack.c.l.b16 %v747
        %v1532 = vunpack.c.h.b16 %v747
        %v1533 = vunpack.c.l.b16 %v748
        %v1534 = vunpack.c.h.b16 %v748
        %v1535 = vunpack.c.l.b16 %v749
        %v1536 = vunpack.c.h.b16 %v749
        %v1537 = vunpack.c.l.b16 %v750
        %v1538 = vunpack.c.h.b16 %v750
        %v1539 = vunpack.c.l.b16 %v751
        %v1540 = vunpack.c.h.b16 %v751
        %v1541 = vunpack.c.l.b16 %v752
        %v1542 = vunpack.c.h.b16 %v752
        %v1543 = vunpack.c.l.b16 %v753
        %v1544 = vunpack.c.h.b16 %v753
        %v1545 = vunpack.c.l.b16 %v754
        %v1546 = vunpack.c.h.b16 %v754
        %v1547 = vunpack.c.l.b16 %v755
        %v1548 = vunpack.c.h.b16 %v755
        %v1549 = vunpack.c.l.b16 %v756
        %v1550 = vunpack.c.h.b16 %v756
        %v1551 = vunpack.c.l.b16 %v757
        %v1552 = vunpack.c.h.b16 %v757
        %v1553 = vunpack.c.l.b16 %v758
        %v1554 = vunpack.c.h.b16 %v758
        %v1555 = vunpack.c.l.b16 %v759
        %v1556 = vunpack.c.h.b16 %v759
        %v1557 = vunpack.c.l.b16 %v760
        %v1558 = vunpack.c.h.b16 %v760
        %v1559 = vunpack.c.l.b16 %v761
        %v1560 = vunpack.c.h.b16 %v761
        %v1561 = vunpack.c.l.b16 %v762
        %v1562 = vunpack.c.h.b16 %v762
        %v1563 = vunpack.c.l.b16 %v763
        %v1564 = vunpack.c.h.b16 %v763
        %v1565 = vunpack.c.l.b16 %v764
        %v1566 = vunpack.c.h.b16 %v764
        %v1567 = vunpack.c.l.b16 %v765
        %v1568 = vunpack.c.h.b16 %v765
        %v1569 = vunpack.c.l.b16 %v766
        %v1570 = vunpack.c.h.b16 %v766
        %v1571 = vunpack.c.l.b16 %v767
        %v1572 = vunpack.c.h.b16 %v767
        %v1573 = vunpack.c.l.b16 %v768
        %v1574 = vunpack.c.h.b16 %v768
        %v1575 = vunpack.c.l.b16 %v769
        %v1576 = vunpack.c.h.b16 %v769
        %v1577 = vunpack.c.l.b16 %v770
        %v1578 = vunpack.c.h.b16 %v770
        %v1579 = vunpack.c.l.b16 %v771
        %v1580 = vunpack.c.h.b16 %v771
        %v1581 = vunpack.c.l.b16 %v772
        %v1582 = vunpack.c.h.b16 %v772
        %v1583 = vunpack.c.l.b16 %v773
        %v1584 = vunpack.c.h.b16 %v773
        %v1585 = vunpack.c.l.b16 %v774
        %v1586 = vunpack.c.h.b16 %v774
        %v1587 = vunpack.c.l.b16 %v775
        %v1588 = vunpack.c.h.b16 %v775
        %v1589 = vunpack.c.l.b16 %v776
        %v1590 = vunpack.c.h.b16 %v776
        %v1591 = vunpack.c.l.b16 %v777
        %v1592 = vunpack.c.h.b16 %v777
        %v1593 = vunpack.c.l.b16 %v778
        %v1594 = vunpack.c.h.b16 %v778
        %v1595 = vunpack.c.l.b16 %v779
        %v1596 = vunpack.c.h.b16 %v779
        %v1597 = vunpack.c.l.b16 %v780
        %v1598 = vunpack.c.h.b16 %v780
        %v1599 = vunpack.c.l.b16 %v781
        %v1600 = vunpack.c.h.b16 %v781
        %v1601 = vunpack.c.l.b16 %v782
        %v1602 = vunpack.c.h.b16 %v782
        %v1603 = vunpack.c.l.b16 %v783
        %v1604 = vunpack.c.h.b16 %v783
        %v1605 = vunpack.c.l.b16 %v784
        %v1606 = vunpack.c.h.b16 %v784
        %v1607 = vunpack.c.l.b16 %v785
        %v1608 = vunpack.c.h.b16 %v785
        %v1609 = vunpack.c.l.b16 %v786
        %v1610 = vunpack.c.h.b16 %v786
        %v1611 = vunpack.c.l.b16 %v787
        %v1612 = vunpack.c.h.b16 %v787
        %v1613 = vunpack.c.l.b16 %v788
        %v1614 = vunpack.c.h.b16 %v788
        %v1615 = vunpack.c.l.b16 %v789
        %v1616 = vunpack.c.h.b16 %v789
        %v1617 = vpack.c.b16 %v1109, %v1105
        %v1618 = vpack.c.b16 %v1110, %v1106
        %v1619 = vpack.c.b16 %v1111, %v1107
        %v1620 = vpack.c.b16 %v1112, %v1108
        %v1621 = vpack.c.b16 %v1117, %v1113
        %v1622 = vpack.c.b16 %v1118, %v1114
        %v1623 = vpack.c.b16 %v1119, %v1115
        %v1624 = vpack.c.b16 %v1120, %v1116
        %v1625 = vpack.c.b16 %v1125, %v1121
        %v1626 = vpack.c.b16 %v1126, %v1122
        %v1627 = vpack.c.b16 %v1127, %v1123
        %v1628 = vpack.c.b16 %v1128, %v1124
        %v1629 = vpack.c.b16 %v1133, %v1129
        %v1630 = vpack.c.b16 %v1134, %v1130
        %v1631 = vpack.c.b16 %v1135, %v1131
        %v1632 = vpack.c.b16 %v1136, %v1132
        %v1633 = vpack.c.b16 %v1141, %v1137
        %v1634 = vpack.c.b16 %v1142, %v1138
        %v1635 = vpack.c.b16 %v1143, %v1139
        %v1636 = vpack.c.b16 %v1144, %v1140
        %v1637 = vpack.c.b16 %v1149, %v1145
        %v1638 = vpack.c.b16 %v1150, %v1146
        %v1639 = vpack.c.b16 %v1151, %v1147
        %v1640 = vpack.c.b16 %v1152, %v1148
        %v1641 = vpack.c.b16 %v1157, %v1153
        %v1642 = vpack.c.b16 %v1158, %v1154
        %v1643 = vpack.c.b16 %v1159, %v1155
        %v1644 = vpack.c.b16 %v1160, %v1156
        %v1645 = vpack.c.b16 %v1165, %v1161
        %v1646 = vpack.c.b16 %v1166, %v1162
        %v1647 = vpack.c.b16 %v1167, %v1163
        %v1648 = vpack.c.b16 %v1168, %v1164
        %v1649 = vpack.c.b16 %v1173, %v1169
        %v1650 = vpack.c.b16 %v1174, %v1170
        %v1651 = vpack.c.b16 %v1175, %v1171
        %v1652 = vpack.c.b16 %v1176, %v1172
        %v1653 = vpack.c.b16 %v1181, %v1177
        %v1654 = vpack.c.b16 %v1182, %v1178
        %v1655 = vpack.c.b16 %v1183, %v1179
        %v1656 = vpack.c.b16 %v1184, %v1180
        %v1657 = vpack.c.b16 %v1189, %v1185
        %v1658 = vpack.c.b16 %v1190, %v1186
        %v1659 = vpack.c.b16 %v1191, %v1187
        %v1660 = vpack.c.b16 %v1192, %v1188
        %v1661 = vpack.c.b16 %v1197, %v1193
        %v1662 = vpack.c.b16 %v1198, %v1194
        %v1663 = vpack.c.b16 %v1199, %v1195
        %v1664 = vpack.c.b16 %v1200, %v1196
        %v1665 = vpack.c.b16 %v1205, %v1201
        %v1666 = vpack.c.b16 %v1206, %v1202
        %v1667 = vpack.c.b16 %v1207, %v1203
        %v1668 = vpack.c.b16 %v1208, %v1204
        %v1669 = vpack.c.b16 %v1213, %v1209
        %v1670 = vpack.c.b16 %v1214, %v1210
        %v1671 = vpack.c.b16 %v1215, %v1211
        %v1672 = vpack.c.b16 %v1216, %v1212
        %v1673 = vpack.c.b16 %v1221, %v1217
        %v1674 = vpack.c.b16 %v1222, %v1218
        %v1675 = vpack.c.b16 %v1223, %v1219
        %v1676 = vpack.c.b16 %v1224, %v1220
        %v1677 = vpack.c.b16 %v1229, %v1225
        %v1678 = vpack.c.b16 %v1230, %v1226
        %v1679 = vpack.c.b16 %v1231, %v1227
        %v1680 = vpack.c.b16 %v1232, %v1228
        %v1681 = vpack.c.b16 %v1237, %v1233
        %v1682 = vpack.c.b16 %v1238, %v1234
        %v1683 = vpack.c.b16 %v1239, %v1235
        %v1684 = vpack.c.b16 %v1240, %v1236
        %v1685 = vpack.c.b16 %v1245, %v1241
        %v1686 = vpack.c.b16 %v1246, %v1242
        %v1687 = vpack.c.b16 %v1247, %v1243
        %v1688 = vpack.c.b16 %v1248, %v1244
        %v1689 = vpack.c.b16 %v1253, %v1249
        %v1690 = vpack.c.b16 %v1254, %v1250
        %v1691 = vpack.c.b16 %v1255, %v1251
        %v1692 = vpack.c.b16 %v1256, %v1252
        %v1693 = vpack.c.b16 %v1261, %v1257
        %v1694 = vpack.c.b16 %v1262, %v1258
        %v1695 = vpack.c.b16 %v1263, %v1259
        %v1696 = vpack.c.b16 %v1264, %v1260
        %v1697 = vpack.c.b16 %v1269, %v1265
        %v1698 = vpack.c.b16 %v1270, %v1266
        %v1699 = vpack.c.b16 %v1271, %v1267
        %v1700 = vpack.c.b16 %v1272, %v1268
        %v1701 = vpack.c.b16 %v1277, %v1273
        %v1702 = vpack.c.b16 %v1278, %v1274
        %v1703 = vpack.c.b16 %v1279, %v1275
        %v1704 = vpack.c.b16 %v1280, %v1276
        %v1705 = vpack.c.b16 %v1285, %v1281
        %v1706 = vpack.c.b16 %v1286, %v1282
        %v1707 = vpack.c.b16 %v1287, %v1283
        %v1708 = vpack.c.b16 %v1288, %v1284
        %v1709 = vpack.c.b16 %v1293, %v1289
        %v1710 = vpack.c.b16 %v1294, %v1290
        %v1711 = vpack.c.b16 %v1295, %v1291
        %v1712 = vpack.c.b16 %v1296, %v1292
        %v1713 = vpack.c.b16 %v1301, %v1297
        %v1714 = vpack.c.b16 %v1302, %v1298
        %v1715 = vpack.c.b16 %v1303, %v1299
        %v1716 = vpack.c.b16 %v1304, %v1300
        %v1717 = vpack.c.b16 %v1309, %v1305
        %v1718 = vpack.c.b16 %v1310, %v1306
        %v1719 = vpack.c.b16 %v1311, %v1307
        %v1720 = vpack.c.b16 %v1312, %v1308
        %v1721 = vpack.c.b16 %v1317, %v1313
        %v1722 = vpack.c.b16 %v1318, %v1314
        %v1723 = vpack.c.b16 %v1319, %v1315
        %v1724 = vpack.c.b16 %v1320, %v1316
        %v1725 = vpack.c.b16 %v1325, %v1321
        %v1726 = vpack.c.b16 %v1326, %v1322
        %v1727 = vpack.c.b16 %v1327, %v1323
        %v1728 = vpack.c.b16 %v1328, %v1324
        %v1729 = vpack.c.b16 %v1333, %v1329
        %v1730 = vpack.c.b16 %v1334, %v1330
        %v1731 = vpack.c.b16 %v1335, %v1331
        %v1732 = vpack.c.b16 %v1336, %v1332
        %v1733 = vpack.c.b16 %v1341, %v1337
        %v1734 = vpack.c.b16 %v1342, %v1338
        %v1735 = vpack.c.b16 %v1343, %v1339
        %v1736 = vpack.c.b16 %v1344, %v1340
        %v1737 = vpack.c.b16 %v1349, %v1345
        %v1738 = vpack.c.b16 %v1350, %v1346
        %v1739 = vpack.c.b16 %v1351, %v1347
        %v1740 = vpack.c.b16 %v1352, %v1348
        %v1741 = vpack.c.b16 %v1357, %v1353
        %v1742 = vpack.c.b16 %v1358, %v1354
        %v1743 = vpack.c.b16 %v1359, %v1355
        %v1744 = vpack.c.b16 %v1360, %v1356
        %v1745 = vpack.c.b16 %v1365, %v1361
        %v1746 = vpack.c.b16 %v1366, %v1362
        %v1747 = vpack.c.b16 %v1367, %v1363
        %v1748 = vpack.c.b16 %v1368, %v1364
        %v1749 = vpack.c.b16 %v1373, %v1369
        %v1750 = vpack.c.b16 %v1374, %v1370
        %v1751 = vpack.c.b16 %v1375, %v1371
        %v1752 = vpack.c.b16 %v1376, %v1372
        %v1753 = vpack.c.b16 %v1381, %v1377
        %v1754 = vpack.c.b16 %v1382, %v1378
        %v1755 = vpack.c.b16 %v1383, %v1379
        %v1756 = vpack.c.b16 %v1384, %v1380
        %v1757 = vpack.c.b16 %v1389, %v1385
        %v1758 = vpack.c.b16 %v1390, %v1386
        %v1759 = vpack.c.b16 %v1391, %v1387
        %v1760 = vpack.c.b16 %v1392, %v1388
        %v1761 = vpack.c.b16 %v1397, %v1393
        %v1762 = vpack.c.b16 %v1398, %v1394
        %v1763 = vpack.c.b16 %v1399, %v1395
        %v1764 = vpack.c.b16 %v1400, %v1396
        %v1765 = vpack.c.b16 %v1405, %v1401
        %v1766 = vpack.c.b16 %v1406, %v1402
        %v1767 = vpack.c.b16 %v1407, %v1403
        %v1768 = vpack.c.b16 %v1408, %v1404
        %v1769 = vpack.c.b16 %v1413, %v1409
        %v1770 = vpack.c.b16 %v1414, %v1410
        %v1771 = vpack.c.b16 %v1415, %v1411
        %v1772 = vpack.c.b16 %v1416, %v1412
        %v1773 = vpack.c.b16 %v1421, %v1417
        %v1774 = vpack.c.b16 %v1422, %v1418
        %v1775 = vpack.c.b16 %v1423, %v1419
        %v1776 = vpack.c.b16 %v1424, %v1420
        %v1777 = vpack.c.b16 %v1429, %v1425
        %v1778 = vpack.c.b16 %v1430, %v1426
        %v1779 = vpack.c.b16 %v1431, %v1427
        %v1780 = vpack.c.b16 %v1432, %v1428
        %v1781 = vpack.c.b16 %v1437, %v1433
        %v1782 = vpack.c.b16 %v1438, %v1434
        %v1783 = vpack.c.b16 %v1439, %v1435
        %v1784 = vpack.c.b16 %v1440, %v1436
        %v1785 = vpack.c.b16 %v1445, %v1441
        %v1786 = vpack.c.b16 %v1446, %v1442
        %v1787 = vpack.c.b16 %v1447, %v1443
        %v1788 = vpack.c.b16 %v1448, %v1444
        %v1789 = vpack.c.b16 %v1453, %v1449
        %v1790 = vpack.c.b16 %v1454, %v1450
        %v1791 = vpack.c.b16 %v1455, %v1451
        %v1792 = vpack.c.b16 %v1456, %v1452
        %v1793 = vpack.c.b16 %v1461, %v1457
        %v1794 = vpack.c.b16 %v1462, %v1458
        %v1795 = vpack.c.b16 %v1463, %v1459
        %v1796 = vpack.c.b16 %v1464, %v1460
        %v1797 = vpack.c.b16 %v1469, %v1465
        %v1798 = vpack.c.b16 %v1470, %v1466
        %v1799 = vpack.c.b16 %v1471, %v1467
        %v1800 = vpack.c.b16 %v1472, %v1468
        %v1801 = vpack.c.b16 %v1477, %v1473
        %v1802 = vpack.c.b16 %v1478, %v1474
        %v1803 = vpack.c.b16 %v1479, %v1475
        %v1804 = vpack.c.b16 %v1480, %v1476
        %v1805 = vpack.c.b16 %v1485, %v1481
        %v1806 = vpack.c.b16 %v1486, %v1482
        %v1807 = vpack.c.b16 %v1487, %v1483
        %v1808 = vpack.c.b16 %v1488, %v1484
        %v1809 = vpack.c.b16 %v1493, %v1489
        %v1810 = vpack.c.b16 %v1494, %v1490
        %v1811 = vpack.c.b16 %v1495, %v1491
        %v1812 = vpack.c.b16 %v1496, %v1492
        %v1813 = vpack.c.b16 %v1501, %v1497
        %v1814 = vpack.c.b16 %v1502, %v1498
        %v1815 = vpack.c.b16 %v1503, %v1499
        %v1816 = vpack.c.b16 %v1504, %v1500
        %v1817 = vpack.c.b16 %v1509, %v1505
        %v1818 = vpack.c.b16 %v1510, %v1506
        %v1819 = vpack.c.b16 %v1511, %v1507
        %v1820 = vpack.c.b16 %v1512, %v1508
        %v1821 = vpack.c.b16 %v1517, %v1513
        %v1822 = vpack.c.b16 %v1518, %v1514
        %v1823 = vpack.c.b16 %v1519, %v1515
        %v1824 = vpack.c.b16 %v1520, %v1516
        %v1825 = vpack.c.b16 %v1525, %v1521
        %v1826 = vpack.c.b16 %v1526, %v1522
        %v1827 = vpack.c.b16 %v1527, %v1523
        %v1828 = vpack.c.b16 %v1528, %v1524
        %v1829 = vpack.c.b16 %v1533, %v1529
        %v1830 = vpack.c.b16 %v1534, %v1530
        %v1831 = vpack.c.b16 %v1535, %v1531
        %v1832 = vpack.c.b16 %v1536, %v1532
        %v1833 = vpack.c.b16 %v1541, %v1537
        %v1834 = vpack.c.b16 %v1542, %v1538
        %v1835 = vpack.c.b16 %v1543, %v1539
        %v1836 = vpack.c.b16 %v1544, %v1540
        %v1837 = vpack.c.b16 %v1549, %v1545
        %v1838 = vpack.c.b16 %v1550, %v1546
        %v1839 = vpack.c.b16 %v1551, %v1547
        %v1840 = vpack.c.b16 %v1552, %v1548
        %v1841 = vpack.c.b16 %v1557, %v1553
        %v1842 = vpack.c.b16 %v1558, %v1554
        %v1843 = vpack.c.b16 %v1559, %v1555
        %v1844 = vpack.c.b16 %v1560, %v1556
        %v1845 = vpack.c.b16 %v1565, %v1561
        %v1846 = vpack.c.b16 %v1566, %v1562
        %v1847 = vpack.c.b16 %v1567, %v1563
        %v1848 = vpack.c.b16 %v1568, %v1564
        %v1849 = vpack.c.b16 %v1573, %v1569
        %v1850 = vpack.c.b16 %v1574, %v1570
        %v1851 = vpack.c.b16 %v1575, %v1571
        %v1852 = vpack.c.b16 %v1576, %v1572
        %v1853 = vpack.c.b16 %v1581, %v1577
        %v1854 = vpack.c.b16 %v1582, %v1578
        %v1855 = vpack.c.b16 %v1583, %v1579
        %v1856 = vpack.c.b16 %v1584, %v1580
        %v1857 = vpack.c.b16 %v1589, %v1585
        %v1858 = vpack.c.b16 %v1590, %v1586
        %v1859 = vpack.c.b16 %v1591, %v1587
        %v1860 = vpack.c.b16 %v1592, %v1588
        %v1861 = vpack.c.b16 %v1597, %v1593
        %v1862 = vpack.c.b16 %v1598, %v1594
        %v1863 = vpack.c.b16 %v1599, %v1595
        %v1864 = vpack.c.b16 %v1600, %v1596
        %v1865 = vpack.c.b16 %v1605, %v1601
        %v1866 = vpack.c.b16 %v1606, %v1602
        %v1867 = vpack.c.b16 %v1607, %v1603
        %v1868 = vpack.c.b16 %v1608, %v1604
        %v1869 = vpack.c.b16 %v1613, %v1609
        %v1870 = vpack.c.b16 %v1614, %v1610
        %v1871 = vpack.c.b16 %v1615, %v1611
        %v1872 = vpack.c.b16 %v1616, %v1612
        %v2130 = vlaneseq
        %v2131 = vshrl.u32 %v2130, 7
        %v2132 = vsub.s32 0, %v2131
        %v2133 = vrot.slane %v790, %v2132
        %v2134 = vlaneseq
        %v2135 = vshrl.u32 %v2134, 7
        %v2136 = vsub.s32 1, %v2135
        %v2137 = vrot.slane %v790, %v2136
        %v2138 = vlaneseq
        %v2139 = vshrl.u32 %v2138, 7
        %v2140 = vsub.s32 2, %v2139
        %v2141 = vrot.slane %v790, %v2140
        %v2142 = vlaneseq
        %v2143 = vshrl.u32 %v2142, 7
        %v2144 = vsub.s32 3, %v2143
        %v2145 = vrot.slane %v790, %v2144
        %2150 = vmatprep.subr.bf16.mxu0 %v1618
        %2151 = vmatpush1.bf16.msra.mxu0 %v1617
        %2152 = vmatprep.subr.bf16.mxu0 %v1622
        %2153 = vmatpush1.bf16.msra.mxu0 %v1621
        %2154 = vmatprep.subr.bf16.mxu0 %v1626
        %2155 = vmatpush1.bf16.msra.mxu0 %v1625
        %2156 = vmatprep.subr.bf16.mxu0 %v1630
        %2157 = vmatpush1.bf16.msra.mxu0 %v1629
        %2158 = vmatprep.subr.bf16.mxu0 %v1634
        %2159 = vmatpush1.bf16.msra.mxu0 %v1633
        %2160 = vmatprep.subr.bf16.mxu0 %v1638
        %2161 = vmatpush1.bf16.msra.mxu0 %v1637
        %2162 = vmatprep.subr.bf16.mxu0 %v1642
        %2163 = vmatpush1.bf16.msra.mxu0 %v1641
        %2164 = vmatprep.subr.bf16.mxu0 %v1646
        %2165 = vmatpush1.bf16.msra.mxu0 %v1645
        %2166 = vmatprep.subr.bf16.mxu0 %v1650
        %2167 = vmatpush1.bf16.msra.mxu0 %v1649
        %2168 = vmatprep.subr.bf16.mxu0 %v1654
        %2169 = vmatpush1.bf16.msra.mxu0 %v1653
        %2170 = vmatprep.subr.bf16.mxu0 %v1658
        %2171 = vmatpush1.bf16.msra.mxu0 %v1657
        %2172 = vmatprep.subr.bf16.mxu0 %v1662
        %2173 = vmatpush1.bf16.msra.mxu0 %v1661
        %2174 = vmatprep.subr.bf16.mxu0 %v1666
        %2175 = vmatpush1.bf16.msra.mxu0 %v1665
        %2176 = vmatprep.subr.bf16.mxu0 %v1670
        %2177 = vmatpush1.bf16.msra.mxu0 %v1669
        %2178 = vmatprep.subr.bf16.mxu0 %v1674
        %2179 = vmatpush1.bf16.msra.mxu0 %v1673
        %2180 = vmatprep.subr.bf16.mxu0 %v1678
        %2181 = vmatpush1.bf16.msra.mxu0 %v1677
        %2182 = vmatprep.mubr.bf16.mxu0 %v829
        %2183 = vmatmul.mubr.bf16.gmra.mrb[0].mxu0 %v815
        %v2184 = vpop.f32.mrb[0].mxu0
        %v2185 = vadd.f32 %v2133, %v2184
        %v2186 = vpop.f32.mrb[0].mxu0
        %v2187 = vadd.f32 %v2137, %v2186
        %v2188 = vpop.f32.mrb[0].mxu0
        %v2189 = vpop.f32.mrb[0].mxu0
        %2190 = vdwg.mxu0
        %2191 = vmatprep.subr.bf16.mxu0 %v1682
        %2192 = vmatpush1.bf16.msra.mxu0 %v1681
        %2193 = vmatprep.subr.bf16.mxu0 %v1686
        %2194 = vmatpush1.bf16.msra.mxu0 %v1685
        %2195 = vmatprep.subr.bf16.mxu0 %v1690
        %2196 = vmatpush1.bf16.msra.mxu0 %v1689
        %2197 = vmatprep.subr.bf16.mxu0 %v1694
        %2198 = vmatpush1.bf16.msra.mxu0 %v1693
        %2199 = vmatprep.subr.bf16.mxu0 %v1698
        %2200 = vmatpush1.bf16.msra.mxu0 %v1697
        %2201 = vmatprep.subr.bf16.mxu0 %v1702
        %2202 = vmatpush1.bf16.msra.mxu0 %v1701
        %2203 = vmatprep.subr.bf16.mxu0 %v1706
        %2204 = vmatpush1.bf16.msra.mxu0 %v1705
        %2205 = vmatprep.subr.bf16.mxu0 %v1710
        %2206 = vmatpush1.bf16.msra.mxu0 %v1709
        %2207 = vmatprep.subr.bf16.mxu0 %v1714
        %2208 = vmatpush1.bf16.msra.mxu0 %v1713
        %2209 = vmatprep.subr.bf16.mxu0 %v1718
        %2210 = vmatpush1.bf16.msra.mxu0 %v1717
        %2211 = vmatprep.subr.bf16.mxu0 %v1722
        %2212 = vmatpush1.bf16.msra.mxu0 %v1721
        %2213 = vmatprep.subr.bf16.mxu0 %v1726
        %2214 = vmatpush1.bf16.msra.mxu0 %v1725
        %2215 = vmatprep.subr.bf16.mxu0 %v1730
        %2216 = vmatpush1.bf16.msra.mxu0 %v1729
        %2217 = vmatprep.subr.bf16.mxu0 %v1734
        %2218 = vmatpush1.bf16.msra.mxu0 %v1733
        %2219 = vmatprep.subr.bf16.mxu0 %v1738
        %2220 = vmatpush1.bf16.msra.mxu0 %v1737
        %2221 = vmatprep.subr.bf16.mxu0 %v1742
        %2222 = vmatpush1.bf16.msra.mxu0 %v1741
        %2223 = vmatprep.mubr.bf16.mxu0 %v839
        %2224 = vmatmul.mubr.bf16.gmra.mrb[0].mxu0 %v837
        %v2225 = vpop.f32.mrb[0].mxu0
        %v2226 = vadd.f32 %v2185, %v2225
        %v2227 = vpop.f32.mrb[0].mxu0
        %v2228 = vadd.f32 %v2187, %v2227
        %v2229 = vpop.f32.mrb[0].mxu0
        %v2230 = vpop.f32.mrb[0].mxu0
        %2231 = vdwg.mxu0
        %2232 = vmatprep.subr.bf16.mxu0 %v1746
        %2233 = vmatpush1.bf16.msra.mxu0 %v1745
        %2234 = vmatprep.subr.bf16.mxu0 %v1750
        %2235 = vmatpush1.bf16.msra.mxu0 %v1749
        %2236 = vmatprep.subr.bf16.mxu0 %v1754
        %2237 = vmatpush1.bf16.msra.mxu0 %v1753
        %2238 = vmatprep.subr.bf16.mxu0 %v1758
        %2239 = vmatpush1.bf16.msra.mxu0 %v1757
        %2240 = vmatprep.subr.bf16.mxu0 %v1762
        %2241 = vmatpush1.bf16.msra.mxu0 %v1761
        %2242 = vmatprep.subr.bf16.mxu0 %v1766
        %2243 = vmatpush1.bf16.msra.mxu0 %v1765
        %2244 = vmatprep.subr.bf16.mxu0 %v1770
        %2245 = vmatpush1.bf16.msra.mxu0 %v1769
        %2246 = vmatprep.subr.bf16.mxu0 %v1774
        %2247 = vmatpush1.bf16.msra.mxu0 %v1773
        %2248 = vmatprep.subr.bf16.mxu0 %v1778
        %2249 = vmatpush1.bf16.msra.mxu0 %v1777
        %2250 = vmatprep.subr.bf16.mxu0 %v1782
        %2251 = vmatpush1.bf16.msra.mxu0 %v1781
        %2252 = vmatprep.subr.bf16.mxu0 %v1786
        %2253 = vmatpush1.bf16.msra.mxu0 %v1785
        %2254 = vmatprep.subr.bf16.mxu0 %v1790
        %2255 = vmatpush1.bf16.msra.mxu0 %v1789
        %2256 = vmatprep.subr.bf16.mxu0 %v1794
        %2257 = vmatpush1.bf16.msra.mxu0 %v1793
        %2258 = vmatprep.subr.bf16.mxu0 %v1798
        %2259 = vmatpush1.bf16.msra.mxu0 %v1797
        %2260 = vmatprep.subr.bf16.mxu0 %v1802
        %2261 = vmatpush1.bf16.msra.mxu0 %v1801
        %2262 = vmatprep.subr.bf16.mxu0 %v1806
        %2263 = vmatpush1.bf16.msra.mxu0 %v1805
        %2264 = vmatprep.mubr.bf16.mxu0 %v836
        %2265 = vmatmul.mubr.bf16.gmra.mrb[0].mxu0 %v822
        %v2266 = vpop.f32.mrb[0].mxu0
        %v2267 = vadd.f32 %v2226, %v2266
        %v2268 = vpop.f32.mrb[0].mxu0
        %v2269 = vadd.f32 %v2228, %v2268
        %v2270 = vpop.f32.mrb[0].mxu0
        %v2271 = vpop.f32.mrb[0].mxu0
        %2272 = vdwg.mxu0
        %2273 = vmatprep.subr.bf16.mxu0 %v1810
        %2274 = vmatpush1.bf16.msra.mxu0 %v1809
        %2275 = vmatprep.subr.bf16.mxu0 %v1814
        %2276 = vmatpush1.bf16.msra.mxu0 %v1813
        %2277 = vmatprep.subr.bf16.mxu0 %v1818
        %2278 = vmatpush1.bf16.msra.mxu0 %v1817
        %2279 = vmatprep.subr.bf16.mxu0 %v1822
        %2280 = vmatpush1.bf16.msra.mxu0 %v1821
        %2281 = vmatprep.subr.bf16.mxu0 %v1826
        %2282 = vmatpush1.bf16.msra.mxu0 %v1825
        %2283 = vmatprep.subr.bf16.mxu0 %v1830
        %2284 = vmatpush1.bf16.msra.mxu0 %v1829
        %2285 = vmatprep.subr.bf16.mxu0 %v1834
        %2286 = vmatpush1.bf16.msra.mxu0 %v1833
        %2287 = vmatprep.subr.bf16.mxu0 %v1838
        %2288 = vmatpush1.bf16.msra.mxu0 %v1837
        %2289 = vmatprep.subr.bf16.mxu0 %v1842
        %2290 = vmatpush1.bf16.msra.mxu0 %v1841
        %2291 = vmatprep.subr.bf16.mxu0 %v1846
        %2292 = vmatpush1.bf16.msra.mxu0 %v1845
        %2293 = vmatprep.subr.bf16.mxu0 %v1850
        %2294 = vmatpush1.bf16.msra.mxu0 %v1849
        %2295 = vmatprep.subr.bf16.mxu0 %v1854
        %2296 = vmatpush1.bf16.msra.mxu0 %v1853
        %2297 = vmatprep.subr.bf16.mxu0 %v1858
        %2298 = vmatpush1.bf16.msra.mxu0 %v1857
        %2299 = vmatprep.subr.bf16.mxu0 %v1862
        %2300 = vmatpush1.bf16.msra.mxu0 %v1861
        %2301 = vmatprep.subr.bf16.mxu0 %v1866
        %2302 = vmatpush1.bf16.msra.mxu0 %v1865
        %2303 = vmatprep.subr.bf16.mxu0 %v1870
        %2304 = vmatpush1.bf16.msra.mxu0 %v1869
        %2305 = vmatprep.mubr.bf16.mxu0 %v840
        %2306 = vmatmul.mubr.bf16.gmra.mrb[0].mxu0 %v838
        %v2307 = vpop.f32.mrb[0].mxu0
        %v2308 = vadd.f32 %v2267, %v2307
        %v2309 = vpop.f32.mrb[0].mxu0
        %v2310 = vadd.f32 %v2269, %v2309
        %v2311 = vpop.f32.mrb[0].mxu0
        %v2312 = vpop.f32.mrb[0].mxu0
        %2313 = vdwg.mxu0
        %2314 = vmatprep.subr.bf16.mxu0 %v1620
        %2315 = vmatpush1.bf16.msra.mxu0 %v1619
        %2316 = vmatprep.subr.bf16.mxu0 %v1624
        %2317 = vmatpush1.bf16.msra.mxu0 %v1623
        %2318 = vmatprep.subr.bf16.mxu0 %v1628
        %2319 = vmatpush1.bf16.msra.mxu0 %v1627
        %2320 = vmatprep.subr.bf16.mxu0 %v1632
        %2321 = vmatpush1.bf16.msra.mxu0 %v1631
        %2322 = vmatprep.subr.bf16.mxu0 %v1636
        %2323 = vmatpush1.bf16.msra.mxu0 %v1635
        %2324 = vmatprep.subr.bf16.mxu0 %v1640
        %2325 = vmatpush1.bf16.msra.mxu0 %v1639
        %2326 = vmatprep.subr.bf16.mxu0 %v1644
        %2327 = vmatpush1.bf16.msra.mxu0 %v1643
        %2328 = vmatprep.subr.bf16.mxu0 %v1648
        %2329 = vmatpush1.bf16.msra.mxu0 %v1647
        %2330 = vmatprep.subr.bf16.mxu0 %v1652
        %2331 = vmatpush1.bf16.msra.mxu0 %v1651
        %2332 = vmatprep.subr.bf16.mxu0 %v1656
        %2333 = vmatpush1.bf16.msra.mxu0 %v1655
        %2334 = vmatprep.subr.bf16.mxu0 %v1660
        %2335 = vmatpush1.bf16.msra.mxu0 %v1659
        %2336 = vmatprep.subr.bf16.mxu0 %v1664
        %2337 = vmatpush1.bf16.msra.mxu0 %v1663
        %2338 = vmatprep.subr.bf16.mxu0 %v1668
        %2339 = vmatpush1.bf16.msra.mxu0 %v1667
        %2340 = vmatprep.subr.bf16.mxu0 %v1672
        %2341 = vmatpush1.bf16.msra.mxu0 %v1671
        %2342 = vmatprep.subr.bf16.mxu0 %v1676
        %2343 = vmatpush1.bf16.msra.mxu0 %v1675
        %2344 = vmatprep.subr.bf16.mxu0 %v1680
        %2345 = vmatpush1.bf16.msra.mxu0 %v1679
        %2346 = vmatprep.mubr.bf16.mxu0 %v829
        %2347 = vmatmul.mubr.bf16.gmra.mrb[0].mxu0 %v815
        %v2348 = vpop.f32.mrb[0].mxu0
        %v2349 = vadd.f32 %v2141, %v2348
        %v2350 = vpop.f32.mrb[0].mxu0
        %v2351 = vadd.f32 %v2145, %v2350
        %v2352 = vpop.f32.mrb[0].mxu0
        %v2353 = vpop.f32.mrb[0].mxu0
        %2354 = vdwg.mxu0
        %2355 = vmatprep.subr.bf16.mxu0 %v1684
        %2356 = vmatpush1.bf16.msra.mxu0 %v1683
        %2357 = vmatprep.subr.bf16.mxu0 %v1688
        %2358 = vmatpush1.bf16.msra.mxu0 %v1687
        %2359 = vmatprep.subr.bf16.mxu0 %v1692
        %2360 = vmatpush1.bf16.msra.mxu0 %v1691
        %2361 = vmatprep.subr.bf16.mxu0 %v1696
        %2362 = vmatpush1.bf16.msra.mxu0 %v1695
        %2363 = vmatprep.subr.bf16.mxu0 %v1700
        %2364 = vmatpush1.bf16.msra.mxu0 %v1699
        %2365 = vmatprep.subr.bf16.mxu0 %v1704
        %2366 = vmatpush1.bf16.msra.mxu0 %v1703
        %2367 = vmatprep.subr.bf16.mxu0 %v1708
        %2368 = vmatpush1.bf16.msra.mxu0 %v1707
        %2369 = vmatprep.subr.bf16.mxu0 %v1712
        %2370 = vmatpush1.bf16.msra.mxu0 %v1711
        %2371 = vmatprep.subr.bf16.mxu0 %v1716
        %2372 = vmatpush1.bf16.msra.mxu0 %v1715
        %2373 = vmatprep.subr.bf16.mxu0 %v1720
        %2374 = vmatpush1.bf16.msra.mxu0 %v1719
        %2375 = vmatprep.subr.bf16.mxu0 %v1724
        %2376 = vmatpush1.bf16.msra.mxu0 %v1723
        %2377 = vmatprep.subr.bf16.mxu0 %v1728
        %2378 = vmatpush1.bf16.msra.mxu0 %v1727
        %2379 = vmatprep.subr.bf16.mxu0 %v1732
        %2380 = vmatpush1.bf16.msra.mxu0 %v1731
        %2381 = vmatprep.subr.bf16.mxu0 %v1736
        %2382 = vmatpush1.bf16.msra.mxu0 %v1735
        %2383 = vmatprep.subr.bf16.mxu0 %v1740
        %2384 = vmatpush1.bf16.msra.mxu0 %v1739
        %2385 = vmatprep.subr.bf16.mxu0 %v1744
        %2386 = vmatpush1.bf16.msra.mxu0 %v1743
        %2387 = vmatprep.mubr.bf16.mxu0 %v839
        %2388 = vmatmul.mubr.bf16.gmra.mrb[0].mxu0 %v837
        %v2389 = vpop.f32.mrb[0].mxu0
        %v2390 = vadd.f32 %v2349, %v2389
        %v2391 = vpop.f32.mrb[0].mxu0
        %v2392 = vadd.f32 %v2351, %v2391
        %v2393 = vpop.f32.mrb[0].mxu0
        %v2394 = vpop.f32.mrb[0].mxu0
        %2395 = vdwg.mxu0
        %2396 = vmatprep.subr.bf16.mxu0 %v1748
        %2397 = vmatpush1.bf16.msra.mxu0 %v1747
        %2398 = vmatprep.subr.bf16.mxu0 %v1752
        %2399 = vmatpush1.bf16.msra.mxu0 %v1751
        %2400 = vmatprep.subr.bf16.mxu0 %v1756
        %2401 = vmatpush1.bf16.msra.mxu0 %v1755
        %2402 = vmatprep.subr.bf16.mxu0 %v1760
        %2403 = vmatpush1.bf16.msra.mxu0 %v1759
        %2404 = vmatprep.subr.bf16.mxu0 %v1764
        %2405 = vmatpush1.bf16.msra.mxu0 %v1763
        %2406 = vmatprep.subr.bf16.mxu0 %v1768
        %2407 = vmatpush1.bf16.msra.mxu0 %v1767
        %2408 = vmatprep.subr.bf16.mxu0 %v1772
        %2409 = vmatpush1.bf16.msra.mxu0 %v1771
        %2410 = vmatprep.subr.bf16.mxu0 %v1776
        %2411 = vmatpush1.bf16.msra.mxu0 %v1775
        %2412 = vmatprep.subr.bf16.mxu0 %v1780
        %2413 = vmatpush1.bf16.msra.mxu0 %v1779
        %2414 = vmatprep.subr.bf16.mxu0 %v1784
        %2415 = vmatpush1.bf16.msra.mxu0 %v1783
        %2416 = vmatprep.subr.bf16.mxu0 %v1788
        %2417 = vmatpush1.bf16.msra.mxu0 %v1787
        %2418 = vmatprep.subr.bf16.mxu0 %v1792
        %2419 = vmatpush1.bf16.msra.mxu0 %v1791
        %2420 = vmatprep.subr.bf16.mxu0 %v1796
        %2421 = vmatpush1.bf16.msra.mxu0 %v1795
        %2422 = vmatprep.subr.bf16.mxu0 %v1800
        %2423 = vmatpush1.bf16.msra.mxu0 %v1799
        %2424 = vmatprep.subr.bf16.mxu0 %v1804
        %2425 = vmatpush1.bf16.msra.mxu0 %v1803
        %2426 = vmatprep.subr.bf16.mxu0 %v1808
        %2427 = vmatpush1.bf16.msra.mxu0 %v1807
        %2428 = vmatprep.mubr.bf16.mxu0 %v836
        %2429 = vmatmul.mubr.bf16.gmra.mrb[0].mxu0 %v822
        %v2430 = vpop.f32.mrb[0].mxu0
        %v2431 = vadd.f32 %v2390, %v2430
        %v2432 = vpop.f32.mrb[0].mxu0
        %v2433 = vadd.f32 %v2392, %v2432
        %v2434 = vpop.f32.mrb[0].mxu0
        %v2435 = vpop.f32.mrb[0].mxu0
        %2436 = vdwg.mxu0
        %2437 = vmatprep.subr.bf16.mxu0 %v1812
        %2438 = vmatpush1.bf16.msra.mxu0 %v1811
        %2439 = vmatprep.subr.bf16.mxu0 %v1816
        %2440 = vmatpush1.bf16.msra.mxu0 %v1815
        %2441 = vmatprep.subr.bf16.mxu0 %v1820
        %2442 = vmatpush1.bf16.msra.mxu0 %v1819
        %2443 = vmatprep.subr.bf16.mxu0 %v1824
        %2444 = vmatpush1.bf16.msra.mxu0 %v1823
        %2445 = vmatprep.subr.bf16.mxu0 %v1828
        %2446 = vmatpush1.bf16.msra.mxu0 %v1827
        %2447 = vmatprep.subr.bf16.mxu0 %v1832
        %2448 = vmatpush1.bf16.msra.mxu0 %v1831
        %2449 = vmatprep.subr.bf16.mxu0 %v1836
        %2450 = vmatpush1.bf16.msra.mxu0 %v1835
        %2451 = vmatprep.subr.bf16.mxu0 %v1840
        %2452 = vmatpush1.bf16.msra.mxu0 %v1839
        %2453 = vmatprep.subr.bf16.mxu0 %v1844
        %2454 = vmatpush1.bf16.msra.mxu0 %v1843
        %2455 = vmatprep.subr.bf16.mxu0 %v1848
        %2456 = vmatpush1.bf16.msra.mxu0 %v1847
        %2457 = vmatprep.subr.bf16.mxu0 %v1852
        %2458 = vmatpush1.bf16.msra.mxu0 %v1851
        %2459 = vmatprep.subr.bf16.mxu0 %v1856
        %2460 = vmatpush1.bf16.msra.mxu0 %v1855
        %2461 = vmatprep.subr.bf16.mxu0 %v1860
        %2462 = vmatpush1.bf16.msra.mxu0 %v1859
        %2463 = vmatprep.subr.bf16.mxu0 %v1864
        %2464 = vmatpush1.bf16.msra.mxu0 %v1863
        %2465 = vmatprep.subr.bf16.mxu0 %v1868
        %2466 = vmatpush1.bf16.msra.mxu0 %v1867
        %2467 = vmatprep.subr.bf16.mxu0 %v1872
        %2468 = vmatpush1.bf16.msra.mxu0 %v1871
        %2469 = vmatprep.mubr.bf16.mxu0 %v840
        %2470 = vmatmul.mubr.bf16.gmra.mrb[0].mxu0 %v838
        %v2471 = vpop.f32.mrb[0].mxu0
        %v2472 = vadd.f32 %v2431, %v2471
        %v2473 = vpop.f32.mrb[0].mxu0
        %v2474 = vadd.f32 %v2433, %v2473
        %v2475 = vpop.f32.mrb[0].mxu0
        %v2476 = vpop.f32.mrb[0].mxu0
        %2477 = vdwg.mxu0
        %v2478 = vpack.c.bf16 %v2308, %v2308
        %v2479 = vpack.c.bf16 %v2310, %v2310
        %v2480 = vpack.c.bf16 %v2472, %v2472
        %v2481 = vpack.c.bf16 %v2474, %v2474
        %v2482 = vld [vmem:[%s3] sm:$0xff]
        %v2483 = vld [vmem:[%s3 + $0x8] sm:$0xff]
        %v2484 = vld [vmem:[%s3 + $0x10] sm:$0xff]
        %v2485 = vld [vmem:[%s3 + $0x18] sm:$0xff]
        %v2486 = vld [vmem:[%s3 + $0x20] sm:$0xff]
        %v2487 = vld [vmem:[%s3 + $0x28] sm:$0xff]
        %v2488 = vld [vmem:[%s3 + $0x30] sm:$0xff]
        %v2489 = vld [vmem:[%s3 + $0x38] sm:$0xff]
        %v2490 = vld [vmem:[%s3 + $0x40] sm:$0xff]
        %v2491 = vld [vmem:[%s3 + $0x48] sm:$0xff]
        %v2492 = vld [vmem:[%s3 + $0x50] sm:$0xff]
        %v2493 = vld [vmem:[%s3 + $0x58] sm:$0xff]
        %v2494 = vld [vmem:[%s3 + $0x60] sm:$0xff]
        %v2495 = vld [vmem:[%s3 + $0x68] sm:$0xff]
        %v2496 = vld [vmem:[%s3 + $0x70] sm:$0xff]
        %v2497 = vld [vmem:[%s3 + $0x78] sm:$0xff]
        %v2498 = vld [vmem:[%s3 + $0x80] sm:$0xff]
        %v2499 = vld [vmem:[%s3 + $0x88] sm:$0xff]
        %v2500 = vld [vmem:[%s3 + $0x90] sm:$0xff]
        %v2501 = vld [vmem:[%s3 + $0x98] sm:$0xff]
        %v2502 = vld [vmem:[%s3 + $0xa0] sm:$0xff]
        %v2503 = vld [vmem:[%s3 + $0xa8] sm:$0xff]
        %v2504 = vld [vmem:[%s3 + $0xb0] sm:$0xff]
        %v2505 = vld [vmem:[%s3 + $0xb8] sm:$0xff]
        %v2506 = vld [vmem:[%s3 + $0xc0] sm:$0xff]
        %v2507 = vld [vmem:[%s3 + $0xc8] sm:$0xff]
        %v2508 = vld [vmem:[%s3 + $0xd0] sm:$0xff]
        %v2509 = vld [vmem:[%s3 + $0xd8] sm:$0xff]
        %v2510 = vld [vmem:[%s3 + $0xe0] sm:$0xff]
        %v2511 = vld [vmem:[%s3 + $0xe8] sm:$0xff]
        %v2512 = vld [vmem:[%s3 + $0xf0] sm:$0xff]
        %v2513 = vld [vmem:[%s3 + $0xf8] sm:$0xff]
        %v2514 = vld [vmem:[%s3 + $0x100] sm:$0xff]
        %v2515 = vld [vmem:[%s3 + $0x108] sm:$0xff]
        %v2516 = vld [vmem:[%s3 + $0x110] sm:$0xff]
        %v2517 = vld [vmem:[%s3 + $0x118] sm:$0xff]
        %v2518 = vld [vmem:[%s3 + $0x120] sm:$0xff]
        %v2519 = vld [vmem:[%s3 + $0x128] sm:$0xff]
        %v2520 = vld [vmem:[%s3 + $0x130] sm:$0xff]
        %v2521 = vld [vmem:[%s3 + $0x138] sm:$0xff]
        %v2522 = vld [vmem:[%s3 + $0x140] sm:$0xff]
        %v2523 = vld [vmem:[%s3 + $0x148] sm:$0xff]
        %v2524 = vld [vmem:[%s3 + $0x150] sm:$0xff]
        %v2525 = vld [vmem:[%s3 + $0x158] sm:$0xff]
        %v2526 = vld [vmem:[%s3 + $0x160] sm:$0xff]
        %v2527 = vld [vmem:[%s3 + $0x168] sm:$0xff]
        %v2528 = vld [vmem:[%s3 + $0x170] sm:$0xff]
        %v2529 = vld [vmem:[%s3 + $0x178] sm:$0xff]
        %v2530 = vld [vmem:[%s3 + $0x180] sm:$0xff]
        %v2531 = vld [vmem:[%s3 + $0x188] sm:$0xff]
        %v2532 = vld [vmem:[%s3 + $0x190] sm:$0xff]
        %v2533 = vld [vmem:[%s3 + $0x198] sm:$0xff]
        %v2534 = vld [vmem:[%s3 + $0x1a0] sm:$0xff]
        %v2535 = vld [vmem:[%s3 + $0x1a8] sm:$0xff]
        %v2536 = vld [vmem:[%s3 + $0x1b0] sm:$0xff]
        %v2537 = vld [vmem:[%s3 + $0x1b8] sm:$0xff]
        %v2538 = vld [vmem:[%s3 + $0x1c0] sm:$0xff]
        %v2539 = vld [vmem:[%s3 + $0x1c8] sm:$0xff]
        %v2540 = vld [vmem:[%s3 + $0x1d0] sm:$0xff]
        %v2541 = vld [vmem:[%s3 + $0x1d8] sm:$0xff]
        %v2542 = vld [vmem:[%s3 + $0x1e0] sm:$0xff]
        %v2543 = vld [vmem:[%s3 + $0x1e8] sm:$0xff]
        %v2544 = vld [vmem:[%s3 + $0x1f0] sm:$0xff]
        %v2545 = vld [vmem:[%s3 + $0x1f8] sm:$0xff]
        %v2546 = vld [vmem:[%s4] sm:$0x3]
        %v2611 = vunpack.c.l.b16 %v2482
        %v2612 = vunpack.c.h.b16 %v2482
        %v2613 = vunpack.c.l.b16 %v2483
        %v2614 = vunpack.c.h.b16 %v2483
        %v2615 = vunpack.c.l.b16 %v2484
        %v2616 = vunpack.c.h.b16 %v2484
        %v2617 = vunpack.c.l.b16 %v2485
        %v2618 = vunpack.c.h.b16 %v2485
        %v2619 = vunpack.c.l.b16 %v2486
        %v2620 = vunpack.c.h.b16 %v2486
        %v2621 = vunpack.c.l.b16 %v2487
        %v2622 = vunpack.c.h.b16 %v2487
        %v2623 = vunpack.c.l.b16 %v2488
        %v2624 = vunpack.c.h.b16 %v2488
        %v2625 = vunpack.c.l.b16 %v2489
        %v2626 = vunpack.c.h.b16 %v2489
        %v2627 = vunpack.c.l.b16 %v2490
        %v2628 = vunpack.c.h.b16 %v2490
        %v2629 = vunpack.c.l.b16 %v2491
        %v2630 = vunpack.c.h.b16 %v2491
        %v2631 = vunpack.c.l.b16 %v2492
        %v2632 = vunpack.c.h.b16 %v2492
        %v2633 = vunpack.c.l.b16 %v2493
        %v2634 = vunpack.c.h.b16 %v2493
        %v2635 = vunpack.c.l.b16 %v2494
        %v2636 = vunpack.c.h.b16 %v2494
        %v2637 = vunpack.c.l.b16 %v2495
        %v2638 = vunpack.c.h.b16 %v2495
        %v2639 = vunpack.c.l.b16 %v2496
        %v2640 = vunpack.c.h.b16 %v2496
        %v2641 = vunpack.c.l.b16 %v2497
        %v2642 = vunpack.c.h.b16 %v2497
        %v2643 = vunpack.c.l.b16 %v2498
        %v2644 = vunpack.c.h.b16 %v2498
        %v2645 = vunpack.c.l.b16 %v2499
        %v2646 = vunpack.c.h.b16 %v2499
        %v2647 = vunpack.c.l.b16 %v2500
        %v2648 = vunpack.c.h.b16 %v2500
        %v2649 = vunpack.c.l.b16 %v2501
        %v2650 = vunpack.c.h.b16 %v2501
        %v2651 = vunpack.c.l.b16 %v2502
        %v2652 = vunpack.c.h.b16 %v2502
        %v2653 = vunpack.c.l.b16 %v2503
        %v2654 = vunpack.c.h.b16 %v2503
        %v2655 = vunpack.c.l.b16 %v2504
        %v2656 = vunpack.c.h.b16 %v2504
        %v2657 = vunpack.c.l.b16 %v2505
        %v2658 = vunpack.c.h.b16 %v2505
        %v2659 = vunpack.c.l.b16 %v2506
        %v2660 = vunpack.c.h.b16 %v2506
        %v2661 = vunpack.c.l.b16 %v2507
        %v2662 = vunpack.c.h.b16 %v2507
        %v2663 = vunpack.c.l.b16 %v2508
        %v2664 = vunpack.c.h.b16 %v2508
        %v2665 = vunpack.c.l.b16 %v2509
        %v2666 = vunpack.c.h.b16 %v2509
        %v2667 = vunpack.c.l.b16 %v2510
        %v2668 = vunpack.c.h.b16 %v2510
        %v2669 = vunpack.c.l.b16 %v2511
        %v2670 = vunpack.c.h.b16 %v2511
        %v2671 = vunpack.c.l.b16 %v2512
        %v2672 = vunpack.c.h.b16 %v2512
        %v2673 = vunpack.c.l.b16 %v2513
        %v2674 = vunpack.c.h.b16 %v2513
        %v2675 = vunpack.c.l.b16 %v2514
        %v2676 = vunpack.c.h.b16 %v2514
        %v2677 = vunpack.c.l.b16 %v2515
        %v2678 = vunpack.c.h.b16 %v2515
        %v2679 = vunpack.c.l.b16 %v2516
        %v2680 = vunpack.c.h.b16 %v2516
        %v2681 = vunpack.c.l.b16 %v2517
        %v2682 = vunpack.c.h.b16 %v2517
        %v2683 = vunpack.c.l.b16 %v2518
        %v2684 = vunpack.c.h.b16 %v2518
        %v2685 = vunpack.c.l.b16 %v2519
        %v2686 = vunpack.c.h.b16 %v2519
        %v2687 = vunpack.c.l.b16 %v2520
        %v2688 = vunpack.c.h.b16 %v2520
        %v2689 = vunpack.c.l.b16 %v2521
        %v2690 = vunpack.c.h.b16 %v2521
        %v2691 = vunpack.c.l.b16 %v2522
        %v2692 = vunpack.c.h.b16 %v2522
        %v2693 = vunpack.c.l.b16 %v2523
        %v2694 = vunpack.c.h.b16 %v2523
        %v2695 = vunpack.c.l.b16 %v2524
        %v2696 = vunpack.c.h.b16 %v2524
        %v2697 = vunpack.c.l.b16 %v2525
        %v2698 = vunpack.c.h.b16 %v2525
        %v2699 = vunpack.c.l.b16 %v2526
        %v2700 = vunpack.c.h.b16 %v2526
        %v2701 = vunpack.c.l.b16 %v2527
        %v2702 = vunpack.c.h.b16 %v2527
        %v2703 = vunpack.c.l.b16 %v2528
        %v2704 = vunpack.c.h.b16 %v2528
        %v2705 = vunpack.c.l.b16 %v2529
        %v2706 = vunpack.c.h.b16 %v2529
        %v2707 = vunpack.c.l.b16 %v2530
        %v2708 = vunpack.c.h.b16 %v2530
        %v2709 = vunpack.c.l.b16 %v2531
        %v2710 = vunpack.c.h.b16 %v2531
        %v2711 = vunpack.c.l.b16 %v2532
        %v2712 = vunpack.c.h.b16 %v2532
        %v2713 = vunpack.c.l.b16 %v2533
        %v2714 = vunpack.c.h.b16 %v2533
        %v2715 = vunpack.c.l.b16 %v2534
        %v2716 = vunpack.c.h.b16 %v2534
        %v2717 = vunpack.c.l.b16 %v2535
        %v2718 = vunpack.c.h.b16 %v2535
        %v2719 = vunpack.c.l.b16 %v2536
        %v2720 = vunpack.c.h.b16 %v2536
        %v2721 = vunpack.c.l.b16 %v2537
        %v2722 = vunpack.c.h.b16 %v2537
        %v2723 = vunpack.c.l.b16 %v2538
        %v2724 = vunpack.c.h.b16 %v2538
        %v2725 = vunpack.c.l.b16 %v2539
        %v2726 = vunpack.c.h.b16 %v2539
        %v2727 = vunpack.c.l.b16 %v2540
        %v2728 = vunpack.c.h.b16 %v2540
        %v2729 = vunpack.c.l.b16 %v2541
        %v2730 = vunpack.c.h.b16 %v2541
        %v2731 = vunpack.c.l.b16 %v2542
        %v2732 = vunpack.c.h.b16 %v2542
        %v2733 = vunpack.c.l.b16 %v2543
        %v2734 = vunpack.c.h.b16 %v2543
        %v2735 = vunpack.c.l.b16 %v2544
        %v2736 = vunpack.c.h.b16 %v2544
        %v2737 = vunpack.c.l.b16 %v2545
        %v2738 = vunpack.c.h.b16 %v2545
        %v2739 = vpack.c.b16 %v2613, %v2611
        %v2740 = vpack.c.b16 %v2614, %v2612
        %v2741 = vpack.c.b16 %v2617, %v2615
        %v2742 = vpack.c.b16 %v2618, %v2616
        %v2743 = vpack.c.b16 %v2621, %v2619
        %v2744 = vpack.c.b16 %v2622, %v2620
        %v2745 = vpack.c.b16 %v2625, %v2623
        %v2746 = vpack.c.b16 %v2626, %v2624
        %v2747 = vpack.c.b16 %v2629, %v2627
        %v2748 = vpack.c.b16 %v2630, %v2628
        %v2749 = vpack.c.b16 %v2633, %v2631
        %v2750 = vpack.c.b16 %v2634, %v2632
        %v2751 = vpack.c.b16 %v2637, %v2635
        %v2752 = vpack.c.b16 %v2638, %v2636
        %v2753 = vpack.c.b16 %v2641, %v2639
        %v2754 = vpack.c.b16 %v2642, %v2640
        %v2755 = vpack.c.b16 %v2645, %v2643
        %v2756 = vpack.c.b16 %v2646, %v2644
        %v2757 = vpack.c.b16 %v2649, %v2647
        %v2758 = vpack.c.b16 %v2650, %v2648
        %v2759 = vpack.c.b16 %v2653, %v2651
        %v2760 = vpack.c.b16 %v2654, %v2652
        %v2761 = vpack.c.b16 %v2657, %v2655
        %v2762 = vpack.c.b16 %v2658, %v2656
        %v2763 = vpack.c.b16 %v2661, %v2659
        %v2764 = vpack.c.b16 %v2662, %v2660
        %v2765 = vpack.c.b16 %v2665, %v2663
        %v2766 = vpack.c.b16 %v2666, %v2664
        %v2767 = vpack.c.b16 %v2669, %v2667
        %v2768 = vpack.c.b16 %v2670, %v2668
        %v2769 = vpack.c.b16 %v2673, %v2671
        %v2770 = vpack.c.b16 %v2674, %v2672
        %v2771 = vpack.c.b16 %v2677, %v2675
        %v2772 = vpack.c.b16 %v2678, %v2676
        %v2773 = vpack.c.b16 %v2681, %v2679
        %v2774 = vpack.c.b16 %v2682, %v2680
        %v2775 = vpack.c.b16 %v2685, %v2683
        %v2776 = vpack.c.b16 %v2686, %v2684
        %v2777 = vpack.c.b16 %v2689, %v2687
        %v2778 = vpack.c.b16 %v2690, %v2688
        %v2779 = vpack.c.b16 %v2693, %v2691
        %v2780 = vpack.c.b16 %v2694, %v2692
        %v2781 = vpack.c.b16 %v2697, %v2695
        %v2782 = vpack.c.b16 %v2698, %v2696
        %v2783 = vpack.c.b16 %v2701, %v2699
        %v2784 = vpack.c.b16 %v2702, %v2700
        %v2785 = vpack.c.b16 %v2705, %v2703
        %v2786 = vpack.c.b16 %v2706, %v2704
        %v2787 = vpack.c.b16 %v2709, %v2707
        %v2788 = vpack.c.b16 %v2710, %v2708
        %v2789 = vpack.c.b16 %v2713, %v2711
        %v2790 = vpack.c.b16 %v2714, %v2712
        %v2791 = vpack.c.b16 %v2717, %v2715
        %v2792 = vpack.c.b16 %v2718, %v2716
        %v2793 = vpack.c.b16 %v2721, %v2719
        %v2794 = vpack.c.b16 %v2722, %v2720
        %v2795 = vpack.c.b16 %v2725, %v2723
        %v2796 = vpack.c.b16 %v2726, %v2724
        %v2797 = vpack.c.b16 %v2729, %v2727
        %v2798 = vpack.c.b16 %v2730, %v2728
        %v2799 = vpack.c.b16 %v2733, %v2731
        %v2800 = vpack.c.b16 %v2734, %v2732
        %v2801 = vpack.c.b16 %v2737, %v2735
        %v2802 = vpack.c.b16 %v2738, %v2736
        %v2868 = vlaneseq
        %v2869 = vshrl.u32 %v2868, 7
        %v2870 = vsub.s32 0, %v2869
        %v2871 = vrot.slane %v2546, %v2870
        %v2872 = vlaneseq
        %v2873 = vshrl.u32 %v2872, 7
        %v2874 = vsub.s32 1, %v2873
        %v2875 = vrot.slane %v2546, %v2874
        %2878 = vmatprep.subr.bf16.mxu0 %v2740
        %2879 = vmatpush1.bf16.msra.mxu0 %v2739
        %2880 = vmatprep.subr.bf16.mxu0 %v2742
        %2881 = vmatpush1.bf16.msra.mxu0 %v2741
        %2882 = vmatprep.subr.bf16.mxu0 %v2744
        %2883 = vmatpush1.bf16.msra.mxu0 %v2743
        %2884 = vmatprep.subr.bf16.mxu0 %v2746
        %2885 = vmatpush1.bf16.msra.mxu0 %v2745
        %2886 = vmatprep.subr.bf16.mxu0 %v2748
        %2887 = vmatpush1.bf16.msra.mxu0 %v2747
        %2888 = vmatprep.subr.bf16.mxu0 %v2750
        %2889 = vmatpush1.bf16.msra.mxu0 %v2749
        %2890 = vmatprep.subr.bf16.mxu0 %v2752
        %2891 = vmatpush1.bf16.msra.mxu0 %v2751
        %2892 = vmatprep.subr.bf16.mxu0 %v2754
        %2893 = vmatpush1.bf16.msra.mxu0 %v2753
        %2894 = vmatprep.subr.bf16.mxu0 %v2756
        %2895 = vmatpush1.bf16.msra.mxu0 %v2755
        %2896 = vmatprep.subr.bf16.mxu0 %v2758
        %2897 = vmatpush1.bf16.msra.mxu0 %v2757
        %2898 = vmatprep.subr.bf16.mxu0 %v2760
        %2899 = vmatpush1.bf16.msra.mxu0 %v2759
        %2900 = vmatprep.subr.bf16.mxu0 %v2762
        %2901 = vmatpush1.bf16.msra.mxu0 %v2761
        %2902 = vmatprep.subr.bf16.mxu0 %v2764
        %2903 = vmatpush1.bf16.msra.mxu0 %v2763
        %2904 = vmatprep.subr.bf16.mxu0 %v2766
        %2905 = vmatpush1.bf16.msra.mxu0 %v2765
        %2906 = vmatprep.subr.bf16.mxu0 %v2768
        %2907 = vmatpush1.bf16.msra.mxu0 %v2767
        %2908 = vmatprep.subr.bf16.mxu0 %v2770
        %2909 = vmatpush1.bf16.msra.mxu0 %v2769
        %2910 = vmatprep.mubr.bf16.mxu0 %v2479
        %2911 = vmatmul.mubr.bf16.gmra.mrb[0].mxu0 %v2478
        %v2912 = vpop.f32.mrb[0].mxu0
        %v2913 = vadd.f32 %v2871, %v2912
        %v2914 = vpop.f32.mrb[0].mxu0
        %v2915 = vadd.f32 %v2875, %v2914
        %v2916 = vpop.f32.mrb[0].mxu0
        %v2917 = vpop.f32.mrb[0].mxu0
        %2918 = vdwg.mxu0
        %2919 = vmatprep.subr.bf16.mxu0 %v2772
        %2920 = vmatpush1.bf16.msra.mxu0 %v2771
        %2921 = vmatprep.subr.bf16.mxu0 %v2774
        %2922 = vmatpush1.bf16.msra.mxu0 %v2773
        %2923 = vmatprep.subr.bf16.mxu0 %v2776
        %2924 = vmatpush1.bf16.msra.mxu0 %v2775
        %2925 = vmatprep.subr.bf16.mxu0 %v2778
        %2926 = vmatpush1.bf16.msra.mxu0 %v2777
        %2927 = vmatprep.subr.bf16.mxu0 %v2780
        %2928 = vmatpush1.bf16.msra.mxu0 %v2779
        %2929 = vmatprep.subr.bf16.mxu0 %v2782
        %2930 = vmatpush1.bf16.msra.mxu0 %v2781
        %2931 = vmatprep.subr.bf16.mxu0 %v2784
        %2932 = vmatpush1.bf16.msra.mxu0 %v2783
        %2933 = vmatprep.subr.bf16.mxu0 %v2786
        %2934 = vmatpush1.bf16.msra.mxu0 %v2785
        %2935 = vmatprep.subr.bf16.mxu0 %v2788
        %2936 = vmatpush1.bf16.msra.mxu0 %v2787
        %2937 = vmatprep.subr.bf16.mxu0 %v2790
        %2938 = vmatpush1.bf16.msra.mxu0 %v2789
        %2939 = vmatprep.subr.bf16.mxu0 %v2792
        %2940 = vmatpush1.bf16.msra.mxu0 %v2791
        %2941 = vmatprep.subr.bf16.mxu0 %v2794
        %2942 = vmatpush1.bf16.msra.mxu0 %v2793
        %2943 = vmatprep.subr.bf16.mxu0 %v2796
        %2944 = vmatpush1.bf16.msra.mxu0 %v2795
        %2945 = vmatprep.subr.bf16.mxu0 %v2798
        %2946 = vmatpush1.bf16.msra.mxu0 %v2797
        %2947 = vmatprep.subr.bf16.mxu0 %v2800
        %2948 = vmatpush1.bf16.msra.mxu0 %v2799
        %2949 = vmatprep.subr.bf16.mxu0 %v2802
        %2950 = vmatpush1.bf16.msra.mxu0 %v2801
        %2951 = vmatprep.mubr.bf16.mxu0 %v2481
        %2952 = vmatmul.mubr.bf16.gmra.mrb[0].mxu0 %v2480
        %v2953 = vpop.f32.mrb[0].mxu0
        %v2954 = vadd.f32 %v2913, %v2953
        %v2955 = vpop.f32.mrb[0].mxu0
        %v2956 = vadd.f32 %v2915, %v2955
        %v2957 = vpop.f32.mrb[0].mxu0
        %v2958 = vpop.f32.mrb[0].mxu0
        %2959 = vdwg.mxu0
        %v2960 = vld [vmem:[#allocation4] sm:$0xff]
        %v2961 = vld [vmem:[#allocation4 + $0x8] sm:$0xff]
        %v2962 = vld [vmem:[#allocation4 + $0x10] sm:$0xff]
        %v2963 = vld [vmem:[#allocation4 + $0x18] sm:$0xff]
        %v2964 = vld [vmem:[#allocation4 + $0x20] sm:$0xff]
        %v2965 = vld [vmem:[#allocation4 + $0x28] sm:$0xff]
        %v2966 = vld [vmem:[#allocation4 + $0x30] sm:$0xff]
        %v2967 = vld [vmem:[#allocation4 + $0x38] sm:$0xff]
        %v2968 = vld [vmem:[#allocation4 + $0x40] sm:$0xff]
        %v2969 = vld [vmem:[#allocation4 + $0x48] sm:$0xff]
        %v2970 = vld [vmem:[#allocation4 + $0x50] sm:$0xff]
        %v2971 = vld [vmem:[#allocation4 + $0x58] sm:$0xff]
        %v2972 = vld [vmem:[#allocation4 + $0x60] sm:$0xff]
        %v2973 = vld [vmem:[#allocation4 + $0x68] sm:$0xff]
        %v2974 = vld [vmem:[#allocation4 + $0x70] sm:$0xff]
        %v2975 = vld [vmem:[#allocation4 + $0x78] sm:$0xff]
        %v2976 = vld [vmem:[#allocation4 + $0x80] sm:$0xff]
        %v2977 = vld [vmem:[#allocation4 + $0x88] sm:$0xff]
        %v2978 = vld [vmem:[#allocation4 + $0x90] sm:$0xff]
        %v2979 = vld [vmem:[#allocation4 + $0x98] sm:$0xff]
        %v2980 = vld [vmem:[#allocation4 + $0xa0] sm:$0xff]
        %v2981 = vld [vmem:[#allocation4 + $0xa8] sm:$0xff]
        %v2982 = vld [vmem:[#allocation4 + $0xb0] sm:$0xff]
        %v2983 = vld [vmem:[#allocation4 + $0xb8] sm:$0xff]
        %v2984 = vld [vmem:[#allocation4 + $0xc0] sm:$0xff]
        %v2985 = vld [vmem:[#allocation4 + $0xc8] sm:$0xff]
        %v2986 = vld [vmem:[#allocation4 + $0xd0] sm:$0xff]
        %v2987 = vld [vmem:[#allocation4 + $0xd8] sm:$0xff]
        %v2988 = vld [vmem:[#allocation4 + $0xe0] sm:$0xff]
        %v2989 = vld [vmem:[#allocation4 + $0xe8] sm:$0xff]
        %v2990 = vld [vmem:[#allocation4 + $0xf0] sm:$0xff]
        %v2991 = vld [vmem:[#allocation4 + $0xf8] sm:$0xff]
        %v2992 = vld [vmem:[#allocation4 + $0x100] sm:$0xff]
        %v2993 = vld [vmem:[#allocation4 + $0x108] sm:$0xff]
        %v2994 = vld [vmem:[#allocation4 + $0x110] sm:$0xff]
        %v2995 = vld [vmem:[#allocation4 + $0x118] sm:$0xff]
        %v2996 = vld [vmem:[#allocation4 + $0x120] sm:$0xff]
        %v2997 = vld [vmem:[#allocation4 + $0x128] sm:$0xff]
        %v2998 = vld [vmem:[#allocation4 + $0x130] sm:$0xff]
        %v2999 = vld [vmem:[#allocation4 + $0x138] sm:$0xff]
        %v3000 = vld [vmem:[#allocation4 + $0x140] sm:$0xff]
        %v3001 = vld [vmem:[#allocation4 + $0x148] sm:$0xff]
        %v3002 = vld [vmem:[#allocation4 + $0x150] sm:$0xff]
        %v3003 = vld [vmem:[#allocation4 + $0x158] sm:$0xff]
        %v3004 = vld [vmem:[#allocation4 + $0x160] sm:$0xff]
        %v3005 = vld [vmem:[#allocation4 + $0x168] sm:$0xff]
        %v3006 = vld [vmem:[#allocation4 + $0x170] sm:$0xff]
        %v3007 = vld [vmem:[#allocation4 + $0x178] sm:$0xff]
        %v3008 = vld [vmem:[#allocation4 + $0x180] sm:$0xff]
        %v3009 = vld [vmem:[#allocation4 + $0x188] sm:$0xff]
        %v3010 = vld [vmem:[#allocation4 + $0x190] sm:$0xff]
        %v3011 = vld [vmem:[#allocation4 + $0x198] sm:$0xff]
        %v3012 = vld [vmem:[#allocation4 + $0x1a0] sm:$0xff]
        %v3013 = vld [vmem:[#allocation4 + $0x1a8] sm:$0xff]
        %v3014 = vld [vmem:[#allocation4 + $0x1b0] sm:$0xff]
        %v3015 = vld [vmem:[#allocation4 + $0x1b8] sm:$0xff]
        %v3016 = vld [vmem:[#allocation4 + $0x1c0] sm:$0xff]
        %v3017 = vld [vmem:[#allocation4 + $0x1c8] sm:$0xff]
        %v3018 = vld [vmem:[#allocation4 + $0x1d0] sm:$0xff]
        %v3019 = vld [vmem:[#allocation4 + $0x1d8] sm:$0xff]
        %v3020 = vld [vmem:[#allocation4 + $0x1e0] sm:$0xff]
        %v3021 = vld [vmem:[#allocation4 + $0x1e8] sm:$0xff]
        %v3022 = vld [vmem:[#allocation4 + $0x1f0] sm:$0xff]
        %v3023 = vld [vmem:[#allocation4 + $0x1f8] sm:$0xff]
        %3024 = vmatprep.subr.mxu0 %v2961
        %3025 = vmatpush1.msra.mxu0 %v2960
        %3026 = vmatprep.subr.mxu0 %v2963
        %3027 = vmatpush1.msra.mxu0 %v2962
        %3028 = vmatprep.subr.mxu0 %v2965
        %3029 = vmatpush1.msra.mxu0 %v2964
        %3030 = vmatprep.subr.mxu0 %v2967
        %3031 = vmatpush1.msra.mxu0 %v2966
        %3032 = vmatprep.subr.mxu0 %v2969
        %3033 = vmatpush1.msra.mxu0 %v2968
        %3034 = vmatprep.subr.mxu0 %v2971
        %3035 = vmatpush1.msra.mxu0 %v2970
        %3036 = vmatprep.subr.mxu0 %v2973
        %3037 = vmatpush1.msra.mxu0 %v2972
        %3038 = vmatprep.subr.mxu0 %v2975
        %3039 = vmatpush1.msra.mxu0 %v2974
        %3040 = vmatprep.subr.mxu0 %v2977
        %3041 = vmatpush1.msra.mxu0 %v2976
        %3042 = vmatprep.subr.mxu0 %v2979
        %3043 = vmatpush1.msra.mxu0 %v2978
        %3044 = vmatprep.subr.mxu0 %v2981
        %3045 = vmatpush1.msra.mxu0 %v2980
        %3046 = vmatprep.subr.mxu0 %v2983
        %3047 = vmatpush1.msra.mxu0 %v2982
        %3048 = vmatprep.subr.mxu0 %v2985
        %3049 = vmatpush1.msra.mxu0 %v2984
        %3050 = vmatprep.subr.mxu0 %v2987
        %3051 = vmatpush1.msra.mxu0 %v2986
        %3052 = vmatprep.subr.mxu0 %v2989
        %3053 = vmatpush1.msra.mxu0 %v2988
        %3054 = vmatprep.subr.mxu0 %v2991
        %3055 = vmatpush1.msra.mxu0 %v2990
        %3056 = vmatprep.subr.mxu0 %v2993
        %3057 = vmatpush1.msra.mxu0 %v2992
        %3058 = vmatprep.subr.mxu0 %v2995
        %3059 = vmatpush1.msra.mxu0 %v2994
        %3060 = vmatprep.subr.mxu0 %v2997
        %3061 = vmatpush1.msra.mxu0 %v2996
        %3062 = vmatprep.subr.mxu0 %v2999
        %3063 = vmatpush1.msra.mxu0 %v2998
        %3064 = vmatprep.subr.mxu0 %v3001
        %3065 = vmatpush1.msra.mxu0 %v3000
        %3066 = vmatprep.subr.mxu0 %v3003
        %3067 = vmatpush1.msra.mxu0 %v3002
        %3068 = vmatprep.subr.mxu0 %v3005
        %3069 = vmatpush1.msra.mxu0 %v3004
        %3070 = vmatprep.subr.mxu0 %v3007
        %3071 = vmatpush1.msra.mxu0 %v3006
        %3072 = vmatprep.subr.mxu0 %v3009
        %3073 = vmatpush1.msra.mxu0 %v3008
        %3074 = vmatprep.subr.mxu0 %v3011
        %3075 = vmatpush1.msra.mxu0 %v3010
        %3076 = vmatprep.subr.mxu0 %v3013
        %3077 = vmatpush1.msra.mxu0 %v3012
        %3078 = vmatprep.subr.mxu0 %v3015
        %3079 = vmatpush1.msra.mxu0 %v3014
        %3080 = vmatprep.subr.mxu0 %v3017
        %3081 = vmatpush1.msra.mxu0 %v3016
        %3082 = vmatprep.subr.mxu0 %v3019
        %3083 = vmatpush1.msra.mxu0 %v3018
        %3084 = vmatprep.subr.mxu0 %v3021
        %3085 = vmatpush1.msra.mxu0 %v3020
        %3086 = vmatprep.subr.mxu0 %v3023
        %3087 = vmatpush1.msra.mxu0 %v3022
        %3088 = vmatprep.mubr.f32.mxu0 %v2956
        %3089 = vmatmul.mubr.f32.gmra.mrb[0].mxu0 %v2954
        %v3090 = vpop.f32.mrb[0].mxu0
        %v3091 = vadd.f32 0.0, %v3090
        %v3092 = vpop.f32.mrb[0].mxu0
        %v3093 = vadd.f32 0.0, %v3092
        %3094 = vdwg.mxu0
        %v3095 = vsub.f32 %v2954, %v3091
        %v3096 = vsub.f32 %v2956, %v3093
        %v3097 = vmul.f32 %v3095, %v3095
        %v3098 = vmul.f32 %v3096, %v3096
        %3099 = vmatprep.subr.mxu0 %v2961
        %3100 = vmatpush1.msra.mxu0 %v2960
        %3101 = vmatprep.subr.mxu0 %v2963
        %3102 = vmatpush1.msra.mxu0 %v2962
        %3103 = vmatprep.subr.mxu0 %v2965
        %3104 = vmatpush1.msra.mxu0 %v2964
        %3105 = vmatprep.subr.mxu0 %v2967
        %3106 = vmatpush1.msra.mxu0 %v2966
        %3107 = vmatprep.subr.mxu0 %v2969
        %3108 = vmatpush1.msra.mxu0 %v2968
        %3109 = vmatprep.subr.mxu0 %v2971
        %3110 = vmatpush1.msra.mxu0 %v2970
        %3111 = vmatprep.subr.mxu0 %v2973
        %3112 = vmatpush1.msra.mxu0 %v2972
        %3113 = vmatprep.subr.mxu0 %v2975
        %3114 = vmatpush1.msra.mxu0 %v2974
        %3115 = vmatprep.subr.mxu0 %v2977
        %3116 = vmatpush1.msra.mxu0 %v2976
        %3117 = vmatprep.subr.mxu0 %v2979
        %3118 = vmatpush1.msra.mxu0 %v2978
        %3119 = vmatprep.subr.mxu0 %v2981
        %3120 = vmatpush1.msra.mxu0 %v2980
        %3121 = vmatprep.subr.mxu0 %v2983
        %3122 = vmatpush1.msra.mxu0 %v2982
        %3123 = vmatprep.subr.mxu0 %v2985
        %3124 = vmatpush1.msra.mxu0 %v2984
        %3125 = vmatprep.subr.mxu0 %v2987
        %3126 = vmatpush1.msra.mxu0 %v2986
        %3127 = vmatprep.subr.mxu0 %v2989
        %3128 = vmatpush1.msra.mxu0 %v2988
        %3129 = vmatprep.subr.mxu0 %v2991
        %3130 = vmatpush1.msra.mxu0 %v2990
        %3131 = vmatprep.subr.mxu0 %v2993
        %3132 = vmatpush1.msra.mxu0 %v2992
        %3133 = vmatprep.subr.mxu0 %v2995
        %3134 = vmatpush1.msra.mxu0 %v2994
        %3135 = vmatprep.subr.mxu0 %v2997
        %3136 = vmatpush1.msra.mxu0 %v2996
        %3137 = vmatprep.subr.mxu0 %v2999
        %3138 = vmatpush1.msra.mxu0 %v2998
        %3139 = vmatprep.subr.mxu0 %v3001
        %3140 = vmatpush1.msra.mxu0 %v3000
        %3141 = vmatprep.subr.mxu0 %v3003
        %3142 = vmatpush1.msra.mxu0 %v3002
        %3143 = vmatprep.subr.mxu0 %v3005
        %3144 = vmatpush1.msra.mxu0 %v3004
        %3145 = vmatprep.subr.mxu0 %v3007
        %3146 = vmatpush1.msra.mxu0 %v3006
        %3147 = vmatprep.subr.mxu0 %v3009
        %3148 = vmatpush1.msra.mxu0 %v3008
        %3149 = vmatprep.subr.mxu0 %v3011
        %3150 = vmatpush1.msra.mxu0 %v3010
        %3151 = vmatprep.subr.mxu0 %v3013
        %3152 = vmatpush1.msra.mxu0 %v3012
        %3153 = vmatprep.subr.mxu0 %v3015
        %3154 = vmatpush1.msra.mxu0 %v3014
        %3155 = vmatprep.subr.mxu0 %v3017
        %3156 = vmatpush1.msra.mxu0 %v3016
        %3157 = vmatprep.subr.mxu0 %v3019
        %3158 = vmatpush1.msra.mxu0 %v3018
        %3159 = vmatprep.subr.mxu0 %v3021
        %3160 = vmatpush1.msra.mxu0 %v3020
        %3161 = vmatprep.subr.mxu0 %v3023
        %3162 = vmatpush1.msra.mxu0 %v3022
        %3163 = vmatprep.mubr.f32.mxu0 %v3098
        %3164 = vmatmul.mubr.f32.gmra.mrb[0].mxu0 %v3097
        %v3165 = vpop.f32.mrb[0].mxu0
        %v3166 = vadd.f32 1e-05, %v3165
        %v3167 = vpop.f32.mrb[0].mxu0
        %v3168 = vadd.f32 1e-05, %v3167
        %3169 = vdwg.mxu0
        %v3170 = vrsqrt.pop %v3166
        %v3171 = vrsqrt.pop %v3168
        %v3172 = vmul.f32 %v3095, %v3170
        %v3173 = vmul.f32 %v3096, %v3171
        %v3174 = vld [vmem:[%s6] sm:$0x3]
        %v3176 = vlaneseq
        %v3177 = vshrl.u32 %v3176, 7
        %v3178 = vsub.s32 0, %v3177
        %v3179 = vrot.slane %v3174, %v3178
        %v3180 = vlaneseq
        %v3181 = vshrl.u32 %v3180, 7
        %v3182 = vsub.s32 1, %v3181
        %v3183 = vrot.slane %v3174, %v3182
        %v3186 = vmul.f32 %v3172, %v3179
        %v3187 = vmul.f32 %v3173, %v3183
        %v3188 = vld [vmem:[%s7] sm:$0x3]
        %v3190 = vlaneseq
        %v3191 = vshrl.u32 %v3190, 7
        %v3192 = vsub.s32 0, %v3191
        %v3193 = vrot.slane %v3188, %v3192
        %v3194 = vlaneseq
        %v3195 = vshrl.u32 %v3194, 7
        %v3196 = vsub.s32 1, %v3195
        %v3197 = vrot.slane %v3188, %v3196
        %v3200 = vadd.f32 %v3186, %v3193
        %v3201 = vadd.f32 %v3187, %v3197
        %vm3202 = vcmp.ge.f32.partialorder %v3200, 0.0
        %vm3203 = vcmp.ge.f32.partialorder %v3201, 0.0
        %v3204 = vmul.f32 %v3200, 0.1
        %v3205 = vmul.f32 %v3201, 0.1
        %v3206 = vsel %vm3202, %v3200, %v3204
        %v3207 = vsel %vm3203, %v3201, %v3205
        %v3208 = vpack.c.bf16 %v3206, %v3206
        %v3209 = vpack.c.bf16 %v3207, %v3207
        %v3210 = vld [vmem:[%s8] sm:$0xff]
        %v3211 = vld [vmem:[%s8 + $0x8] sm:$0xf]
        %v3212 = vld [vmem:[%s8 + $0xc] sm:$0xff]
        %v3213 = vld [vmem:[%s8 + $0x14] sm:$0xf]
        %v3214 = vld [vmem:[%s8 + $0x18] sm:$0xff]
        %v3215 = vld [vmem:[%s8 + $0x20] sm:$0xf]
        %v3216 = vld [vmem:[%s8 + $0x24] sm:$0xff]
        %v3217 = vld [vmem:[%s8 + $0x2c] sm:$0xf]
        %v3218 = vld [vmem:[%s8 + $0x30] sm:$0xff]
        %v3219 = vld [vmem:[%s8 + $0x38] sm:$0xf]
        %v3220 = vld [vmem:[%s8 + $0x3c] sm:$0xff]
        %v3221 = vld [vmem:[%s8 + $0x44] sm:$0xf]
        %v3222 = vld [vmem:[%s8 + $0x48] sm:$0xff]
        %v3223 = vld [vmem:[%s8 + $0x50] sm:$0xf]
        %v3224 = vld [vmem:[%s8 + $0x54] sm:$0xff]
        %v3225 = vld [vmem:[%s8 + $0x5c] sm:$0xf]
        %v3226 = vld [vmem:[%s8 + $0x60] sm:$0xff]
        %v3227 = vld [vmem:[%s8 + $0x68] sm:$0xf]
        %v3228 = vld [vmem:[%s8 + $0x6c] sm:$0xff]
        %v3229 = vld [vmem:[%s8 + $0x74] sm:$0xf]
        %v3230 = vld [vmem:[%s8 + $0x78] sm:$0xff]
        %v3231 = vld [vmem:[%s8 + $0x80] sm:$0xf]
        %v3232 = vld [vmem:[%s8 + $0x84] sm:$0xff]
        %v3233 = vld [vmem:[%s8 + $0x8c] sm:$0xf]
        %v3234 = vld [vmem:[%s8 + $0x90] sm:$0xff]
        %v3235 = vld [vmem:[%s8 + $0x98] sm:$0xf]
        %v3236 = vld [vmem:[%s8 + $0x9c] sm:$0xff]
        %v3237 = vld [vmem:[%s8 + $0xa4] sm:$0xf]
        %v3238 = vld [vmem:[%s8 + $0xa8] sm:$0xff]
        %v3239 = vld [vmem:[%s8 + $0xb0] sm:$0xf]
        %v3240 = vld [vmem:[%s8 + $0xb4] sm:$0xff]
        %v3241 = vld [vmem:[%s8 + $0xbc] sm:$0xf]
        %v3242 = vld [vmem:[%s8 + $0xc0] sm:$0xff]
        %v3243 = vld [vmem:[%s8 + $0xc8] sm:$0xf]
        %v3244 = vld [vmem:[%s8 + $0xcc] sm:$0xff]
        %v3245 = vld [vmem:[%s8 + $0xd4] sm:$0xf]
        %v3246 = vld [vmem:[%s8 + $0xd8] sm:$0xff]
        %v3247 = vld [vmem:[%s8 + $0xe0] sm:$0xf]
        %v3248 = vld [vmem:[%s8 + $0xe4] sm:$0xff]
        %v3249 = vld [vmem:[%s8 + $0xec] sm:$0xf]
        %v3250 = vld [vmem:[%s8 + $0xf0] sm:$0xff]
        %v3251 = vld [vmem:[%s8 + $0xf8] sm:$0xf]
        %v3252 = vld [vmem:[%s8 + $0xfc] sm:$0xff]
        %v3253 = vld [vmem:[%s8 + $0x104] sm:$0xf]
        %v3254 = vld [vmem:[%s8 + $0x108] sm:$0xff]
        %v3255 = vld [vmem:[%s8 + $0x110] sm:$0xf]
        %v3256 = vld [vmem:[%s8 + $0x114] sm:$0xff]
        %v3257 = vld [vmem:[%s8 + $0x11c] sm:$0xf]
        %v3258 = vld [vmem:[%s8 + $0x120] sm:$0xff]
        %v3259 = vld [vmem:[%s8 + $0x128] sm:$0xf]
        %v3260 = vld [vmem:[%s8 + $0x12c] sm:$0xff]
        %v3261 = vld [vmem:[%s8 + $0x134] sm:$0xf]
        %v3262 = vld [vmem:[%s8 + $0x138] sm:$0xff]
        %v3263 = vld [vmem:[%s8 + $0x140] sm:$0xf]
        %v3264 = vld [vmem:[%s8 + $0x144] sm:$0xff]
        %v3265 = vld [vmem:[%s8 + $0x14c] sm:$0xf]
        %v3266 = vld [vmem:[%s8 + $0x150] sm:$0xff]
        %v3267 = vld [vmem:[%s8 + $0x158] sm:$0xf]
        %v3268 = vld [vmem:[%s8 + $0x15c] sm:$0xff]
        %v3269 = vld [vmem:[%s8 + $0x164] sm:$0xf]
        %v3270 = vld [vmem:[%s8 + $0x168] sm:$0xff]
        %v3271 = vld [vmem:[%s8 + $0x170] sm:$0xf]
        %v3272 = vld [vmem:[%s8 + $0x174] sm:$0xff]
        %v3273 = vld [vmem:[%s8 + $0x17c] sm:$0xf]
        %v3274 = vld [vmem:[%s9] sm:$0x7]
        %v3339 = vunpack.c.l.b16 %v3210
        %v3340 = vunpack.c.h.b16 %v3210
        %v3341 = vunpack.c.l.b16 %v3211
        %v3342 = vunpack.c.l.b16 %v3212
        %v3343 = vunpack.c.h.b16 %v3212
        %v3344 = vunpack.c.l.b16 %v3213
        %v3345 = vunpack.c.l.b16 %v3214
        %v3346 = vunpack.c.h.b16 %v3214
        %v3347 = vunpack.c.l.b16 %v3215
        %v3348 = vunpack.c.l.b16 %v3216
        %v3349 = vunpack.c.h.b16 %v3216
        %v3350 = vunpack.c.l.b16 %v3217
        %v3351 = vunpack.c.l.b16 %v3218
        %v3352 = vunpack.c.h.b16 %v3218
        %v3353 = vunpack.c.l.b16 %v3219
        %v3354 = vunpack.c.l.b16 %v3220
        %v3355 = vunpack.c.h.b16 %v3220
        %v3356 = vunpack.c.l.b16 %v3221
        %v3357 = vunpack.c.l.b16 %v3222
        %v3358 = vunpack.c.h.b16 %v3222
        %v3359 = vunpack.c.l.b16 %v3223
        %v3360 = vunpack.c.l.b16 %v3224
        %v3361 = vunpack.c.h.b16 %v3224
        %v3362 = vunpack.c.l.b16 %v3225
        %v3363 = vunpack.c.l.b16 %v3226
        %v3364 = vunpack.c.h.b16 %v3226
        %v3365 = vunpack.c.l.b16 %v3227
        %v3366 = vunpack.c.l.b16 %v3228
        %v3367 = vunpack.c.h.b16 %v3228
        %v3368 = vunpack.c.l.b16 %v3229
        %v3369 = vunpack.c.l.b16 %v3230
        %v3370 = vunpack.c.h.b16 %v3230
        %v3371 = vunpack.c.l.b16 %v3231
        %v3372 = vunpack.c.l.b16 %v3232
        %v3373 = vunpack.c.h.b16 %v3232
        %v3374 = vunpack.c.l.b16 %v3233
        %v3375 = vunpack.c.l.b16 %v3234
        %v3376 = vunpack.c.h.b16 %v3234
        %v3377 = vunpack.c.l.b16 %v3235
        %v3378 = vunpack.c.l.b16 %v3236
        %v3379 = vunpack.c.h.b16 %v3236
        %v3380 = vunpack.c.l.b16 %v3237
        %v3381 = vunpack.c.l.b16 %v3238
        %v3382 = vunpack.c.h.b16 %v3238
        %v3383 = vunpack.c.l.b16 %v3239
        %v3384 = vunpack.c.l.b16 %v3240
        %v3385 = vunpack.c.h.b16 %v3240
        %v3386 = vunpack.c.l.b16 %v3241
        %v3387 = vunpack.c.l.b16 %v3242
        %v3388 = vunpack.c.h.b16 %v3242
        %v3389 = vunpack.c.l.b16 %v3243
        %v3390 = vunpack.c.l.b16 %v3244
        %v3391 = vunpack.c.h.b16 %v3244
        %v3392 = vunpack.c.l.b16 %v3245
        %v3393 = vunpack.c.l.b16 %v3246
        %v3394 = vunpack.c.h.b16 %v3246
        %v3395 = vunpack.c.l.b16 %v3247
        %v3396 = vunpack.c.l.b16 %v3248
        %v3397 = vunpack.c.h.b16 %v3248
        %v3398 = vunpack.c.l.b16 %v3249
        %v3399 = vunpack.c.l.b16 %v3250
        %v3400 = vunpack.c.h.b16 %v3250
        %v3401 = vunpack.c.l.b16 %v3251
        %v3402 = vunpack.c.l.b16 %v3252
        %v3403 = vunpack.c.h.b16 %v3252
        %v3404 = vunpack.c.l.b16 %v3253
        %v3405 = vunpack.c.l.b16 %v3254
        %v3406 = vunpack.c.h.b16 %v3254
        %v3407 = vunpack.c.l.b16 %v3255
        %v3408 = vunpack.c.l.b16 %v3256
        %v3409 = vunpack.c.h.b16 %v3256
        %v3410 = vunpack.c.l.b16 %v3257
        %v3411 = vunpack.c.l.b16 %v3258
        %v3412 = vunpack.c.h.b16 %v3258
        %v3413 = vunpack.c.l.b16 %v3259
        %v3414 = vunpack.c.l.b16 %v3260
        %v3415 = vunpack.c.h.b16 %v3260
        %v3416 = vunpack.c.l.b16 %v3261
        %v3417 = vunpack.c.l.b16 %v3262
        %v3418 = vunpack.c.h.b16 %v3262
        %v3419 = vunpack.c.l.b16 %v3263
        %v3420 = vunpack.c.l.b16 %v3264
        %v3421 = vunpack.c.h.b16 %v3264
        %v3422 = vunpack.c.l.b16 %v3265
        %v3423 = vunpack.c.l.b16 %v3266
        %v3424 = vunpack.c.h.b16 %v3266
        %v3425 = vunpack.c.l.b16 %v3267
        %v3426 = vunpack.c.l.b16 %v3268
        %v3427 = vunpack.c.h.b16 %v3268
        %v3428 = vunpack.c.l.b16 %v3269
        %v3429 = vunpack.c.l.b16 %v3270
        %v3430 = vunpack.c.h.b16 %v3270
        %v3431 = vunpack.c.l.b16 %v3271
        %v3432 = vunpack.c.l.b16 %v3272
        %v3433 = vunpack.c.h.b16 %v3272
        %v3434 = vunpack.c.l.b16 %v3273
        %v3435 = vpack.c.b16 %v3342, %v3339
        %v3436 = vpack.c.b16 %v3343, %v3340
        %v3437 = vpack.c.b16 %v3344, %v3341
        %v3438 = vpack.c.b16 %v3348, %v3345
        %v3439 = vpack.c.b16 %v3349, %v3346
        %v3440 = vpack.c.b16 %v3350, %v3347
        %v3441 = vpack.c.b16 %v3354, %v3351
        %v3442 = vpack.c.b16 %v3355, %v3352
        %v3443 = vpack.c.b16 %v3356, %v3353
        %v3444 = vpack.c.b16 %v3360, %v3357
        %v3445 = vpack.c.b16 %v3361, %v3358
        %v3446 = vpack.c.b16 %v3362, %v3359
        %v3447 = vpack.c.b16 %v3366, %v3363
        %v3448 = vpack.c.b16 %v3367, %v3364
        %v3449 = vpack.c.b16 %v3368, %v3365
        %v3450 = vpack.c.b16 %v3372, %v3369
        %v3451 = vpack.c.b16 %v3373, %v3370
        %v3452 = vpack.c.b16 %v3374, %v3371
        %v3453 = vpack.c.b16 %v3378, %v3375
        %v3454 = vpack.c.b16 %v3379, %v3376
        %v3455 = vpack.c.b16 %v3380, %v3377
        %v3456 = vpack.c.b16 %v3384, %v3381
        %v3457 = vpack.c.b16 %v3385, %v3382
        %v3458 = vpack.c.b16 %v3386, %v3383
        %v3459 = vpack.c.b16 %v3390, %v3387
        %v3460 = vpack.c.b16 %v3391, %v3388
        %v3461 = vpack.c.b16 %v3392, %v3389
        %v3462 = vpack.c.b16 %v3396, %v3393
        %v3463 = vpack.c.b16 %v3397, %v3394
        %v3464 = vpack.c.b16 %v3398, %v3395
        %v3465 = vpack.c.b16 %v3402, %v3399
        %v3466 = vpack.c.b16 %v3403, %v3400
        %v3467 = vpack.c.b16 %v3404, %v3401
        %v3468 = vpack.c.b16 %v3408, %v3405
        %v3469 = vpack.c.b16 %v3409, %v3406
        %v3470 = vpack.c.b16 %v3410, %v3407
        %v3471 = vpack.c.b16 %v3414, %v3411
        %v3472 = vpack.c.b16 %v3415, %v3412
        %v3473 = vpack.c.b16 %v3416, %v3413
        %v3474 = vpack.c.b16 %v3420, %v3417
        %v3475 = vpack.c.b16 %v3421, %v3418
        %v3476 = vpack.c.b16 %v3422, %v3419
        %v3477 = vpack.c.b16 %v3426, %v3423
        %v3478 = vpack.c.b16 %v3427, %v3424
        %v3479 = vpack.c.b16 %v3428, %v3425
        %v3480 = vpack.c.b16 %v3432, %v3429
        %v3481 = vpack.c.b16 %v3433, %v3430
        %v3482 = vpack.c.b16 %v3434, %v3431
        %v3532 = vlaneseq
        %v3533 = vshrl.u32 %v3532, 7
        %v3534 = vsub.s32 0, %v3533
        %v3535 = vrot.slane %v3274, %v3534
        %v3536 = vlaneseq
        %v3537 = vshrl.u32 %v3536, 7
        %v3538 = vsub.s32 1, %v3537
        %v3539 = vrot.slane %v3274, %v3538
        %v3540 = vlaneseq
        %v3541 = vshrl.u32 %v3540, 7
        %v3542 = vsub.s32 2, %v3541
        %v3543 = vrot.slane %v3274, %v3542
        %3547 = vmatprep.subr.bf16.mxu0 %v3436
        %3548 = vmatpush1.bf16.msra.mxu0 %v3435
        %3549 = vmatprep.subr.bf16.mxu0 %v3439
        %3550 = vmatpush1.bf16.msra.mxu0 %v3438
        %3551 = vmatprep.subr.bf16.mxu0 %v3442
        %3552 = vmatpush1.bf16.msra.mxu0 %v3441
        %3553 = vmatprep.subr.bf16.mxu0 %v3445
        %3554 = vmatpush1.bf16.msra.mxu0 %v3444
        %3555 = vmatprep.subr.bf16.mxu0 %v3448
        %3556 = vmatpush1.bf16.msra.mxu0 %v3447
        %3557 = vmatprep.subr.bf16.mxu0 %v3451
        %3558 = vmatpush1.bf16.msra.mxu0 %v3450
        %3559 = vmatprep.subr.bf16.mxu0 %v3454
        %3560 = vmatpush1.bf16.msra.mxu0 %v3453
        %3561 = vmatprep.subr.bf16.mxu0 %v3457
        %3562 = vmatpush1.bf16.msra.mxu0 %v3456
        %3563 = vmatprep.subr.bf16.mxu0 %v3460
        %3564 = vmatpush1.bf16.msra.mxu0 %v3459
        %3565 = vmatprep.subr.bf16.mxu0 %v3463
        %3566 = vmatpush1.bf16.msra.mxu0 %v3462
        %3567 = vmatprep.subr.bf16.mxu0 %v3466
        %3568 = vmatpush1.bf16.msra.mxu0 %v3465
        %3569 = vmatprep.subr.bf16.mxu0 %v3469
        %3570 = vmatpush1.bf16.msra.mxu0 %v3468
        %3571 = vmatprep.subr.bf16.mxu0 %v3472
        %3572 = vmatpush1.bf16.msra.mxu0 %v3471
        %3573 = vmatprep.subr.bf16.mxu0 %v3475
        %3574 = vmatpush1.bf16.msra.mxu0 %v3474
        %3575 = vmatprep.subr.bf16.mxu0 %v3478
        %3576 = vmatpush1.bf16.msra.mxu0 %v3477
        %3577 = vmatprep.subr.bf16.mxu0 %v3481
        %3578 = vmatpush1.bf16.msra.mxu0 %v3480
        %3579 = vmatprep.mubr.bf16.mxu0 %v3209
        %3580 = vmatmul.mubr.bf16.gmra.mrb[0].mxu0 %v3208
        %v3581 = vpop.f32.mrb[0].mxu0
        %v3582 = vadd.f32 %v3535, %v3581
        %v3583 = vpop.f32.mrb[0].mxu0
        %v3584 = vadd.f32 %v3539, %v3583
        %v3585 = vpop.f32.mrb[0].mxu0
        %v3586 = vpop.f32.mrb[0].mxu0
        %3587 = vdwg.mxu0
        %3588 = vmatprep.subr.bf16.mxu0 0
        %3589 = vmatpush1.bf16.msra.mxu0 %v3437
        %3590 = vmatprep.subr.bf16.mxu0 0
        %3591 = vmatpush1.bf16.msra.mxu0 %v3440
        %3592 = vmatprep.subr.bf16.mxu0 0
        %3593 = vmatpush1.bf16.msra.mxu0 %v3443
        %3594 = vmatprep.subr.bf16.mxu0 0
        %3595 = vmatpush1.bf16.msra.mxu0 %v3446
        %3596 = vmatprep.subr.bf16.mxu0 0
        %3597 = vmatpush1.bf16.msra.mxu0 %v3449
        %3598 = vmatprep.subr.bf16.mxu0 0
        %3599 = vmatpush1.bf16.msra.mxu0 %v3452
        %3600 = vmatprep.subr.bf16.mxu0 0
        %3601 = vmatpush1.bf16.msra.mxu0 %v3455
        %3602 = vmatprep.subr.bf16.mxu0 0
        %3603 = vmatpush1.bf16.msra.mxu0 %v3458
        %3604 = vmatprep.subr.bf16.mxu0 0
        %3605 = vmatpush1.bf16.msra.mxu0 %v3461
        %3606 = vmatprep.subr.bf16.mxu0 0
        %3607 = vmatpush1.bf16.msra.mxu0 %v3464
        %3608 = vmatprep.subr.bf16.mxu0 0
        %3609 = vmatpush1.bf16.msra.mxu0 %v3467
        %3610 = vmatprep.subr.bf16.mxu0 0
        %3611 = vmatpush1.bf16.msra.mxu0 %v3470
        %3612 = vmatprep.subr.bf16.mxu0 0
        %3613 = vmatpush1.bf16.msra.mxu0 %v3473
        %3614 = vmatprep.subr.bf16.mxu0 0
        %3615 = vmatpush1.bf16.msra.mxu0 %v3476
        %3616 = vmatprep.subr.bf16.mxu0 0
        %3617 = vmatpush1.bf16.msra.mxu0 %v3479
        %3618 = vmatprep.subr.bf16.mxu0 0
        %3619 = vmatpush1.bf16.msra.mxu0 %v3482
        %3620 = vmatprep.mubr.bf16.mxu0 %v3209
        %3621 = vmatmul.mubr.bf16.gmra.mrb[0].mxu0 %v3208
        %v3622 = vpop.f32.mrb[0].mxu0
        %v3623 = vadd.f32 %v3543, %v3622
        %v3624 = vpop.f32.mrb[0].mxu0
        %v3625 = vpop.f32.mrb[0].mxu0
        %v3626 = vpop.f32.mrb[0].mxu0
        %3627 = vdwg.mxu0
        %v3628 = vld [vmem:[%s10] sm:$0xff]
        %v3629 = vld [vmem:[%s10 + $0x8] sm:$0xff]
        %v3630 = vld [vmem:[%s10 + $0x10] sm:$0xff]
        %v3631 = vld [vmem:[%s10 + $0x18] sm:$0xff]
        %v3632 = vld [vmem:[%s10 + $0x20] sm:$0xff]
        %v3633 = vld [vmem:[%s10 + $0x28] sm:$0xff]
        %v3634 = vld [vmem:[%s10 + $0x30] sm:$0xff]
        %v3635 = vld [vmem:[%s10 + $0x38] sm:$0xff]
        %v3636 = vld [vmem:[%s10 + $0x40] sm:$0xff]
        %v3637 = vld [vmem:[%s10 + $0x48] sm:$0xff]
        %v3638 = vld [vmem:[%s10 + $0x50] sm:$0xff]
        %v3639 = vld [vmem:[%s10 + $0x58] sm:$0xff]
        %v3640 = vld [vmem:[%s10 + $0x60] sm:$0xff]
        %v3641 = vld [vmem:[%s10 + $0x68] sm:$0xff]
        %v3642 = vld [vmem:[%s10 + $0x70] sm:$0xff]
        %v3643 = vld [vmem:[%s10 + $0x78] sm:$0xff]
        %v3644 = vld [vmem:[%s10 + $0x80] sm:$0xff]
        %v3645 = vld [vmem:[%s10 + $0x88] sm:$0xff]
        %v3646 = vld [vmem:[%s10 + $0x90] sm:$0xff]
        %v3647 = vld [vmem:[%s10 + $0x98] sm:$0xff]
        %v3648 = vld [vmem:[%s10 + $0xa0] sm:$0xff]
        %v3649 = vld [vmem:[%s10 + $0xa8] sm:$0xff]
        %v3650 = vld [vmem:[%s10 + $0xb0] sm:$0xff]
        %v3651 = vld [vmem:[%s10 + $0xb8] sm:$0xff]
        %v3652 = vld [vmem:[%s10 + $0xc0] sm:$0xff]
        %v3653 = vld [vmem:[%s10 + $0xc8] sm:$0xff]
        %v3654 = vld [vmem:[%s10 + $0xd0] sm:$0xff]
        %v3655 = vld [vmem:[%s10 + $0xd8] sm:$0xff]
        %v3656 = vld [vmem:[%s10 + $0xe0] sm:$0xff]
        %v3657 = vld [vmem:[%s10 + $0xe8] sm:$0xff]
        %v3658 = vld [vmem:[%s10 + $0xf0] sm:$0xff]
        %v3659 = vld [vmem:[%s10 + $0xf8] sm:$0xff]
        %v3660 = vld [vmem:[%s10 + $0x100] sm:$0xff]
        %v3661 = vld [vmem:[%s10 + $0x108] sm:$0xff]
        %v3662 = vld [vmem:[%s10 + $0x110] sm:$0xff]
        %v3663 = vld [vmem:[%s10 + $0x118] sm:$0xff]
        %v3664 = vld [vmem:[%s10 + $0x120] sm:$0xff]
        %v3665 = vld [vmem:[%s10 + $0x128] sm:$0xff]
        %v3666 = vld [vmem:[%s10 + $0x130] sm:$0xff]
        %v3667 = vld [vmem:[%s10 + $0x138] sm:$0xff]
        %v3668 = vld [vmem:[%s10 + $0x140] sm:$0xff]
        %v3669 = vld [vmem:[%s10 + $0x148] sm:$0xff]
        %v3670 = vld [vmem:[%s10 + $0x150] sm:$0xff]
        %v3671 = vld [vmem:[%s10 + $0x158] sm:$0xff]
        %v3672 = vld [vmem:[%s10 + $0x160] sm:$0xff]
        %v3673 = vld [vmem:[%s10 + $0x168] sm:$0xff]
        %v3674 = vld [vmem:[%s10 + $0x170] sm:$0xff]
        %v3675 = vld [vmem:[%s10 + $0x178] sm:$0xff]
        %v3676 = vld [vmem:[%s10 + $0x180] sm:$0xff]
        %v3677 = vld [vmem:[%s10 + $0x188] sm:$0xff]
        %v3678 = vld [vmem:[%s10 + $0x190] sm:$0xff]
        %v3679 = vld [vmem:[%s10 + $0x198] sm:$0xff]
        %v3680 = vld [vmem:[%s10 + $0x1a0] sm:$0xff]
        %v3681 = vld [vmem:[%s10 + $0x1a8] sm:$0xff]
        %v3682 = vld [vmem:[%s10 + $0x1b0] sm:$0xff]
        %v3683 = vld [vmem:[%s10 + $0x1b8] sm:$0xff]
        %v3684 = vld [vmem:[%s10 + $0x1c0] sm:$0xff]
        %v3685 = vld [vmem:[%s10 + $0x1c8] sm:$0xff]
        %v3686 = vld [vmem:[%s10 + $0x1d0] sm:$0xff]
        %v3687 = vld [vmem:[%s10 + $0x1d8] sm:$0xff]
        %v3688 = vld [vmem:[%s10 + $0x1e0] sm:$0xff]
        %v3689 = vld [vmem:[%s10 + $0x1e8] sm:$0xff]
        %v3690 = vld [vmem:[%s10 + $0x1f0] sm:$0xff]
        %v3691 = vld [vmem:[%s10 + $0x1f8] sm:$0xff]
        %v3692 = vld [vmem:[%s10 + $0x200] sm:$0xff]
        %v3693 = vld [vmem:[%s10 + $0x208] sm:$0xff]
        %v3694 = vld [vmem:[%s10 + $0x210] sm:$0xff]
        %v3695 = vld [vmem:[%s10 + $0x218] sm:$0xff]
        %v3696 = vld [vmem:[%s10 + $0x220] sm:$0xff]
        %v3697 = vld [vmem:[%s10 + $0x228] sm:$0xff]
        %v3698 = vld [vmem:[%s10 + $0x230] sm:$0xff]
        %v3699 = vld [vmem:[%s10 + $0x238] sm:$0xff]
        %v3700 = vld [vmem:[%s10 + $0x240] sm:$0xff]
        %v3701 = vld [vmem:[%s10 + $0x248] sm:$0xff]
        %v3702 = vld [vmem:[%s10 + $0x250] sm:$0xff]
        %v3703 = vld [vmem:[%s10 + $0x258] sm:$0xff]
        %v3704 = vld [vmem:[%s10 + $0x260] sm:$0xff]
        %v3705 = vld [vmem:[%s10 + $0x268] sm:$0xff]
        %v3706 = vld [vmem:[%s10 + $0x270] sm:$0xff]
        %v3707 = vld [vmem:[%s10 + $0x278] sm:$0xff]
        %v3708 = vld [vmem:[%s10 + $0x280] sm:$0xff]
        %v3709 = vld [vmem:[%s10 + $0x288] sm:$0xff]
        %v3710 = vld [vmem:[%s10 + $0x290] sm:$0xff]
        %v3711 = vld [vmem:[%s10 + $0x298] sm:$0xff]
        %v3712 = vld [vmem:[%s10 + $0x2a0] sm:$0xff]
        %v3713 = vld [vmem:[%s10 + $0x2a8] sm:$0xff]
        %v3714 = vld [vmem:[%s10 + $0x2b0] sm:$0xff]
        %v3715 = vld [vmem:[%s10 + $0x2b8] sm:$0xff]
        %v3716 = vld [vmem:[%s10 + $0x2c0] sm:$0xff]
        %v3717 = vld [vmem:[%s10 + $0x2c8] sm:$0xff]
        %v3718 = vld [vmem:[%s10 + $0x2d0] sm:$0xff]
        %v3719 = vld [vmem:[%s10 + $0x2d8] sm:$0xff]
        %v3720 = vld [vmem:[%s10 + $0x2e0] sm:$0xff]
        %v3721 = vld [vmem:[%s10 + $0x2e8] sm:$0xff]
        %v3722 = vld [vmem:[%s10 + $0x2f0] sm:$0xff]
        %v3723 = vld [vmem:[%s10 + $0x2f8] sm:$0xff]
        %v3724 = vld [vmem:[%s10 + $0x300] sm:$0xff]
        %v3725 = vld [vmem:[%s10 + $0x308] sm:$0xff]
        %v3726 = vld [vmem:[%s10 + $0x310] sm:$0xff]
        %v3727 = vld [vmem:[%s10 + $0x318] sm:$0xff]
        %v3728 = vld [vmem:[%s10 + $0x320] sm:$0xff]
        %v3729 = vld [vmem:[%s10 + $0x328] sm:$0xff]
        %v3730 = vld [vmem:[%s10 + $0x330] sm:$0xff]
        %v3731 = vld [vmem:[%s10 + $0x338] sm:$0xff]
        %v3732 = vld [vmem:[%s10 + $0x340] sm:$0xff]
        %v3733 = vld [vmem:[%s10 + $0x348] sm:$0xff]
        %v3734 = vld [vmem:[%s10 + $0x350] sm:$0xff]
        %v3735 = vld [vmem:[%s10 + $0x358] sm:$0xff]
        %vm3736 = vcmask 261120
        %v3738 = vsel %vm3736, %v3623, 0
        %3740 = vmatprep.subr.mxu0 %v3629
        %3741 = vmatpush1.msra.mxu0 %v3628
        %3742 = vmatprep.subr.mxu0 %v3632
        %3743 = vmatpush1.msra.mxu0 %v3631
        %3744 = vmatprep.subr.mxu0 %v3635
        %3745 = vmatpush1.msra.mxu0 %v3634
        %3746 = vmatprep.subr.mxu0 %v3638
        %3747 = vmatpush1.msra.mxu0 %v3637
        %3748 = vmatprep.subr.mxu0 %v3641
        %3749 = vmatpush1.msra.mxu0 %v3640
        %3750 = vmatprep.subr.mxu0 %v3644
        %3751 = vmatpush1.msra.mxu0 %v3643
        %3752 = vmatprep.subr.mxu0 %v3647
        %3753 = vmatpush1.msra.mxu0 %v3646
        %3754 = vmatprep.subr.mxu0 %v3650
        %3755 = vmatpush1.msra.mxu0 %v3649
        %3756 = vmatprep.subr.mxu0 %v3653
        %3757 = vmatpush1.msra.mxu0 %v3652
        %3758 = vmatprep.subr.mxu0 %v3656
        %3759 = vmatpush1.msra.mxu0 %v3655
        %3760 = vmatprep.subr.mxu0 %v3659
        %3761 = vmatpush1.msra.mxu0 %v3658
        %3762 = vmatprep.subr.mxu0 %v3662
        %3763 = vmatpush1.msra.mxu0 %v3661
        %3764 = vmatprep.subr.mxu0 %v3665
        %3765 = vmatpush1.msra.mxu0 %v3664
        %3766 = vmatprep.subr.mxu0 %v3668
        %3767 = vmatpush1.msra.mxu0 %v3667
        %3768 = vmatprep.subr.mxu0 %v3671
        %3769 = vmatpush1.msra.mxu0 %v3670
        %3770 = vmatprep.subr.mxu0 %v3674
        %3771 = vmatpush1.msra.mxu0 %v3673
        %3772 = vmatprep.subr.mxu0 %v3677
        %3773 = vmatpush1.msra.mxu0 %v3676
        %3774 = vmatprep.subr.mxu0 %v3680
        %3775 = vmatpush1.msra.mxu0 %v3679
        %3776 = vmatprep.subr.mxu0 %v3683
        %3777 = vmatpush1.msra.mxu0 %v3682
        %3778 = vmatprep.subr.mxu0 %v3686
        %3779 = vmatpush1.msra.mxu0 %v3685
        %3780 = vmatprep.subr.mxu0 %v3689
        %3781 = vmatpush1.msra.mxu0 %v3688
        %3782 = vmatprep.subr.mxu0 %v3692
        %3783 = vmatpush1.msra.mxu0 %v3691
        %3784 = vmatprep.subr.mxu0 %v3695
        %3785 = vmatpush1.msra.mxu0 %v3694
        %3786 = vmatprep.subr.mxu0 %v3698
        %3787 = vmatpush1.msra.mxu0 %v3697
        %3788 = vmatprep.subr.mxu0 %v3701
        %3789 = vmatpush1.msra.mxu0 %v3700
        %3790 = vmatprep.subr.mxu0 %v3704
        %3791 = vmatpush1.msra.mxu0 %v3703
        %3792 = vmatprep.subr.mxu0 %v3707
        %3793 = vmatpush1.msra.mxu0 %v3706
        %3794 = vmatprep.subr.mxu0 %v3710
        %3795 = vmatpush1.msra.mxu0 %v3709
        %3796 = vmatprep.subr.mxu0 %v3713
        %3797 = vmatpush1.msra.mxu0 %v3712
        %3798 = vmatprep.subr.mxu0 %v3716
        %3799 = vmatpush1.msra.mxu0 %v3715
        %3800 = vmatprep.subr.mxu0 %v3719
        %3801 = vmatpush1.msra.mxu0 %v3718
        %3802 = vmatprep.subr.mxu0 %v3722
        %3803 = vmatpush1.msra.mxu0 %v3721
        %3804 = vmatprep.mubr.f32.mxu0 %v3584
        %3805 = vmatmul.mubr.f32.gmra.mrb[0].mxu0 %v3582
        %v3806 = vpop.f32.mrb[0].mxu0
        %v3807 = vadd.f32 0.0, %v3806
        %v3808 = vpop.f32.mrb[0].mxu0
        %v3809 = vadd.f32 0.0, %v3808
        %3810 = vdwg.mxu0
        %3811 = vmatprep.subr.mxu0 %v3725
        %3812 = vmatpush1.msra.mxu0 %v3724
        %3813 = vmatprep.subr.mxu0 %v3728
        %3814 = vmatpush1.msra.mxu0 %v3727
        %3815 = vmatprep.subr.mxu0 %v3731
        %3816 = vmatpush1.msra.mxu0 %v3730
        %3817 = vmatprep.subr.mxu0 %v3734
        %3818 = vmatpush1.msra.mxu0 %v3733
        %3819 = vmatprep.subr.mxu0 0.0
        %3820 = vmatpush1.msra.mxu0 0.0
        %3821 = vmatprep.subr.mxu0 0.0
        %3822 = vmatpush1.msra.mxu0 0.0
        %3823 = vmatprep.subr.mxu0 0.0
        %3824 = vmatpush1.msra.mxu0 0.0
        %3825 = vmatprep.subr.mxu0 0.0
        %3826 = vmatpush1.msra.mxu0 0.0
        %3827 = vmatprep.subr.mxu0 0.0
        %3828 = vmatpush1.msra.mxu0 0.0
        %3829 = vmatprep.subr.mxu0 0.0
        %3830 = vmatpush1.msra.mxu0 0.0
        %3831 = vmatprep.subr.mxu0 0.0
        %3832 = vmatpush1.msra.mxu0 0.0
        %3833 = vmatprep.subr.mxu0 0.0
        %3834 = vmatpush1.msra.mxu0 0.0
        %3835 = vmatprep.subr.mxu0 0.0
        %3836 = vmatpush1.msra.mxu0 0.0
        %3837 = vmatprep.subr.mxu0 0.0
        %3838 = vmatpush1.msra.mxu0 0.0
        %3839 = vmatprep.subr.mxu0 0.0
        %3840 = vmatpush1.msra.mxu0 0.0
        %3841 = vmatprep.subr.mxu0 0.0
        %3842 = vmatpush1.msra.mxu0 0.0
        %3843 = vmatprep.subr.mxu0 0.0
        %3844 = vmatpush1.msra.mxu0 0.0
        %3845 = vmatprep.subr.mxu0 0.0
        %3846 = vmatpush1.msra.mxu0 0.0
        %3847 = vmatprep.subr.mxu0 0.0
        %3848 = vmatpush1.msra.mxu0 0.0
        %3849 = vmatprep.subr.mxu0 0.0
        %3850 = vmatpush1.msra.mxu0 0.0
        %3851 = vmatprep.subr.mxu0 0.0
        %3852 = vmatpush1.msra.mxu0 0.0
        %3853 = vmatprep.subr.mxu0 0.0
        %3854 = vmatpush1.msra.mxu0 0.0
        %3855 = vmatprep.subr.mxu0 0.0
        %3856 = vmatpush1.msra.mxu0 0.0
        %3857 = vmatprep.subr.mxu0 0.0
        %3858 = vmatpush1.msra.mxu0 0.0
        %3859 = vmatprep.subr.mxu0 0.0
        %3860 = vmatpush1.msra.mxu0 0.0
        %3861 = vmatprep.subr.mxu0 0.0
        %3862 = vmatpush1.msra.mxu0 0.0
        %3863 = vmatprep.subr.mxu0 0.0
        %3864 = vmatpush1.msra.mxu0 0.0
        %3865 = vmatprep.subr.mxu0 0.0
        %3866 = vmatpush1.msra.mxu0 0.0
        %3867 = vmatprep.subr.mxu0 0.0
        %3868 = vmatpush1.msra.mxu0 0.0
        %3869 = vmatprep.subr.mxu0 0.0
        %3870 = vmatpush1.msra.mxu0 0.0
        %3871 = vmatprep.subr.mxu0 0.0
        %3872 = vmatpush1.msra.mxu0 0.0
        %3873 = vmatprep.subr.mxu0 0.0
        %3874 = vmatpush1.msra.mxu0 0.0
        %3875 = vmatprep.mubr.f32.mxu0 0.0
        %3876 = vmatmul.mubr.f32.gmra.mrb[0].mxu0 %v3738
        %v3877 = vpop.f32.mrb[0].mxu0
        %v3878 = vadd.f32 %v3807, %v3877
        %v3879 = vpop.f32.mrb[0].mxu0
        %v3880 = vadd.f32 %v3809, %v3879
        %3881 = vdwg.mxu0
        %3882 = vmatprep.subr.mxu0 0.0
        %3883 = vmatpush1.msra.mxu0 %v3630
        %3884 = vmatprep.subr.mxu0 0.0
        %3885 = vmatpush1.msra.mxu0 %v3633
        %3886 = vmatprep.subr.mxu0 0.0
        %3887 = vmatpush1.msra.mxu0 %v3636
        %3888 = vmatprep.subr.mxu0 0.0
        %3889 = vmatpush1.msra.mxu0 %v3639
        %3890 = vmatprep.subr.mxu0 0.0
        %3891 = vmatpush1.msra.mxu0 %v3642
        %3892 = vmatprep.subr.mxu0 0.0
        %3893 = vmatpush1.msra.mxu0 %v3645
        %3894 = vmatprep.subr.mxu0 0.0
        %3895 = vmatpush1.msra.mxu0 %v3648
        %3896 = vmatprep.subr.mxu0 0.0
        %3897 = vmatpush1.msra.mxu0 %v3651
        %3898 = vmatprep.subr.mxu0 0.0
        %3899 = vmatpush1.msra.mxu0 %v3654
        %3900 = vmatprep.subr.mxu0 0.0
        %3901 = vmatpush1.msra.mxu0 %v3657
        %3902 = vmatprep.subr.mxu0 0.0
        %3903 = vmatpush1.msra.mxu0 %v3660
        %3904 = vmatprep.subr.mxu0 0.0
        %3905 = vmatpush1.msra.mxu0 %v3663
        %3906 = vmatprep.subr.mxu0 0.0
        %3907 = vmatpush1.msra.mxu0 %v3666
        %3908 = vmatprep.subr.mxu0 0.0
        %3909 = vmatpush1.msra.mxu0 %v3669
        %3910 = vmatprep.subr.mxu0 0.0
        %3911 = vmatpush1.msra.mxu0 %v3672
        %3912 = vmatprep.subr.mxu0 0.0
        %3913 = vmatpush1.msra.mxu0 %v3675
        %3914 = vmatprep.subr.mxu0 0.0
        %3915 = vmatpush1.msra.mxu0 %v3678
        %3916 = vmatprep.subr.mxu0 0.0
        %3917 = vmatpush1.msra.mxu0 %v3681
        %3918 = vmatprep.subr.mxu0 0.0
        %3919 = vmatpush1.msra.mxu0 %v3684
        %3920 = vmatprep.subr.mxu0 0.0
        %3921 = vmatpush1.msra.mxu0 %v3687
        %3922 = vmatprep.subr.mxu0 0.0
        %3923 = vmatpush1.msra.mxu0 %v3690
        %3924 = vmatprep.subr.mxu0 0.0
        %3925 = vmatpush1.msra.mxu0 %v3693
        %3926 = vmatprep.subr.mxu0 0.0
        %3927 = vmatpush1.msra.mxu0 %v3696
        %3928 = vmatprep.subr.mxu0 0.0
        %3929 = vmatpush1.msra.mxu0 %v3699
        %3930 = vmatprep.subr.mxu0 0.0
        %3931 = vmatpush1.msra.mxu0 %v3702
        %3932 = vmatprep.subr.mxu0 0.0
        %3933 = vmatpush1.msra.mxu0 %v3705
        %3934 = vmatprep.subr.mxu0 0.0
        %3935 = vmatpush1.msra.mxu0 %v3708
        %3936 = vmatprep.subr.mxu0 0.0
        %3937 = vmatpush1.msra.mxu0 %v3711
        %3938 = vmatprep.subr.mxu0 0.0
        %3939 = vmatpush1.msra.mxu0 %v3714
        %3940 = vmatprep.subr.mxu0 0.0
        %3941 = vmatpush1.msra.mxu0 %v3717
        %3942 = vmatprep.subr.mxu0 0.0
        %3943 = vmatpush1.msra.mxu0 %v3720
        %3944 = vmatprep.subr.mxu0 0.0
        %3945 = vmatpush1.msra.mxu0 %v3723
        %3946 = vmatprep.mubr.f32.mxu0 %v3584
        %3947 = vmatmul.mubr.f32.gmra.mrb[0].mxu0 %v3582
        %v3948 = vpop.f32.mrb[0].mxu0
        %v3949 = vadd.f32 0.0, %v3948
        %v3950 = vpop.f32.mrb[0].mxu0
        %3951 = vdwg.mxu0
        %3952 = vmatprep.subr.mxu0 0.0
        %3953 = vmatpush1.msra.mxu0 %v3726
        %3954 = vmatprep.subr.mxu0 0.0
        %3955 = vmatpush1.msra.mxu0 %v3729
        %3956 = vmatprep.subr.mxu0 0.0
        %3957 = vmatpush1.msra.mxu0 %v3732
        %3958 = vmatprep.subr.mxu0 0.0
        %3959 = vmatpush1.msra.mxu0 %v3735
        %3960 = vmatprep.subr.mxu0 0.0
        %3961 = vmatpush1.msra.mxu0 0.0
        %3962 = vmatprep.subr.mxu0 0.0
        %3963 = vmatpush1.msra.mxu0 0.0
        %3964 = vmatprep.subr.mxu0 0.0
        %3965 = vmatpush1.msra.mxu0 0.0
        %3966 = vmatprep.subr.mxu0 0.0
        %3967 = vmatpush1.msra.mxu0 0.0
        %3968 = vmatprep.subr.mxu0 0.0
        %3969 = vmatpush1.msra.mxu0 0.0
        %3970 = vmatprep.subr.mxu0 0.0
        %3971 = vmatpush1.msra.mxu0 0.0
        %3972 = vmatprep.subr.mxu0 0.0
        %3973 = vmatpush1.msra.mxu0 0.0
        %3974 = vmatprep.subr.mxu0 0.0
        %3975 = vmatpush1.msra.mxu0 0.0
        %3976 = vmatprep.subr.mxu0 0.0
        %3977 = vmatpush1.msra.mxu0 0.0
        %3978 = vmatprep.subr.mxu0 0.0
        %3979 = vmatpush1.msra.mxu0 0.0
        %3980 = vmatprep.subr.mxu0 0.0
        %3981 = vmatpush1.msra.mxu0 0.0
        %3982 = vmatprep.subr.mxu0 0.0
        %3983 = vmatpush1.msra.mxu0 0.0
        %3984 = vmatprep.subr.mxu0 0.0
        %3985 = vmatpush1.msra.mxu0 0.0
        %3986 = vmatprep.subr.mxu0 0.0
        %3987 = vmatpush1.msra.mxu0 0.0
        %3988 = vmatprep.subr.mxu0 0.0
        %3989 = vmatpush1.msra.mxu0 0.0
        %3990 = vmatprep.subr.mxu0 0.0
        %3991 = vmatpush1.msra.mxu0 0.0
        %3992 = vmatprep.subr.mxu0 0.0
        %3993 = vmatpush1.msra.mxu0 0.0
        %3994 = vmatprep.subr.mxu0 0.0
        %3995 = vmatpush1.msra.mxu0 0.0
        %3996 = vmatprep.subr.mxu0 0.0
        %3997 = vmatpush1.msra.mxu0 0.0
        %3998 = vmatprep.subr.mxu0 0.0
        %3999 = vmatpush1.msra.mxu0 0.0
        %4000 = vmatprep.subr.mxu0 0.0
        %4001 = vmatpush1.msra.mxu0 0.0
        %4002 = vmatprep.subr.mxu0 0.0
        %4003 = vmatpush1.msra.mxu0 0.0
        %4004 = vmatprep.subr.mxu0 0.0
        %4005 = vmatpush1.msra.mxu0 0.0
        %4006 = vmatprep.subr.mxu0 0.0
        %4007 = vmatpush1.msra.mxu0 0.0
        %4008 = vmatprep.subr.mxu0 0.0
        %4009 = vmatpush1.msra.mxu0 0.0
        %4010 = vmatprep.subr.mxu0 0.0
        %4011 = vmatpush1.msra.mxu0 0.0
        %4012 = vmatprep.subr.mxu0 0.0
        %4013 = vmatpush1.msra.mxu0 0.0
        %4014 = vmatprep.subr.mxu0 0.0
        %4015 = vmatpush1.msra.mxu0 0.0
        %4016 = vmatprep.mubr.f32.mxu0 0.0
        %4017 = vmatmul.mubr.f32.gmra.mrb[0].mxu0 %v3738
        %v4018 = vpop.f32.mrb[0].mxu0
        %v4019 = vadd.f32 %v3949, %v4018
        %v4020 = vpop.f32.mrb[0].mxu0
        %4021 = vdwg.mxu0
        %v4022 = vsub.f32 %v3582, %v3878
        %v4023 = vsub.f32 %v3584, %v3880
        %v4024 = vsub.f32 %v3623, %v4019
        %v4025 = vmul.f32 %v4022, %v4022
        %v4026 = vmul.f32 %v4023, %v4023
        %v4027 = vmul.f32 %v4024, %v4024
        %v4029 = vsel %vm3736, %v4027, 0
        %4031 = vmatprep.subr.mxu0 %v3629
        %4032 = vmatpush1.msra.mxu0 %v3628
        %4033 = vmatprep.subr.mxu0 %v3632
        %4034 = vmatpush1.msra.mxu0 %v3631
        %4035 = vmatprep.subr.mxu0 %v3635
        %4036 = vmatpush1.msra.mxu0 %v3634
        %4037 = vmatprep.subr.mxu0 %v3638
        %4038 = vmatpush1.msra.mxu0 %v3637
        %4039 = vmatprep.subr.mxu0 %v3641
        %4040 = vmatpush1.msra.mxu0 %v3640
        %4041 = vmatprep.subr.mxu0 %v3644
        %4042 = vmatpush1.msra.mxu0 %v3643
        %4043 = vmatprep.subr.mxu0 %v3647
        %4044 = vmatpush1.msra.mxu0 %v3646
        %4045 = vmatprep.subr.mxu0 %v3650
        %4046 = vmatpush1.msra.mxu0 %v3649
        %4047 = vmatprep.subr.mxu0 %v3653
        %4048 = vmatpush1.msra.mxu0 %v3652
        %4049 = vmatprep.subr.mxu0 %v3656
        %4050 = vmatpush1.msra.mxu0 %v3655
        %4051 = vmatprep.subr.mxu0 %v3659
        %4052 = vmatpush1.msra.mxu0 %v3658
        %4053 = vmatprep.subr.mxu0 %v3662
        %4054 = vmatpush1.msra.mxu0 %v3661
        %4055 = vmatprep.subr.mxu0 %v3665
        %4056 = vmatpush1.msra.mxu0 %v3664
        %4057 = vmatprep.subr.mxu0 %v3668
        %4058 = vmatpush1.msra.mxu0 %v3667
        %4059 = vmatprep.subr.mxu0 %v3671
        %4060 = vmatpush1.msra.mxu0 %v3670
        %4061 = vmatprep.subr.mxu0 %v3674
        %4062 = vmatpush1.msra.mxu0 %v3673
        %4063 = vmatprep.subr.mxu0 %v3677
        %4064 = vmatpush1.msra.mxu0 %v3676
        %4065 = vmatprep.subr.mxu0 %v3680
        %4066 = vmatpush1.msra.mxu0 %v3679
        %4067 = vmatprep.subr.mxu0 %v3683
        %4068 = vmatpush1.msra.mxu0 %v3682
        %4069 = vmatprep.subr.mxu0 %v3686
        %4070 = vmatpush1.msra.mxu0 %v3685
        %4071 = vmatprep.subr.mxu0 %v3689
        %4072 = vmatpush1.msra.mxu0 %v3688
        %4073 = vmatprep.subr.mxu0 %v3692
        %4074 = vmatpush1.msra.mxu0 %v3691
        %4075 = vmatprep.subr.mxu0 %v3695
        %4076 = vmatpush1.msra.mxu0 %v3694
        %4077 = vmatprep.subr.mxu0 %v3698
        %4078 = vmatpush1.msra.mxu0 %v3697
        %4079 = vmatprep.subr.mxu0 %v3701
        %4080 = vmatpush1.msra.mxu0 %v3700
        %4081 = vmatprep.subr.mxu0 %v3704
        %4082 = vmatpush1.msra.mxu0 %v3703
        %4083 = vmatprep.subr.mxu0 %v3707
        %4084 = vmatpush1.msra.mxu0 %v3706
        %4085 = vmatprep.subr.mxu0 %v3710
        %4086 = vmatpush1.msra.mxu0 %v3709
        %4087 = vmatprep.subr.mxu0 %v3713
        %4088 = vmatpush1.msra.mxu0 %v3712
        %4089 = vmatprep.subr.mxu0 %v3716
        %4090 = vmatpush1.msra.mxu0 %v3715
        %4091 = vmatprep.subr.mxu0 %v3719
        %4092 = vmatpush1.msra.mxu0 %v3718
        %4093 = vmatprep.subr.mxu0 %v3722
        %4094 = vmatpush1.msra.mxu0 %v3721
        %4095 = vmatprep.mubr.f32.mxu0 %v4026
        %4096 = vmatmul.mubr.f32.gmra.mrb[0].mxu0 %v4025
        %v4097 = vpop.f32.mrb[0].mxu0
        %v4098 = vadd.f32 1e-05, %v4097
        %v4099 = vpop.f32.mrb[0].mxu0
        %v4100 = vadd.f32 1e-05, %v4099
        %4101 = vdwg.mxu0
        %4102 = vmatprep.subr.mxu0 %v3725
        %4103 = vmatpush1.msra.mxu0 %v3724
        %4104 = vmatprep.subr.mxu0 %v3728
        %4105 = vmatpush1.msra.mxu0 %v3727
        %4106 = vmatprep.subr.mxu0 %v3731
        %4107 = vmatpush1.msra.mxu0 %v3730
        %4108 = vmatprep.subr.mxu0 %v3734
        %4109 = vmatpush1.msra.mxu0 %v3733
        %4110 = vmatprep.subr.mxu0 0.0
        %4111 = vmatpush1.msra.mxu0 0.0
        %4112 = vmatprep.subr.mxu0 0.0
        %4113 = vmatpush1.msra.mxu0 0.0
        %4114 = vmatprep.subr.mxu0 0.0
        %4115 = vmatpush1.msra.mxu0 0.0
        %4116 = vmatprep.subr.mxu0 0.0
        %4117 = vmatpush1.msra.mxu0 0.0
        %4118 = vmatprep.subr.mxu0 0.0
        %4119 = vmatpush1.msra.mxu0 0.0
        %4120 = vmatprep.subr.mxu0 0.0
        %4121 = vmatpush1.msra.mxu0 0.0
        %4122 = vmatprep.subr.mxu0 0.0
        %4123 = vmatpush1.msra.mxu0 0.0
        %4124 = vmatprep.subr.mxu0 0.0
        %4125 = vmatpush1.msra.mxu0 0.0
        %4126 = vmatprep.subr.mxu0 0.0
        %4127 = vmatpush1.msra.mxu0 0.0
        %4128 = vmatprep.subr.mxu0 0.0
        %4129 = vmatpush1.msra.mxu0 0.0
        %4130 = vmatprep.subr.mxu0 0.0
        %4131 = vmatpush1.msra.mxu0 0.0
        %4132 = vmatprep.subr.mxu0 0.0
        %4133 = vmatpush1.msra.mxu0 0.0
        %4134 = vmatprep.subr.mxu0 0.0
        %4135 = vmatpush1.msra.mxu0 0.0
        %4136 = vmatprep.subr.mxu0 0.0
        %4137 = vmatpush1.msra.mxu0 0.0
        %4138 = vmatprep.subr.mxu0 0.0
        %4139 = vmatpush1.msra.mxu0 0.0
        %4140 = vmatprep.subr.mxu0 0.0
        %4141 = vmatpush1.msra.mxu0 0.0
        %4142 = vmatprep.subr.mxu0 0.0
        %4143 = vmatpush1.msra.mxu0 0.0
        %4144 = vmatprep.subr.mxu0 0.0
        %4145 = vmatpush1.msra.mxu0 0.0
        %4146 = vmatprep.subr.mxu0 0.0
        %4147 = vmatpush1.msra.mxu0 0.0
        %4148 = vmatprep.subr.mxu0 0.0
        %4149 = vmatpush1.msra.mxu0 0.0
        %4150 = vmatprep.subr.mxu0 0.0
        %4151 = vmatpush1.msra.mxu0 0.0
        %4152 = vmatprep.subr.mxu0 0.0
        %4153 = vmatpush1.msra.mxu0 0.0
        %4154 = vmatprep.subr.mxu0 0.0
        %4155 = vmatpush1.msra.mxu0 0.0
        %4156 = vmatprep.subr.mxu0 0.0
        %4157 = vmatpush1.msra.mxu0 0.0
        %4158 = vmatprep.subr.mxu0 0.0
        %4159 = vmatpush1.msra.mxu0 0.0
        %4160 = vmatprep.subr.mxu0 0.0
        %4161 = vmatpush1.msra.mxu0 0.0
        %4162 = vmatprep.subr.mxu0 0.0
        %4163 = vmatpush1.msra.mxu0 0.0
        %4164 = vmatprep.subr.mxu0 0.0
        %4165 = vmatpush1.msra.mxu0 0.0
        %4166 = vmatprep.mubr.f32.mxu0 0.0
        %4167 = vmatmul.mubr.f32.gmra.mrb[0].mxu0 %v4029
        %v4168 = vpop.f32.mrb[0].mxu0
        %v4169 = vadd.f32 %v4098, %v4168
        %v4170 = vpop.f32.mrb[0].mxu0
        %v4171 = vadd.f32 %v4100, %v4170
        %4172 = vdwg.mxu0
        %4173 = vmatprep.subr.mxu0 0.0
        %4174 = vmatpush1.msra.mxu0 %v3630
        %4175 = vmatprep.subr.mxu0 0.0
        %4176 = vmatpush1.msra.mxu0 %v3633
        %4177 = vmatprep.subr.mxu0 0.0
        %4178 = vmatpush1.msra.mxu0 %v3636
        %4179 = vmatprep.subr.mxu0 0.0
        %4180 = vmatpush1.msra.mxu0 %v3639
        %4181 = vmatprep.subr.mxu0 0.0
        %4182 = vmatpush1.msra.mxu0 %v3642
        %4183 = vmatprep.subr.mxu0 0.0
        %4184 = vmatpush1.msra.mxu0 %v3645
        %4185 = vmatprep.subr.mxu0 0.0
        %4186 = vmatpush1.msra.mxu0 %v3648
        %4187 = vmatprep.subr.mxu0 0.0
        %4188 = vmatpush1.msra.mxu0 %v3651
        %4189 = vmatprep.subr.mxu0 0.0
        %4190 = vmatpush1.msra.mxu0 %v3654
        %4191 = vmatprep.subr.mxu0 0.0
        %4192 = vmatpush1.msra.mxu0 %v3657
        %4193 = vmatprep.subr.mxu0 0.0
        %4194 = vmatpush1.msra.mxu0 %v3660
        %4195 = vmatprep.subr.mxu0 0.0
        %4196 = vmatpush1.msra.mxu0 %v3663
        %4197 = vmatprep.subr.mxu0 0.0
        %4198 = vmatpush1.msra.mxu0 %v3666
        %4199 = vmatprep.subr.mxu0 0.0
        %4200 = vmatpush1.msra.mxu0 %v3669
        %4201 = vmatprep.subr.mxu0 0.0
        %4202 = vmatpush1.msra.mxu0 %v3672
        %4203 = vmatprep.subr.mxu0 0.0
        %4204 = vmatpush1.msra.mxu0 %v3675
        %4205 = vmatprep.subr.mxu0 0.0
        %4206 = vmatpush1.msra.mxu0 %v3678
        %4207 = vmatprep.subr.mxu0 0.0
        %4208 = vmatpush1.msra.mxu0 %v3681
        %4209 = vmatprep.subr.mxu0 0.0
        %4210 = vmatpush1.msra.mxu0 %v3684
        %4211 = vmatprep.subr.mxu0 0.0
        %4212 = vmatpush1.msra.mxu0 %v3687
        %4213 = vmatprep.subr.mxu0 0.0
        %4214 = vmatpush1.msra.mxu0 %v3690
        %4215 = vmatprep.subr.mxu0 0.0
        %4216 = vmatpush1.msra.mxu0 %v3693
        %4217 = vmatprep.subr.mxu0 0.0
        %4218 = vmatpush1.msra.mxu0 %v3696
        %4219 = vmatprep.subr.mxu0 0.0
        %4220 = vmatpush1.msra.mxu0 %v3699
        %4221 = vmatprep.subr.mxu0 0.0
        %4222 = vmatpush1.msra.mxu0 %v3702
        %4223 = vmatprep.subr.mxu0 0.0
        %4224 = vmatpush1.msra.mxu0 %v3705
        %4225 = vmatprep.subr.mxu0 0.0
        %4226 = vmatpush1.msra.mxu0 %v3708
        %4227 = vmatprep.subr.mxu0 0.0
        %4228 = vmatpush1.msra.mxu0 %v3711
        %4229 = vmatprep.subr.mxu0 0.0
        %4230 = vmatpush1.msra.mxu0 %v3714
        %4231 = vmatprep.subr.mxu0 0.0
        %4232 = vmatpush1.msra.mxu0 %v3717
        %4233 = vmatprep.subr.mxu0 0.0
        %4234 = vmatpush1.msra.mxu0 %v3720
        %4235 = vmatprep.subr.mxu0 0.0
        %4236 = vmatpush1.msra.mxu0 %v3723
        %4237 = vmatprep.mubr.f32.mxu0 %v4026
        %4238 = vmatmul.mubr.f32.gmra.mrb[0].mxu0 %v4025
        %v4239 = vpop.f32.mrb[0].mxu0
        %v4240 = vadd.f32 1e-05, %v4239
        %v4241 = vpop.f32.mrb[0].mxu0
        %4242 = vdwg.mxu0
        %4243 = vmatprep.subr.mxu0 0.0
        %4244 = vmatpush1.msra.mxu0 %v3726
        %4245 = vmatprep.subr.mxu0 0.0
        %4246 = vmatpush1.msra.mxu0 %v3729
        %4247 = vmatprep.subr.mxu0 0.0
        %4248 = vmatpush1.msra.mxu0 %v3732
        %4249 = vmatprep.subr.mxu0 0.0
        %4250 = vmatpush1.msra.mxu0 %v3735
        %4251 = vmatprep.subr.mxu0 0.0
        %4252 = vmatpush1.msra.mxu0 0.0
        %4253 = vmatprep.subr.mxu0 0.0
        %4254 = vmatpush1.msra.mxu0 0.0
        %4255 = vmatprep.subr.mxu0 0.0
        %4256 = vmatpush1.msra.mxu0 0.0
        %4257 = vmatprep.subr.mxu0 0.0
        %4258 = vmatpush1.msra.mxu0 0.0
        %4259 = vmatprep.subr.mxu0 0.0
        %4260 = vmatpush1.msra.mxu0 0.0
        %4261 = vmatprep.subr.mxu0 0.0
        %4262 = vmatpush1.msra.mxu0 0.0
        %4263 = vmatprep.subr.mxu0 0.0
        %4264 = vmatpush1.msra.mxu0 0.0
        %4265 = vmatprep.subr.mxu0 0.0
        %4266 = vmatpush1.msra.mxu0 0.0
        %4267 = vmatprep.subr.mxu0 0.0
        %4268 = vmatpush1.msra.mxu0 0.0
        %4269 = vmatprep.subr.mxu0 0.0
        %4270 = vmatpush1.msra.mxu0 0.0
        %4271 = vmatprep.subr.mxu0 0.0
        %4272 = vmatpush1.msra.mxu0 0.0
        %4273 = vmatprep.subr.mxu0 0.0
        %4274 = vmatpush1.msra.mxu0 0.0
        %4275 = vmatprep.subr.mxu0 0.0
        %4276 = vmatpush1.msra.mxu0 0.0
        %4277 = vmatprep.subr.mxu0 0.0
        %4278 = vmatpush1.msra.mxu0 0.0
        %4279 = vmatprep.subr.mxu0 0.0
        %4280 = vmatpush1.msra.mxu0 0.0
        %4281 = vmatprep.subr.mxu0 0.0
        %4282 = vmatpush1.msra.mxu0 0.0
        %4283 = vmatprep.subr.mxu0 0.0
        %4284 = vmatpush1.msra.mxu0 0.0
        %4285 = vmatprep.subr.mxu0 0.0
        %4286 = vmatpush1.msra.mxu0 0.0
        %4287 = vmatprep.subr.mxu0 0.0
        %4288 = vmatpush1.msra.mxu0 0.0
        %4289 = vmatprep.subr.mxu0 0.0
        %4290 = vmatpush1.msra.mxu0 0.0
        %4291 = vmatprep.subr.mxu0 0.0
        %4292 = vmatpush1.msra.mxu0 0.0
        %4293 = vmatprep.subr.mxu0 0.0
        %4294 = vmatpush1.msra.mxu0 0.0
        %4295 = vmatprep.subr.mxu0 0.0
        %4296 = vmatpush1.msra.mxu0 0.0
        %4297 = vmatprep.subr.mxu0 0.0
        %4298 = vmatpush1.msra.mxu0 0.0
        %4299 = vmatprep.subr.mxu0 0.0
        %4300 = vmatpush1.msra.mxu0 0.0
        %4301 = vmatprep.subr.mxu0 0.0
        %4302 = vmatpush1.msra.mxu0 0.0
        %4303 = vmatprep.subr.mxu0 0.0
        %4304 = vmatpush1.msra.mxu0 0.0
        %4305 = vmatprep.subr.mxu0 0.0
        %4306 = vmatpush1.msra.mxu0 0.0
        %4307 = vmatprep.mubr.f32.mxu0 0.0
        %4308 = vmatmul.mubr.f32.gmra.mrb[0].mxu0 %v4029
        %v4309 = vpop.f32.mrb[0].mxu0
        %v4310 = vadd.f32 %v4240, %v4309
        %v4311 = vpop.f32.mrb[0].mxu0
        %4312 = vdwg.mxu0
        %v4313 = vrsqrt.pop %v4169
        %v4314 = vrsqrt.pop %v4171
        %v4315 = vrsqrt.pop %v4310
        %v4316 = vmul.f32 %v4022, %v4313
        %v4317 = vmul.f32 %v4023, %v4314
        %v4318 = vmul.f32 %v4024, %v4315
        %v4319 = vld [vmem:[%s11] sm:$0x7]
        %v4321 = vlaneseq
        %v4322 = vshrl.u32 %v4321, 7
        %v4323 = vsub.s32 0, %v4322
        %v4324 = vrot.slane %v4319, %v4323
        %v4325 = vlaneseq
        %v4326 = vshrl.u32 %v4325, 7
        %v4327 = vsub.s32 1, %v4326
        %v4328 = vrot.slane %v4319, %v4327
        %v4329 = vlaneseq
        %v4330 = vshrl.u32 %v4329, 7
        %v4331 = vsub.s32 2, %v4330
        %v4332 = vrot.slane %v4319, %v4331
        %v4336 = vmul.f32 %v4316, %v4324
        %v4337 = vmul.f32 %v4317, %v4328
        %v4338 = vmul.f32 %v4318, %v4332
        %v4339 = vld [vmem:[%s12] sm:$0x7]
        %v4341 = vlaneseq
        %v4342 = vshrl.u32 %v4341, 7
        %v4343 = vsub.s32 0, %v4342
        %v4344 = vrot.slane %v4339, %v4343
        %v4345 = vlaneseq
        %v4346 = vshrl.u32 %v4345, 7
        %v4347 = vsub.s32 1, %v4346
        %v4348 = vrot.slane %v4339, %v4347
        %v4349 = vlaneseq
        %v4350 = vshrl.u32 %v4349, 7
        %v4351 = vsub.s32 2, %v4350
        %v4352 = vrot.slane %v4339, %v4351
        %v4356 = vadd.f32 %v4336, %v4344
        %v4357 = vadd.f32 %v4337, %v4348
        %v4358 = vadd.f32 %v4338, %v4352
        %vm4359 = vcmp.ge.f32.partialorder %v4356, 0.0
        %vm4360 = vcmp.ge.f32.partialorder %v4357, 0.0
        %vm4361 = vcmp.ge.f32.partialorder %v4358, 0.0
        %v4362 = vmul.f32 %v4356, 0.1
        %v4363 = vmul.f32 %v4357, 0.1
        %v4364 = vmul.f32 %v4358, 0.1
        %v4365 = vsel %vm4359, %v4356, %v4362
        %v4366 = vsel %vm4360, %v4357, %v4363
        %v4367 = vsel %vm4361, %v4358, %v4364
        %v4368 = vpack.c.bf16 %v4365, %v4365
        %v4369 = vpack.c.bf16 %v4366, %v4366
        %v4370 = vpack.c.bf16 %v4367, %v4367
        %v4371 = vld [vmem:[#allocation6] sm:$0xf]
        %v4372 = vld [vmem:[#allocation6 + $0x4] sm:$0xf]
        %v4373 = vld [vmem:[#allocation6 + $0x8] sm:$0xf]
        %v4374 = vld [vmem:[#allocation6 + $0xc] sm:$0xf]
        %v4375 = vld [vmem:[#allocation6 + $0x10] sm:$0xf]
        %v4376 = vld [vmem:[#allocation6 + $0x14] sm:$0xf]
        %v4377 = vld [vmem:[#allocation6 + $0x18] sm:$0xf]
        %v4378 = vld [vmem:[#allocation6 + $0x1c] sm:$0xf]
        %v4379 = vld [vmem:[#allocation6 + $0x20] sm:$0xf]
        %v4380 = vld [vmem:[#allocation6 + $0x24] sm:$0xf]
        %v4381 = vld [vmem:[#allocation6 + $0x28] sm:$0xf]
        %v4382 = vld [vmem:[#allocation6 + $0x2c] sm:$0xf]
        %v4383 = vld [vmem:[#allocation6 + $0x30] sm:$0xf]
        %v4384 = vld [vmem:[#allocation6 + $0x34] sm:$0xf]
        %v4385 = vld [vmem:[#allocation6 + $0x38] sm:$0xf]
        %v4386 = vld [vmem:[#allocation6 + $0x3c] sm:$0xf]
        %v4387 = vld [vmem:[#allocation6 + $0x40] sm:$0xf]
        %v4388 = vld [vmem:[#allocation6 + $0x44] sm:$0xf]
        %v4389 = vld [vmem:[#allocation6 + $0x48] sm:$0xf]
        %v4390 = vld [vmem:[#allocation6 + $0x4c] sm:$0xf]
        %v4391 = vld [vmem:[#allocation6 + $0x50] sm:$0xf]
        %v4392 = vld [vmem:[#allocation6 + $0x54] sm:$0xf]
        %v4393 = vld [vmem:[#allocation6 + $0x58] sm:$0xf]
        %v4394 = vld [vmem:[#allocation6 + $0x5c] sm:$0xf]
        %v4395 = vld [vmem:[#allocation6 + $0x60] sm:$0xf]
        %v4396 = vld [vmem:[#allocation6 + $0x64] sm:$0xf]
        %v4397 = vld [vmem:[#allocation6 + $0x68] sm:$0xf]
        %v4398 = vld [vmem:[#allocation6 + $0x6c] sm:$0xf]
        %v4399 = vld [vmem:[#allocation6 + $0x70] sm:$0xf]
        %v4400 = vld [vmem:[#allocation6 + $0x74] sm:$0xf]
        %v4401 = vld [vmem:[#allocation6 + $0x78] sm:$0xf]
        %v4402 = vld [vmem:[#allocation6 + $0x7c] sm:$0xf]
        %v4403 = vld [vmem:[#allocation6 + $0x80] sm:$0xf]
        %v4404 = vld [vmem:[#allocation6 + $0x84] sm:$0xf]
        %v4405 = vld [vmem:[#allocation6 + $0x88] sm:$0xf]
        %v4406 = vld [vmem:[#allocation6 + $0x8c] sm:$0xf]
        %v4407 = vld [vmem:[%s14] sm:$0x1]
        %v4444 = vunpack.c.l.b16 %v4371
        %v4445 = vunpack.c.l.b16 %v4372
        %v4446 = vunpack.c.l.b16 %v4373
        %v4447 = vunpack.c.l.b16 %v4374
        %v4448 = vunpack.c.l.b16 %v4375
        %v4449 = vunpack.c.l.b16 %v4376
        %v4450 = vunpack.c.l.b16 %v4377
        %v4451 = vunpack.c.l.b16 %v4378
        %v4452 = vunpack.c.l.b16 %v4379
        %v4453 = vunpack.c.l.b16 %v4380
        %v4454 = vunpack.c.l.b16 %v4381
        %v4455 = vunpack.c.l.b16 %v4382
        %v4456 = vunpack.c.l.b16 %v4383
        %v4457 = vunpack.c.l.b16 %v4384
        %v4458 = vunpack.c.l.b16 %v4385
        %v4459 = vunpack.c.l.b16 %v4386
        %v4460 = vunpack.c.l.b16 %v4387
        %v4461 = vunpack.c.l.b16 %v4388
        %v4462 = vunpack.c.l.b16 %v4389
        %v4463 = vunpack.c.l.b16 %v4390
        %v4464 = vunpack.c.l.b16 %v4391
        %v4465 = vunpack.c.l.b16 %v4392
        %v4466 = vunpack.c.l.b16 %v4393
        %v4467 = vunpack.c.l.b16 %v4394
        %v4468 = vunpack.c.l.b16 %v4395
        %v4469 = vunpack.c.l.b16 %v4396
        %v4470 = vunpack.c.l.b16 %v4397
        %v4471 = vunpack.c.l.b16 %v4398
        %v4472 = vunpack.c.l.b16 %v4399
        %v4473 = vunpack.c.l.b16 %v4400
        %v4474 = vunpack.c.l.b16 %v4401
        %v4475 = vunpack.c.l.b16 %v4402
        %v4476 = vunpack.c.l.b16 %v4403
        %v4477 = vunpack.c.l.b16 %v4404
        %v4478 = vunpack.c.l.b16 %v4405
        %v4479 = vunpack.c.l.b16 %v4406
        %v4480 = vpack.c.b16 %v4445, %v4444
        %v4481 = vpack.c.b16 %v4447, %v4446
        %v4482 = vpack.c.b16 %v4449, %v4448
        %v4483 = vpack.c.b16 %v4451, %v4450
        %v4484 = vpack.c.b16 %v4453, %v4452
        %v4485 = vpack.c.b16 %v4455, %v4454
        %v4486 = vpack.c.b16 %v4457, %v4456
        %v4487 = vpack.c.b16 %v4459, %v4458
        %v4488 = vpack.c.b16 %v4461, %v4460
        %v4489 = vpack.c.b16 %v4463, %v4462
        %v4490 = vpack.c.b16 %v4465, %v4464
        %v4491 = vpack.c.b16 %v4467, %v4466
        %v4492 = vpack.c.b16 %v4469, %v4468
        %v4493 = vpack.c.b16 %v4471, %v4470
        %v4494 = vpack.c.b16 %v4473, %v4472
        %v4495 = vpack.c.b16 %v4475, %v4474
        %v4496 = vpack.c.b16 %v4477, %v4476
        %v4497 = vpack.c.b16 %v4479, %v4478
        %v4517 = vsel %vm3736, %v4370, 0
        %4519 = vmatprep.subr.bf16.mxu0 0
        %4520 = vmatpush1.bf16.msra.mxu0 %v4480
        %4521 = vmatprep.subr.bf16.mxu0 0
        %4522 = vmatpush1.bf16.msra.mxu0 %v4481
        %4523 = vmatprep.subr.bf16.mxu0 0
        %4524 = vmatpush1.bf16.msra.mxu0 %v4482
        %4525 = vmatprep.subr.bf16.mxu0 0
        %4526 = vmatpush1.bf16.msra.mxu0 %v4483
        %4527 = vmatprep.subr.bf16.mxu0 0
        %4528 = vmatpush1.bf16.msra.mxu0 %v4484
        %4529 = vmatprep.subr.bf16.mxu0 0
        %4530 = vmatpush1.bf16.msra.mxu0 %v4485
        %4531 = vmatprep.subr.bf16.mxu0 0
        %4532 = vmatpush1.bf16.msra.mxu0 %v4486
        %4533 = vmatprep.subr.bf16.mxu0 0
        %4534 = vmatpush1.bf16.msra.mxu0 %v4487
        %4535 = vmatprep.subr.bf16.mxu0 0
        %4536 = vmatpush1.bf16.msra.mxu0 %v4488
        %4537 = vmatprep.subr.bf16.mxu0 0
        %4538 = vmatpush1.bf16.msra.mxu0 %v4489
        %4539 = vmatprep.subr.bf16.mxu0 0
        %4540 = vmatpush1.bf16.msra.mxu0 %v4490
        %4541 = vmatprep.subr.bf16.mxu0 0
        %4542 = vmatpush1.bf16.msra.mxu0 %v4491
        %4543 = vmatprep.subr.bf16.mxu0 0
        %4544 = vmatpush1.bf16.msra.mxu0 %v4492
        %4545 = vmatprep.subr.bf16.mxu0 0
        %4546 = vmatpush1.bf16.msra.mxu0 %v4493
        %4547 = vmatprep.subr.bf16.mxu0 0
        %4548 = vmatpush1.bf16.msra.mxu0 %v4494
        %4549 = vmatprep.subr.bf16.mxu0 0
        %4550 = vmatpush1.bf16.msra.mxu0 %v4495
        %4551 = vmatprep.mubr.bf16.mxu0 %v4369
        %4552 = vmatmul.mubr.bf16.gmra.mrb[0].mxu0 %v4368
        %v4553 = vpop.f32.mrb[0].mxu0
        %v4554 = vadd.f32 %v4407, %v4553
        %v4555 = vpop.f32.mrb[0].mxu0
        %v4556 = vpop.f32.mrb[0].mxu0
        %v4557 = vpop.f32.mrb[0].mxu0
        %4558 = vdwg.mxu0
        %4559 = vmatprep.subr.bf16.mxu0 0
        %4560 = vmatpush1.bf16.msra.mxu0 %v4496
        %4561 = vmatprep.subr.bf16.mxu0 0
        %4562 = vmatpush1.bf16.msra.mxu0 %v4497
        %4563 = vmatprep.subr.bf16.mxu0 0
        %4564 = vmatpush1.bf16.msra.mxu0 0
        %4565 = vmatprep.subr.bf16.mxu0 0
        %4566 = vmatpush1.bf16.msra.mxu0 0
        %4567 = vmatprep.subr.bf16.mxu0 0
        %4568 = vmatpush1.bf16.msra.mxu0 0
        %4569 = vmatprep.subr.bf16.mxu0 0
        %4570 = vmatpush1.bf16.msra.mxu0 0
        %4571 = vmatprep.subr.bf16.mxu0 0
        %4572 = vmatpush1.bf16.msra.mxu0 0
        %4573 = vmatprep.subr.bf16.mxu0 0
        %4574 = vmatpush1.bf16.msra.mxu0 0
        %4575 = vmatprep.subr.bf16.mxu0 0
        %4576 = vmatpush1.bf16.msra.mxu0 0
        %4577 = vmatprep.subr.bf16.mxu0 0
        %4578 = vmatpush1.bf16.msra.mxu0 0
        %4579 = vmatprep.subr.bf16.mxu0 0
        %4580 = vmatpush1.bf16.msra.mxu0 0
        %4581 = vmatprep.subr.bf16.mxu0 0
        %4582 = vmatpush1.bf16.msra.mxu0 0
        %4583 = vmatprep.subr.bf16.mxu0 0
        %4584 = vmatpush1.bf16.msra.mxu0 0
        %4585 = vmatprep.subr.bf16.mxu0 0
        %4586 = vmatpush1.bf16.msra.mxu0 0
        %4587 = vmatprep.subr.bf16.mxu0 0
        %4588 = vmatpush1.bf16.msra.mxu0 0
        %4589 = vmatprep.subr.bf16.mxu0 0
        %4590 = vmatpush1.bf16.msra.mxu0 0
        %4591 = vmatprep.mubr.bf16.mxu0 0
        %4592 = vmatmul.mubr.bf16.gmra.mrb[0].mxu0 %v4517
        %v4593 = vpop.f32.mrb[0].mxu0
        %v4594 = vadd.f32 %v4554, %v4593
        %v4595 = vpop.f32.mrb[0].mxu0
        %v4596 = vpop.f32.mrb[0].mxu0
        %v4597 = vpop.f32.mrb[0].mxu0
        %4598 = vdwg.mxu0
        %4599 = vst [vmem:[%s531] sm:$0x1] %v4594
        %p4600 = scmp.lt.s32.totalorder %s28, 1
        %s4601 = scalar_select %p4600, %s28, 1
        %s4602 = scalar_lea.vmem %s15, %s4601
        // Predicated region
        $region93: #{discriminator_forward.1} parent=79 // pred_check
          %p4603 = pneg %p366
        $region94: #{discriminator_forward.1} parent=79 // pred_check_branch
          %4605 = sbr.rel (%p4603) target = $region96
        $region95: #{discriminator_forward.1} parent=79 // pred_region
          _
        $region96: #{discriminator_forward.1} parent=79 // pred_fallthru
          _
      $region80: #{discriminator_forward.1} parent=5 // pred_fallthru
        _
      %p4606 = scmp.le.s32.totalorder 2, %s23
      // Predicated region
      $region97: #{discriminator_forward.1} parent=5 // pred_check
        %p4607 = pneg %p4606
      $region98: #{discriminator_forward.1} parent=5 // pred_check_branch
        %4609 = sbr.rel (%p4607) target = $region100
      $region99: #{discriminator_forward.1} parent=5 // pred_region
        %s4610 = ssub.s32 %s23, 2
        // Predicated region
        $region101: #{discriminator_forward.1} parent=99 // pred_check
          %p4611 = pneg %p372
        $region102: #{discriminator_forward.1} parent=99 // pred_check_branch
          %4613 = sbr.rel (%p4611) target = $region104
        $region103: #{discriminator_forward.1} parent=99 // pred_region
          %p4614 = scmp.lt.s32.totalorder %s29, 1
          %s4615 = scalar_select %p4614, %s29, 1
          %s4616 = scalar_lea.vmem %s15, %s4615
        $region104: #{discriminator_forward.1} parent=99 // pred_fallthru
          _
      $region100: #{discriminator_forward.1} parent=5 // pred_fallthru
        _
    $region6: #{discriminator_forward.1} parent=1 // loop_footer
      %s27 = sadd.s32 1, %s23
    $region7: #{discriminator_forward.1} parent=1 // loop_footer_branch
      %22 = sbr.rel target = $region3
    $region8: #{discriminator_forward.1} parent=1 // loop_exit
      _
    %4617 = vsyncpa [#allocation3], 1
    %s4618 = scalar_lea.sflag [#allocation3], 1
    %4619 = vsyncpa %s4618, 1
    %4620 = vsyncpa [#allocation5], 1

</llo_original>
